<compile_context>
chip_gen: v7x
topology: tpu7x:2x2x1
jax: 0.10.0
libtpu: 0.0.40
codegen_flags: <defaults>
</compile_context>

<pallas_src>
import functools

import jax
import jax.numpy as jnp
from jax.experimental import pallas as pl
from jax.experimental.pallas import tpu as pltpu


_VMEM_LIMIT = 40 * 1024 * 1024   # explicit; leaves headroom under v7x's 64 MiB VMEM
_SPLIT_ROWS = 1024               # only split the M grid when tiles stay >= this big


# ----------------------------- tiling helpers --------------------------------

def _round_up(x, m):
    return ((x + m - 1) // m) * m


def _pick_tiling(M):
    """(Mp, TM): one whole-M tile for small/medium M (no per-step overhead on the
    single-TC v5e/v6e); for large M the fewest >= _SPLIT_ROWS-row tiles (v7x
    megacore).  Never degrades to a tiny-TM many-step grid: pads M up instead."""
    Mp = _round_up(M, 8)
    if Mp <= _SPLIT_ROWS:
        return Mp, Mp
    g = pl.cdiv(Mp, _SPLIT_ROWS)
    TM = _round_up(pl.cdiv(Mp, g), 8)
    return TM * g, TM


# ----------------------------- Pallas kernels --------------------------------

def _conv_mm_kernel(x_ref, w_ref, b_ref, y_ref, *stat_refs, act, with_stats):
    """One M-tile of y = act(x @ w + b)  (+ per-tile BN partial sum / sumsq of x@w+b)."""
    acc = jnp.dot(x_ref[...], w_ref[...], preferred_element_type=jnp.float32)
    acc = acc + b_ref[...]
    if with_stats:
        (stats_ref,) = stat_refs
        stats_ref[:, 0:1, :] = jnp.sum(acc, axis=0, keepdims=True)[None]        # sum
        stats_ref[:, 1:2, :] = jnp.sum(acc * acc, axis=0, keepdims=True)[None]  # sumsq
    if act == "relu":
        acc = jnp.maximum(acc, 0.0)
    y_ref[...] = acc.astype(y_ref.dtype)


def conv_matmul(patches, w, b, *, act, with_stats, out_dtype):
    """patches (M,K) bf16, w (K,C) bf16, b (1,C) f32 -> y (M,C) [+ sum/sumsq (C,)]."""
    M, K = patches.shape
    C = w.shape[1]
    Mp, TM = _pick_tiling(M)
    if Mp != M:                              # not hit for this model; kept for safety
        patches = jnp.pad(patches, ((0, Mp - M), (0, 0)))
    G = Mp // TM

    out_shape = [jax.ShapeDtypeStruct((Mp, C), out_dtype)]
    out_specs = [pl.BlockSpec((TM, C), lambda i: (i, 0))]
    if with_stats:
        out_shape.append(jax.ShapeDtypeStruct((G, 2, C), jnp.float32))
        out_specs.append(pl.BlockSpec((1, 2, C), lambda i: (i, 0, 0)))

    outs = pl.pallas_call(
        functools.partial(_conv_mm_kernel, act=act, with_stats=with_stats),
        out_shape=tuple(out_shape),
        grid=(G,),
        in_specs=[
            pl.BlockSpec((TM, K), lambda i: (i, 0)),
            pl.BlockSpec((K, C), lambda i: (0, 0)),
            pl.BlockSpec((1, C), lambda i: (0, 0)),
        ],
        out_specs=tuple(out_specs),
        compiler_params=pltpu.CompilerParams(
            dimension_semantics=("parallel",),
            vmem_limit_bytes=_VMEM_LIMIT),
    )(patches, w, b)

    y = outs[0][:M] if Mp != M else outs[0]
    if not with_stats:
        return y
    s = outs[1][:, 0, :].sum(axis=0)
    sq = outs[1][:, 1, :].sum(axis=0)
    if Mp != M:                              # zero patch rows contribute bias / bias^2
        n_pad = Mp - M
        bvec = b.reshape(-1)
        s = s - n_pad * bvec
        sq = sq - n_pad * bvec * bvec
    return y, s, sq


# ------------------------------ JAX glue --------------------------------------

def im2col(x, kh, kw, stride, pad):
    """x (N,H,W,C) NHWC -> bf16 patches (N*OH*OW, kh*kw*C).
    XLA fuses any preceding BN-affine/ReLU plus the pad/slice/cast into this."""
    N, H, W, C = x.shape
    xp = jnp.pad(x, ((0, 0), (pad, pad), (pad, pad), (0, 0)))
    OH = (H + 2 * pad - kh) // stride + 1
    OW = (W + 2 * pad - kw) // stride + 1
    pieces = []
    for i in range(kh):
        for j in range(kw):
            pieces.append(xp[:, i:i + stride * OH:stride, j:j + stride * OW:stride, :])
    p = jnp.stack(pieces, axis=3)                      # (N, OH, OW, kh*kw, C)
    p = p.reshape(N * OH * OW, kh * kw * C).astype(jnp.bfloat16)
    return p, (N, OH, OW)


def conv_relu(x, w, b, *, stride, pad):
    """Conv2d + ReLU fused into one Pallas matmul kernel.  Returns NHWC bf16."""
    kh, kw, cin, cout = w.shape
    patches, (N, OH, OW) = im2col(x, kh, kw, stride, pad)
    wm = w.reshape(kh * kw * cin, cout).astype(jnp.bfloat16)
    y = conv_matmul(patches, wm, b.reshape(1, cout).astype(jnp.float32),
                    act="relu", with_stats=False, out_dtype=jnp.bfloat16)
    return y.reshape(N, OH, OW, cout)


def conv_bn(x, w, b, gamma, beta, *, stride, pad, eps=1e-5):
    """Conv2d with fused BN batch-stat accumulation.  Returns the bf16 NHWC
    pre-activation plus the training-mode BN scale/shift; the affine + ReLU is
    applied by the caller's glue (fused by XLA into the next consumer)."""
    kh, kw, cin, cout = w.shape
    patches, (N, OH, OW) = im2col(x, kh, kw, stride, pad)
    wm = w.reshape(kh * kw * cin, cout).astype(jnp.bfloat16)
    y, s, sq = conv_matmul(patches, wm, b.reshape(1, cout).astype(jnp.float32),
                           act="none", with_stats=True, out_dtype=jnp.bfloat16)
    M = N * OH * OW
    mean = s / M
    var = jnp.maximum(sq / M - mean * mean, 0.0)   # biased var; clamp cancellation
    scale = gamma / jnp.sqrt(var + eps)
    shift = beta - mean * scale
    return y.reshape(N, OH, OW, cout), scale, shift


def bn_relu(y, scale, shift):
    """Training-mode BN affine + ReLU, applied in f32 in the consumer's glue."""
    return jnp.maximum(y.astype(jnp.float32) * scale + shift, 0.0)


def discriminator_forward(x_nchw, p):
    x = jnp.transpose(x_nchw, (0, 2, 3, 1))                            # NCHW -> NHWC
    x = conv_relu(x, p["w1"], p["b1"], stride=2, pad=1)
    y, sc2, sh2 = conv_bn(x, p["w2"], p["b2"], p["g2"], p["be2"], stride=2, pad=1)
    y, sc3, sh3 = conv_bn(bn_relu(y, sc2, sh2),
                          p["w3"], p["b3"], p["g3"], p["be3"], stride=2, pad=1)
    y, sc4, sh4 = conv_bn(bn_relu(y, sc3, sh3),
                          p["w4"], p["b4"], p["g4"], p["be4"], stride=2, pad=1)
    x = bn_relu(y, sc4, sh4)                                           # (N,4,4,8*img)
    # Final 4x4 valid conv (4x4 spatial -> 1x1, Cout=1) + sigmoid: far below one MXU
    # tile (M=batch, N=1) -- plain JAX dot per perf review.
    N = x.shape[0]
    logits = x.reshape(N, -1) @ p["w5"].reshape(-1, 1) + p["b5"].reshape(1, 1)
    return jax.nn.sigmoid(logits).reshape(-1)                          # output.view(-1)


# ----------------------------- pure-JAX reference -----------------------------

def _ref_conv(x, w, b, stride, pad):
    y = jax.lax.conv_general_dilated(
        x, w, (stride, stride), [(pad, pad), (pad, pad)],
        dimension_numbers=("NHWC", "HWIO", "NHWC"))
    return y + b


def _ref_bn_relu(x, g, be, eps=1e-5):
    mean = x.mean(axis=(0, 1, 2))
    var = x.var(axis=(0, 1, 2))
    return jnp.maximum((x - mean) / jnp.sqrt(var + eps) * g + be, 0.0)


def reference_forward(x_nchw, p):
    x = jnp.transpose(x_nchw, (0, 2, 3, 1))
    x = jnp.maximum(_ref_conv(x, p["w1"], p["b1"], 2, 1), 0.0)
    x = _ref_bn_relu(_ref_conv(x, p["w2"], p["b2"], 2, 1), p["g2"], p["be2"])
    x = _ref_bn_relu(_ref_conv(x, p["w3"], p["b3"], 2, 1), p["g3"], p["be3"])
    x = _ref_bn_relu(_ref_conv(x, p["w4"], p["b4"], 2, 1), p["g4"], p["be4"])
    x = 1.0 / (1.0 + jnp.exp(-_ref_conv(x, p["w5"], p["b5"], 1, 0)))
    return x.reshape(-1)


# --------------------------------- main ----------------------------------------

def init_params(key, img_size):
    c1, c2, c3, c4 = img_size, img_size * 2, img_size * 4, img_size * 8
    ks = jax.random.split(key, 5)
    std = 0.02

    def w(k, shape):
        return (std * jax.random.normal(k, shape)).astype(jnp.float32)

    p = {
        "w1": w(ks[0], (4, 4, 3, c1)),  "b1": jnp.zeros((c1,), jnp.float32),
        "w2": w(ks[1], (4, 4, c1, c2)), "b2": jnp.zeros((c2,), jnp.float32),
        "g2": jnp.ones((c2,), jnp.float32), "be2": jnp.zeros((c2,), jnp.float32),
        "w3": w(ks[2], (4, 4, c2, c3)), "b3": jnp.zeros((c3,), jnp.float32),
        "g3": jnp.ones((c3,), jnp.float32), "be3": jnp.zeros((c3,), jnp.float32),
        "w4": w(ks[3], (4, 4, c3, c4)), "b4": jnp.zeros((c4,), jnp.float32),
        "g4": jnp.ones((c4,), jnp.float32), "be4": jnp.zeros((c4,), jnp.float32),
        "w5": w(ks[4], (4, 4, c4, 1)),  "b5": jnp.zeros((1,), jnp.float32),
    }
    return p


if __name__ == "__main__":
    # The 5-layer stack (4x stride-2 convs + final valid 4x4 conv) requires a
    # 64x64 spatial input to reach a 1x1 map.  img_size (the channel base of this
    # module) is kept small (16), batch=2, for a small synthetic test.
    img_size = 16
    batch = 2

    key = jax.random.PRNGKey(0)
    kx, kp = jax.random.split(key)
    x = jax.random.normal(kx, (batch, 3, 64, 64), dtype=jnp.float32)  # NCHW like PyTorch
    params = init_params(kp, img_size)

    fwd = jax.jit(discriminator_forward)
    out = jax.block_until_ready(fwd(x, params))
    assert out.shape == (batch,), out.shape

    ref = jax.block_until_ready(jax.jit(reference_forward)(x, params))
    # bf16 MXU operands + bf16 pre-activation storage (f32 accumulation/stats)
    # -> slightly looser tolerance than pure f32.
    assert jnp.allclose(out, ref, atol=3e-2, rtol=3e-2), (out, ref)

    print("KERNEL_OK")
</pallas_src>

<mosaic_0001>
module attributes {stable_mosaic.version = 11 : i64} {
  func.func @_conv_mm_kernel(%arg0: i32, %arg1: memref<1024x48xbf16, #tpu.memory_space<vmem>>, %arg2: memref<48x16xbf16, #tpu.memory_space<vmem>>, %arg3: memref<1x16xf32, #tpu.memory_space<vmem>>, %arg4: memref<1024x16xbf16, #tpu.memory_space<vmem>>) attributes {dimension_semantics = [#tpu.dimension_semantics<parallel>], iteration_bounds = array<i64: 2>, scalar_prefetch = 0 : i64, scratch_operands = 0 : i64, tpu.core_type = #tpu.core_type<tc>, window_params = [{transform_indices = @transform_0, window_bounds = array<i64: 1024, 48>}, {pipeline_mode = #tpu.pipeline_mode<synchronous>, transform_indices = @transform_1, window_bounds = array<i64: 48, 16>}, {pipeline_mode = #tpu.pipeline_mode<synchronous>, transform_indices = @transform_2, window_bounds = array<i64: 1, 16>}, {transform_indices = @transform_3, window_bounds = array<i64: 1024, 16>}]} {
    %c0 = arith.constant 0 : index
    %c0_0 = arith.constant 0 : index
    %0 = vector.load %arg1[%c0, %c0_0] : memref<1024x48xbf16, #tpu.memory_space<vmem>>, vector<1024x48xbf16>
    %c0_1 = arith.constant 0 : index
    %c0_2 = arith.constant 0 : index
    %1 = vector.load %arg2[%c0_1, %c0_2] : memref<48x16xbf16, #tpu.memory_space<vmem>>, vector<48x16xbf16>
    %cst = arith.constant dense<0.000000e+00> : vector<1024x16xf32>
    %2 = tpu.matmul %0, %1, %cst {dimension_numbers = #tpu.dot_dimension_numbers<[1], [0], [0], [1], [0, 0, 1, 1], [], []>} : vector<1024x48xbf16>, vector<48x16xbf16>, vector<1024x16xf32> -> vector<1024x16xf32>
    %c0_3 = arith.constant 0 : index
    %c0_4 = arith.constant 0 : index
    %3 = vector.load %arg3[%c0_3, %c0_4] : memref<1x16xf32, #tpu.memory_space<vmem>>, vector<1x16xf32>
    %4 = vector.broadcast %3 : vector<1x16xf32> to vector<1024x16xf32>
    %5 = arith.addf %2, %4 : vector<1024x16xf32>
    %cst_5 = arith.constant 0.000000e+00 : f32
    %6 = vector.broadcast %cst_5 : f32 to vector<1024x16xf32>
    %7 = arith.maximumf %5, %6 : vector<1024x16xf32>
    %8 = arith.truncf %7 : vector<1024x16xf32> to vector<1024x16xbf16>
    %c0_6 = arith.constant 0 : index
    %c0_7 = arith.constant 0 : index
    %9 = vector.load %arg4[%c0_6, %c0_7] : memref<1024x16xbf16, #tpu.memory_space<vmem>>, vector<1024x16xbf16>
    tpu.vector_store %arg4[%c0_6, %c0_7], %8 {strides = array<i32>} : memref<1024x16xbf16, #tpu.memory_space<vmem>>, vector<1024x16xbf16>,
    return
  }
  func.func @transform_0(%arg0: i32) -> (i32, i32) {
    %c0_i32 = arith.constant 0 : i32
    %c0_i32_0 = arith.constant 0 : i32
    return %arg0, %c0_i32 : i32, i32
  }
  func.func @transform_1(%arg0: i32) -> (i32, i32) {
    %c0_i32 = arith.constant 0 : i32
    %c0_i32_0 = arith.constant 0 : i32
    %c0_i32_1 = arith.constant 0 : i32
    return %c0_i32, %c0_i32_0 : i32, i32
  }
  func.func @transform_2(%arg0: i32) -> (i32, i32) {
    %c0_i32 = arith.constant 0 : i32
    %c0_i32_0 = arith.constant 0 : i32
    %c0_i32_1 = arith.constant 0 : i32
    return %c0_i32, %c0_i32_0 : i32, i32
  }
  func.func @transform_3(%arg0: i32) -> (i32, i32) {
    %c0_i32 = arith.constant 0 : i32
    %c0_i32_0 = arith.constant 0 : i32
    return %arg0, %c0_i32 : i32, i32
  }
}

module attributes {stable_mosaic.version = 11 : i64} {
  func.func @_conv_mm_kernel(%arg0: i32, %arg1: memref<512x256xbf16, #tpu.memory_space<vmem>>, %arg2: memref<256x32xbf16, #tpu.memory_space<vmem>>, %arg3: memref<1x32xf32, #tpu.memory_space<vmem>>, %arg4: memref<512x32xbf16, #tpu.memory_space<vmem>>, %arg5: memref<1x2x32xf32, #tpu.memory_space<vmem>>) attributes {dimension_semantics = [#tpu.dimension_semantics<parallel>], iteration_bounds = array<i64: 1>, scalar_prefetch = 0 : i64, scratch_operands = 0 : i64, tpu.core_type = #tpu.core_type<tc>, window_params = [{transform_indices = @transform_0, window_bounds = array<i64: 512, 256>}, {pipeline_mode = #tpu.pipeline_mode<synchronous>, transform_indices = @transform_1, window_bounds = array<i64: 256, 32>}, {pipeline_mode = #tpu.pipeline_mode<synchronous>, transform_indices = @transform_2, window_bounds = array<i64: 1, 32>}, {transform_indices = @transform_3, window_bounds = array<i64: 512, 32>}, {transform_indices = @transform_4, window_bounds = array<i64: 1, 2, 32>}]} {
    %c0 = arith.constant 0 : index
    %c0_0 = arith.constant 0 : index
    %0 = vector.load %arg1[%c0, %c0_0] : memref<512x256xbf16, #tpu.memory_space<vmem>>, vector<512x256xbf16>
    %c0_1 = arith.constant 0 : index
    %c0_2 = arith.constant 0 : index
    %1 = vector.load %arg2[%c0_1, %c0_2] : memref<256x32xbf16, #tpu.memory_space<vmem>>, vector<256x32xbf16>
    %cst = arith.constant dense<0.000000e+00> : vector<512x32xf32>
    %2 = tpu.matmul %0, %1, %cst {dimension_numbers = #tpu.dot_dimension_numbers<[1], [0], [0], [1], [0, 0, 1, 1], [], []>} : vector<512x256xbf16>, vector<256x32xbf16>, vector<512x32xf32> -> vector<512x32xf32>
    %c0_3 = arith.constant 0 : index
    %c0_4 = arith.constant 0 : index
    %3 = vector.load %arg3[%c0_3, %c0_4] : memref<1x32xf32, #tpu.memory_space<vmem>>, vector<1x32xf32>
    %4 = vector.broadcast %3 : vector<1x32xf32> to vector<512x32xf32>
    %5 = arith.addf %2, %4 : vector<512x32xf32>
    %cst_5 = arith.constant dense<0.000000e+00> : vector<32xf32>
    %6 = vector.multi_reduction <add>, %5, %cst_5 [0] : vector<512x32xf32> to vector<32xf32>
    %7 = vector.shape_cast %6 : vector<32xf32> to vector<1x32xf32>
    %8 = vector.shape_cast %7 : vector<1x32xf32> to vector<1x1x32xf32>
    %c0_6 = arith.constant 0 : index
    %c0_7 = arith.constant 0 : index
    %c0_8 = arith.constant 0 : index
    %9 = vector.load %arg5[%c0_6, %c0_7, %c0_8] : memref<1x2x32xf32, #tpu.memory_space<vmem>>, vector<1x1x32xf32>
    tpu.vector_store %arg5[%c0_6, %c0_7, %c0_8], %8 {strides = array<i32>} : memref<1x2x32xf32, #tpu.memory_space<vmem>>, vector<1x1x32xf32>,
    %10 = arith.mulf %5, %5 : vector<512x32xf32>
    %cst_9 = arith.constant dense<0.000000e+00> : vector<32xf32>
    %11 = vector.multi_reduction <add>, %10, %cst_9 [0] : vector<512x32xf32> to vector<32xf32>
    %12 = vector.shape_cast %11 : vector<32xf32> to vector<1x32xf32>
    %13 = vector.shape_cast %12 : vector<1x32xf32> to vector<1x1x32xf32>
    %c0_10 = arith.constant 0 : index
    %c1 = arith.constant 1 : index
    %c0_11 = arith.constant 0 : index
    %14 = vector.load %arg5[%c0_10, %c1, %c0_11] : memref<1x2x32xf32, #tpu.memory_space<vmem>>, vector<1x1x32xf32>
    tpu.vector_store %arg5[%c0_10, %c1, %c0_11], %13 {strides = array<i32>} : memref<1x2x32xf32, #tpu.memory_space<vmem>>, vector<1x1x32xf32>,
    %15 = arith.truncf %5 : vector<512x32xf32> to vector<512x32xbf16>
    %c0_12 = arith.constant 0 : index
    %c0_13 = arith.constant 0 : index
    %16 = vector.load %arg4[%c0_12, %c0_13] : memref<512x32xbf16, #tpu.memory_space<vmem>>, vector<512x32xbf16>
    tpu.vector_store %arg4[%c0_12, %c0_13], %15 {strides = array<i32>} : memref<512x32xbf16, #tpu.memory_space<vmem>>, vector<512x32xbf16>,
    return
  }
  func.func @transform_0(%arg0: i32) -> (i32, i32) {
    %c0_i32 = arith.constant 0 : i32
    %c0_i32_0 = arith.constant 0 : i32
    return %arg0, %c0_i32 : i32, i32
  }
  func.func @transform_1(%arg0: i32) -> (i32, i32) {
    %c0_i32 = arith.constant 0 : i32
    %c0_i32_0 = arith.constant 0 : i32
    %c0_i32_1 = arith.constant 0 : i32
    return %c0_i32, %c0_i32_0 : i32, i32
  }
  func.func @transform_2(%arg0: i32) -> (i32, i32) {
    %c0_i32 = arith.constant 0 : i32
    %c0_i32_0 = arith.constant 0 : i32
    %c0_i32_1 = arith.constant 0 : i32
    return %c0_i32, %c0_i32_0 : i32, i32
  }
  func.func @transform_3(%arg0: i32) -> (i32, i32) {
    %c0_i32 = arith.constant 0 : i32
    %c0_i32_0 = arith.constant 0 : i32
    return %arg0, %c0_i32 : i32, i32
  }
  func.func @transform_4(%arg0: i32) -> (i32, i32, i32) {
    %c0_i32 = arith.constant 0 : i32
    %c0_i32_0 = arith.constant 0 : i32
    %c0_i32_1 = arith.constant 0 : i32
    return %arg0, %c0_i32, %c0_i32_0 : i32, i32, i32
  }
}

module attributes {stable_mosaic.version = 11 : i64} {
  func.func @_conv_mm_kernel(%arg0: i32, %arg1: memref<128x512xbf16, #tpu.memory_space<vmem>>, %arg2: memref<512x64xbf16, #tpu.memory_space<vmem>>, %arg3: memref<1x64xf32, #tpu.memory_space<vmem>>, %arg4: memref<128x64xbf16, #tpu.memory_space<vmem>>, %arg5: memref<1x2x64xf32, #tpu.memory_space<vmem>>) attributes {dimension_semantics = [#tpu.dimension_semantics<parallel>], iteration_bounds = array<i64: 1>, scalar_prefetch = 0 : i64, scratch_operands = 0 : i64, tpu.core_type = #tpu.core_type<tc>, window_params = [{transform_indices = @transform_0, window_bounds = array<i64: 128, 512>}, {pipeline_mode = #tpu.pipeline_mode<synchronous>, transform_indices = @transform_1, window_bounds = array<i64: 512, 64>}, {pipeline_mode = #tpu.pipeline_mode<synchronous>, transform_indices = @transform_2, window_bounds = array<i64: 1, 64>}, {transform_indices = @transform_3, window_bounds = array<i64: 128, 64>}, {transform_indices = @transform_4, window_bounds = array<i64: 1, 2, 64>}]} {
    %c0 = arith.constant 0 : index
    %c0_0 = arith.constant 0 : index
    %0 = vector.load %arg1[%c0, %c0_0] : memref<128x512xbf16, #tpu.memory_space<vmem>>, vector<128x512xbf16>
    %c0_1 = arith.constant 0 : index
    %c0_2 = arith.constant 0 : index
    %1 = vector.load %arg2[%c0_1, %c0_2] : memref<512x64xbf16, #tpu.memory_space<vmem>>, vector<512x64xbf16>
    %cst = arith.constant dense<0.000000e+00> : vector<128x64xf32>
    %2 = tpu.matmul %0, %1, %cst {dimension_numbers = #tpu.dot_dimension_numbers<[1], [0], [0], [1], [0, 0, 1, 1], [], []>} : vector<128x512xbf16>, vector<512x64xbf16>, vector<128x64xf32> -> vector<128x64xf32>
    %c0_3 = arith.constant 0 : index
    %c0_4 = arith.constant 0 : index
    %3 = vector.load %arg3[%c0_3, %c0_4] : memref<1x64xf32, #tpu.memory_space<vmem>>, vector<1x64xf32>
    %4 = vector.broadcast %3 : vector<1x64xf32> to vector<128x64xf32>
    %5 = arith.addf %2, %4 : vector<128x64xf32>
    %cst_5 = arith.constant dense<0.000000e+00> : vector<64xf32>
    %6 = vector.multi_reduction <add>, %5, %cst_5 [0] : vector<128x64xf32> to vector<64xf32>
    %7 = vector.shape_cast %6 : vector<64xf32> to vector<1x64xf32>
    %8 = vector.shape_cast %7 : vector<1x64xf32> to vector<1x1x64xf32>
    %c0_6 = arith.constant 0 : index
    %c0_7 = arith.constant 0 : index
    %c0_8 = arith.constant 0 : index
    %9 = vector.load %arg5[%c0_6, %c0_7, %c0_8] : memref<1x2x64xf32, #tpu.memory_space<vmem>>, vector<1x1x64xf32>
    tpu.vector_store %arg5[%c0_6, %c0_7, %c0_8], %8 {strides = array<i32>} : memref<1x2x64xf32, #tpu.memory_space<vmem>>, vector<1x1x64xf32>,
    %10 = arith.mulf %5, %5 : vector<128x64xf32>
    %cst_9 = arith.constant dense<0.000000e+00> : vector<64xf32>
    %11 = vector.multi_reduction <add>, %10, %cst_9 [0] : vector<128x64xf32> to vector<64xf32>
    %12 = vector.shape_cast %11 : vector<64xf32> to vector<1x64xf32>
    %13 = vector.shape_cast %12 : vector<1x64xf32> to vector<1x1x64xf32>
    %c0_10 = arith.constant 0 : index
    %c1 = arith.constant 1 : index
    %c0_11 = arith.constant 0 : index
    %14 = vector.load %arg5[%c0_10, %c1, %c0_11] : memref<1x2x64xf32, #tpu.memory_space<vmem>>, vector<1x1x64xf32>
    tpu.vector_store %arg5[%c0_10, %c1, %c0_11], %13 {strides = array<i32>} : memref<1x2x64xf32, #tpu.memory_space<vmem>>, vector<1x1x64xf32>,
    %15 = arith.truncf %5 : vector<128x64xf32> to vector<128x64xbf16>
    %c0_12 = arith.constant 0 : index
    %c0_13 = arith.constant 0 : index
    %16 = vector.load %arg4[%c0_12, %c0_13] : memref<128x64xbf16, #tpu.memory_space<vmem>>, vector<128x64xbf16>
    tpu.vector_store %arg4[%c0_12, %c0_13], %15 {strides = array<i32>} : memref<128x64xbf16, #tpu.memory_space<vmem>>, vector<128x64xbf16>,
    return
  }
  func.func @transform_0(%arg0: i32) -> (i32, i32) {
    %c0_i32 = arith.constant 0 : i32
    %c0_i32_0 = arith.constant 0 : i32
    return %arg0, %c0_i32 : i32, i32
  }
  func.func @transform_1(%arg0: i32) -> (i32, i32) {
    %c0_i32 = arith.constant 0 : i32
    %c0_i32_0 = arith.constant 0 : i32
    %c0_i32_1 = arith.constant 0 : i32
    return %c0_i32, %c0_i32_0 : i32, i32
  }
  func.func @transform_2(%arg0: i32) -> (i32, i32) {
    %c0_i32 = arith.constant 0 : i32
    %c0_i32_0 = arith.constant 0 : i32
    %c0_i32_1 = arith.constant 0 : i32
    return %c0_i32, %c0_i32_0 : i32, i32
  }
  func.func @transform_3(%arg0: i32) -> (i32, i32) {
    %c0_i32 = arith.constant 0 : i32
    %c0_i32_0 = arith.constant 0 : i32
    return %arg0, %c0_i32 : i32, i32
  }
  func.func @transform_4(%arg0: i32) -> (i32, i32, i32) {
    %c0_i32 = arith.constant 0 : i32
    %c0_i32_0 = arith.constant 0 : i32
    %c0_i32_1 = arith.constant 0 : i32
    return %arg0, %c0_i32, %c0_i32_0 : i32, i32, i32
  }
}

module attributes {stable_mosaic.version = 11 : i64} {
  func.func @_conv_mm_kernel(%arg0: i32, %arg1: memref<32x1024xbf16, #tpu.memory_space<vmem>>, %arg2: memref<1024x128xbf16, #tpu.memory_space<vmem>>, %arg3: memref<1x128xf32, #tpu.memory_space<vmem>>, %arg4: memref<32x128xbf16, #tpu.memory_space<vmem>>, %arg5: memref<1x2x128xf32, #tpu.memory_space<vmem>>) attributes {dimension_semantics = [#tpu.dimension_semantics<parallel>], iteration_bounds = array<i64: 1>, scalar_prefetch = 0 : i64, scratch_operands = 0 : i64, tpu.core_type = #tpu.core_type<tc>, window_params = [{transform_indices = @transform_0, window_bounds = array<i64: 32, 1024>}, {pipeline_mode = #tpu.pipeline_mode<synchronous>, transform_indices = @transform_1, window_bounds = array<i64: 1024, 128>}, {pipeline_mode = #tpu.pipeline_mode<synchronous>, transform_indices = @transform_2, window_bounds = array<i64: 1, 128>}, {transform_indices = @transform_3, window_bounds = array<i64: 32, 128>}, {transform_indices = @transform_4, window_bounds = array<i64: 1, 2, 128>}]} {
    %c0 = arith.constant 0 : index
    %c0_0 = arith.constant 0 : index
    %0 = vector.load %arg1[%c0, %c0_0] : memref<32x1024xbf16, #tpu.memory_space<vmem>>, vector<32x1024xbf16>
    %c0_1 = arith.constant 0 : index
    %c0_2 = arith.constant 0 : index
    %1 = vector.load %arg2[%c0_1, %c0_2] : memref<1024x128xbf16, #tpu.memory_space<vmem>>, vector<1024x128xbf16>
    %cst = arith.constant dense<0.000000e+00> : vector<32x128xf32>
    %2 = tpu.matmul %0, %1, %cst {dimension_numbers = #tpu.dot_dimension_numbers<[1], [0], [0], [1], [0, 0, 1, 1], [], []>} : vector<32x1024xbf16>, vector<1024x128xbf16>, vector<32x128xf32> -> vector<32x128xf32>
    %c0_3 = arith.constant 0 : index
    %c0_4 = arith.constant 0 : index
    %3 = vector.load %arg3[%c0_3, %c0_4] : memref<1x128xf32, #tpu.memory_space<vmem>>, vector<1x128xf32>
    %4 = vector.broadcast %3 : vector<1x128xf32> to vector<32x128xf32>
    %5 = arith.addf %2, %4 : vector<32x128xf32>
    %cst_5 = arith.constant dense<0.000000e+00> : vector<128xf32>
    %6 = vector.multi_reduction <add>, %5, %cst_5 [0] : vector<32x128xf32> to vector<128xf32>
    %7 = vector.shape_cast %6 : vector<128xf32> to vector<1x128xf32>
    %8 = vector.shape_cast %7 : vector<1x128xf32> to vector<1x1x128xf32>
    %c0_6 = arith.constant 0 : index
    %c0_7 = arith.constant 0 : index
    %c0_8 = arith.constant 0 : index
    %9 = vector.load %arg5[%c0_6, %c0_7, %c0_8] : memref<1x2x128xf32, #tpu.memory_space<vmem>>, vector<1x1x128xf32>
    tpu.vector_store %arg5[%c0_6, %c0_7, %c0_8], %8 {strides = array<i32>} : memref<1x2x128xf32, #tpu.memory_space<vmem>>, vector<1x1x128xf32>,
    %10 = arith.mulf %5, %5 : vector<32x128xf32>
    %cst_9 = arith.constant dense<0.000000e+00> : vector<128xf32>
    %11 = vector.multi_reduction <add>, %10, %cst_9 [0] : vector<32x128xf32> to vector<128xf32>
    %12 = vector.shape_cast %11 : vector<128xf32> to vector<1x128xf32>
    %13 = vector.shape_cast %12 : vector<1x128xf32> to vector<1x1x128xf32>
    %c0_10 = arith.constant 0 : index
    %c1 = arith.constant 1 : index
    %c0_11 = arith.constant 0 : index
    %14 = vector.load %arg5[%c0_10, %c1, %c0_11] : memref<1x2x128xf32, #tpu.memory_space<vmem>>, vector<1x1x128xf32>
    tpu.vector_store %arg5[%c0_10, %c1, %c0_11], %13 {strides = array<i32>} : memref<1x2x128xf32, #tpu.memory_space<vmem>>, vector<1x1x128xf32>,
    %15 = arith.truncf %5 : vector<32x128xf32> to vector<32x128xbf16>
    %c0_12 = arith.constant 0 : index
    %c0_13 = arith.constant 0 : index
    %16 = vector.load %arg4[%c0_12, %c0_13] : memref<32x128xbf16, #tpu.memory_space<vmem>>, vector<32x128xbf16>
    tpu.vector_store %arg4[%c0_12, %c0_13], %15 {strides = array<i32>} : memref<32x128xbf16, #tpu.memory_space<vmem>>, vector<32x128xbf16>,
    return
  }
  func.func @transform_0(%arg0: i32) -> (i32, i32) {
    %c0_i32 = arith.constant 0 : i32
    %c0_i32_0 = arith.constant 0 : i32
    return %arg0, %c0_i32 : i32, i32
  }
  func.func @transform_1(%arg0: i32) -> (i32, i32) {
    %c0_i32 = arith.constant 0 : i32
    %c0_i32_0 = arith.constant 0 : i32
    %c0_i32_1 = arith.constant 0 : i32
    return %c0_i32, %c0_i32_0 : i32, i32
  }
  func.func @transform_2(%arg0: i32) -> (i32, i32) {
    %c0_i32 = arith.constant 0 : i32
    %c0_i32_0 = arith.constant 0 : i32
    %c0_i32_1 = arith.constant 0 : i32
    return %c0_i32, %c0_i32_0 : i32, i32
  }
  func.func @transform_3(%arg0: i32) -> (i32, i32) {
    %c0_i32 = arith.constant 0 : i32
    %c0_i32_0 = arith.constant 0 : i32
    return %arg0, %c0_i32 : i32, i32
  }
  func.func @transform_4(%arg0: i32) -> (i32, i32, i32) {
    %c0_i32 = arith.constant 0 : i32
    %c0_i32_0 = arith.constant 0 : i32
    %c0_i32_1 = arith.constant 0 : i32
    return %arg0, %c0_i32, %c0_i32_0 : i32, i32, i32
  }
}

</mosaic_0001>

<llo_original>
// kernel: discriminator_forward.4
$region0: #{discriminator_forward.4}
  #allocation0 [shape = 'u32[]', space=smem, size = 0x4, offset = 0x4, fixed_abs, tag = 'smem constant byte address 0x4 - core index']
  #allocation1 [shape = 'u32[144,128]{1,0:T(1,128)}', space=vmem, size = 0x12000, scoped, tag = 'internal scratch']
  %s0 = inlined_call_operand.vmem [shape: bf16[2048,48], index: 0, kind: input, shape index: {}]
  %s1 = inlined_call_operand.vmem [shape: bf16[48,16], index: 1, kind: input, shape index: {}]
  %s2 = inlined_call_operand.vmem [shape: f32[1,16], index: 2, kind: input, shape index: {}]
  %s3 = inlined_call_operand.vmem [shape: bf16[2048,16], index: 3, kind: output, shape index: {}]
  %s4 = sld [smem:[#allocation0]]
  $region45: #{discriminator_forward.4} parent=0
    _
  %s6 = ssub.s32 1, %s4
  %s7 = scalar_select 0, %s6, %s4
  loop: start=0, step=1, limit=4
  $region2: #{discriminator_forward.4} parent=0 // loop_pre_header
    _
  $region3: #{discriminator_forward.4} parent=0 // loop_header
    %s9 = sphi 0, %s13
    %p10 = scmp.ge.s32.totalorder %s9, 4
    %s19 = sphi 0, %s21
    %s22 = sphi 0, %s19
    %s23 = sphi 0, %s22
    %s39 = sphi 0, %s23
    %s43 = sphi 0, %s43
    %s45 = sphi 0, %s43
    %s46 = sphi 0, %s45
    %s60 = sphi 0, %s46
    %s64 = sphi 0, %s64
    %s66 = sphi 0, %s64
    %s67 = sphi 0, %s66
    %s81 = sphi 0, %s67
    %s87 = sphi 0, %s89
    %s90 = sphi 0, %s87
    %s91 = sphi 0, %s90
    %s107 = sphi 0, %s91
  $region4: #{discriminator_forward.4} parent=0 // loop_header_branch
    %12 = sbr.rel (%p10) target = $region8
  $region5: #{discriminator_forward.4} parent=0 // loop_body
    %s14 = ssub.s32 %s9, 1
    %s15 = ssub.s32 %s9, 2
    %s16 = sadd.s32 %s9, 1
    %s17 = ssub.s32 %s9, %s16
    %p18 = scmp.eq.s32.totalorder %s17, 0
    %s20 = sadd.s32 %s19, 1
    %s21 = scalar_select %p18, %s19, %s20
    %p24 = pneg %p18
    %p25 = scmp.eq.s32.totalorder %s9, 1
    %p26 = por %p24, %p25
    %p27 = scmp.ne.s32.totalorder %s19, %s22
    %p28 = scmp.eq.s32.totalorder %s9, 0
    %p29 = por %p27, %p28
    %p30 = scmp.ne.s32.totalorder %s19, %s22
    %p31 = scmp.eq.s32.totalorder %s14, 1
    %p32 = por %p30, %p31
    %p33 = scmp.ne.s32.totalorder %s22, %s23
    %p34 = scmp.eq.s32.totalorder %s14, 0
    %p35 = por %p33, %p34
    %p36 = scmp.ne.s32.totalorder %s22, %s23
    %p37 = scmp.eq.s32.totalorder %s15, 1
    %p38 = por %p36, %p37
    %p40 = scmp.ne.s32.totalorder %s23, %s39
    %p41 = scmp.eq.s32.totalorder %s15, 0
    %p42 = por %p40, %p41
    %s44 = sadd.s32 %s43, 1
    %p47 = scmp.eq.s32.totalorder %s9, 1
    %p48 = scmp.ne.s32.totalorder %s43, %s45
    %p49 = scmp.eq.s32.totalorder %s9, 0
    %p50 = por %p48, %p49
    %p51 = scmp.ne.s32.totalorder %s43, %s45
    %p52 = scmp.eq.s32.totalorder %s14, 1
    %p53 = por %p51, %p52
    %p54 = scmp.ne.s32.totalorder %s45, %s46
    %p55 = scmp.eq.s32.totalorder %s14, 0
    %p56 = por %p54, %p55
    %p57 = scmp.ne.s32.totalorder %s45, %s46
    %p58 = scmp.eq.s32.totalorder %s15, 1
    %p59 = por %p57, %p58
    %p61 = scmp.ne.s32.totalorder %s46, %s60
    %p62 = scmp.eq.s32.totalorder %s15, 0
    %p63 = por %p61, %p62
    %s65 = sadd.s32 %s64, 1
    %p68 = scmp.eq.s32.totalorder %s9, 1
    %p69 = scmp.ne.s32.totalorder %s64, %s66
    %p70 = scmp.eq.s32.totalorder %s9, 0
    %p71 = por %p69, %p70
    %p72 = scmp.ne.s32.totalorder %s64, %s66
    %p73 = scmp.eq.s32.totalorder %s14, 1
    %p74 = por %p72, %p73
    %p75 = scmp.ne.s32.totalorder %s66, %s67
    %p76 = scmp.eq.s32.totalorder %s14, 0
    %p77 = por %p75, %p76
    %p78 = scmp.ne.s32.totalorder %s66, %s67
    %p79 = scmp.eq.s32.totalorder %s15, 1
    %p80 = por %p78, %p79
    %p82 = scmp.ne.s32.totalorder %s67, %s81
    %p83 = scmp.eq.s32.totalorder %s15, 0
    %p84 = por %p82, %p83
    %s85 = ssub.s32 %s9, %s16
    %p86 = scmp.eq.s32.totalorder %s85, 0
    %s88 = sadd.s32 %s87, 1
    %s89 = scalar_select %p86, %s87, %s88
    %p92 = pneg %p86
    %p93 = scmp.eq.s32.totalorder %s9, 1
    %p94 = por %p92, %p93
    %p95 = scmp.ne.s32.totalorder %s87, %s90
    %p96 = scmp.eq.s32.totalorder %s9, 0
    %p97 = por %p95, %p96
    %p98 = scmp.ne.s32.totalorder %s87, %s90
    %p99 = scmp.eq.s32.totalorder %s14, 1
    %p100 = por %p98, %p99
    %p101 = scmp.ne.s32.totalorder %s90, %s91
    %p102 = scmp.eq.s32.totalorder %s14, 0
    %p103 = por %p101, %p102
    %p104 = scmp.ne.s32.totalorder %s90, %s91
    %p105 = scmp.eq.s32.totalorder %s15, 1
    %p106 = por %p104, %p105
    %p108 = scmp.ne.s32.totalorder %s91, %s107
    %p109 = scmp.eq.s32.totalorder %s15, 0
    %p110 = por %p108, %p109
    %p111 = scmp.le.s32.totalorder 1, %s9
    %p112 = scmp.lt.s32.totalorder %s9, 3
    %p113 = pnand %p111, %p112
    %p114 = pneg %p113
    // Predicated region
    $region9: #{discriminator_forward.4} parent=5 // pred_check
      _
    $region10: #{discriminator_forward.4} parent=5 // pred_check_branch
      %116 = sbr.rel (%p113) target = $region12
    $region11: #{discriminator_forward.4} parent=5 // pred_region
      %s117 = ssub.s32 %s9, 1
      // Predicated region
      $region13: #{discriminator_forward.4} parent=11 // pred_check
        %p118 = pneg %p56
      $region14: #{discriminator_forward.4} parent=11 // pred_check_branch
        %120 = sbr.rel (%p118) target = $region16
      $region15: #{discriminator_forward.4} parent=11 // pred_region
        _
      $region16: #{discriminator_forward.4} parent=11 // pred_fallthru
        _
      // Predicated region
      $region17: #{discriminator_forward.4} parent=11 // pred_check
        %p121 = pneg %p77
      $region18: #{discriminator_forward.4} parent=11 // pred_check_branch
        %123 = sbr.rel (%p121) target = $region20
      $region19: #{discriminator_forward.4} parent=11 // pred_region
        _
      $region20: #{discriminator_forward.4} parent=11 // pred_fallthru
        _
    $region12: #{discriminator_forward.4} parent=5 // pred_fallthru
      _
    %p124 = scmp.lt.s32.totalorder %s9, 2
    // Predicated region
    $region21: #{discriminator_forward.4} parent=5 // pred_check
      %p125 = pneg %p124
    $region22: #{discriminator_forward.4} parent=5 // pred_check_branch
      %127 = sbr.rel (%p125) target = $region24
    $region23: #{discriminator_forward.4} parent=5 // pred_region
      // Predicated region
      $region25: #{discriminator_forward.4} parent=23 // pred_check
        %p128 = pneg %p29
      $region26: #{discriminator_forward.4} parent=23 // pred_check_branch
        %130 = sbr.rel (%p128) target = $region28
      $region27: #{discriminator_forward.4} parent=23 // pred_region
        %s131 = smul.u32 128, %s9
        %p132 = scmp.lt.s32.totalorder %s131, 255
        %s133 = scalar_select %p132, %s131, 255
        %s134 = smul.addr %s133, 4
        %s135 = scalar_lea.vmem %s0, %s134
        %s136 = smul.u32 128, %s9
      $region28: #{discriminator_forward.4} parent=23 // pred_fallthru
        _
    $region24: #{discriminator_forward.4} parent=5 // pred_fallthru
      _
    %p137 = scmp.le.s32.totalorder 1, %s9
    %p138 = scmp.lt.s32.totalorder %s9, 3
    %p139 = pnand %p137, %p138
    %p140 = pneg %p139
    // Predicated region
    $region29: #{discriminator_forward.4} parent=5 // pred_check
      _
    $region30: #{discriminator_forward.4} parent=5 // pred_check_branch
      %142 = sbr.rel (%p139) target = $region32
    $region31: #{discriminator_forward.4} parent=5 // pred_region
      %s143 = ssub.s32 %s9, 1
      %s144 = smul.u32 128, %s14
      %p145 = scmp.lt.s32.totalorder %s144, 255
      %s146 = scalar_select %p145, %s144, 255
      %s147 = smul.addr %s146, 4
      %s148 = scalar_lea.vmem %s0, %s147
      %p149 = pneg %p35
      %p150 = pneg %p32
      %p151 = pneg %p56
      %p152 = pneg %p53
      %p153 = pneg %p77
      %p154 = pneg %p74
      %p155 = pneg %p103
      %p156 = pneg %p100
      %s157 = smul.u32 128, %s14
      %p158 = scmp.lt.s32.totalorder %s157, 255
      %s159 = scalar_select %p158, %s157, 255
      %s160 = smul.addr %s159, 4
      %s161 = scalar_lea.vmem %s3, %s160
      %s162 = smul.u32 128, %s14
      %p163 = scmp.lt.s32.totalorder %s162, 255
      %s164 = scalar_select %p163, %s162, 255
      %s165 = smul.addr %s164, 4
      %s166 = scalar_lea.vmem %s0, %s165
      %s167 = smul.u32 128, %s14
      %s168 = smul.u32 128, %s14
      %p169 = scmp.lt.s32.totalorder %s168, 255
      %s170 = scalar_select %p169, %s168, 255
      %s171 = smul.addr %s170, 4
      %s172 = scalar_lea.vmem %s3, %s171
      %s173 = smul.u32 128, %s14
      %v175 = vld [vmem:[%s166] sm:$0xf]
      %v176 = vld [vmem:[%s166 + $0x4] sm:$0xf]
      %v177 = vld [vmem:[%s166 + $0x8] sm:$0xf]
      %v178 = vld [vmem:[%s166 + $0xc] sm:$0xf]
      %v179 = vld [vmem:[%s166 + $0x10] sm:$0xf]
      %v180 = vld [vmem:[%s166 + $0x14] sm:$0xf]
      %v181 = vld [vmem:[%s166 + $0x18] sm:$0xf]
      %v182 = vld [vmem:[%s166 + $0x1c] sm:$0xf]
      %v183 = vld [vmem:[%s166 + $0x20] sm:$0xf]
      %v184 = vld [vmem:[%s166 + $0x24] sm:$0xf]
      %v185 = vld [vmem:[%s166 + $0x28] sm:$0xf]
      %v186 = vld [vmem:[%s166 + $0x2c] sm:$0xf]
      %v187 = vld [vmem:[%s166 + $0x30] sm:$0xf]
      %v188 = vld [vmem:[%s166 + $0x34] sm:$0xf]
      %v189 = vld [vmem:[%s166 + $0x38] sm:$0xf]
      %v190 = vld [vmem:[%s166 + $0x3c] sm:$0xf]
      %v191 = vld [vmem:[%s166 + $0x40] sm:$0xf]
      %v192 = vld [vmem:[%s166 + $0x44] sm:$0xf]
      %v193 = vld [vmem:[%s166 + $0x48] sm:$0xf]
      %v194 = vld [vmem:[%s166 + $0x4c] sm:$0xf]
      %v195 = vld [vmem:[%s166 + $0x50] sm:$0xf]
      %v196 = vld [vmem:[%s166 + $0x54] sm:$0xf]
      %v197 = vld [vmem:[%s166 + $0x58] sm:$0xf]
      %v198 = vld [vmem:[%s166 + $0x5c] sm:$0xf]
      %v199 = vld [vmem:[%s166 + $0x60] sm:$0xf]
      %v200 = vld [vmem:[%s166 + $0x64] sm:$0xf]
      %v201 = vld [vmem:[%s166 + $0x68] sm:$0xf]
      %v202 = vld [vmem:[%s166 + $0x6c] sm:$0xf]
      %v203 = vld [vmem:[%s166 + $0x70] sm:$0xf]
      %v204 = vld [vmem:[%s166 + $0x74] sm:$0xf]
      %v205 = vld [vmem:[%s166 + $0x78] sm:$0xf]
      %v206 = vld [vmem:[%s166 + $0x7c] sm:$0xf]
      %v207 = vld [vmem:[%s166 + $0x80] sm:$0xf]
      %v208 = vld [vmem:[%s166 + $0x84] sm:$0xf]
      %v209 = vld [vmem:[%s166 + $0x88] sm:$0xf]
      %v210 = vld [vmem:[%s166 + $0x8c] sm:$0xf]
      %v211 = vld [vmem:[%s166 + $0x90] sm:$0xf]
      %v212 = vld [vmem:[%s166 + $0x94] sm:$0xf]
      %v213 = vld [vmem:[%s166 + $0x98] sm:$0xf]
      %v214 = vld [vmem:[%s166 + $0x9c] sm:$0xf]
      %v215 = vld [vmem:[%s166 + $0xa0] sm:$0xf]
      %v216 = vld [vmem:[%s166 + $0xa4] sm:$0xf]
      %v217 = vld [vmem:[%s166 + $0xa8] sm:$0xf]
      %v218 = vld [vmem:[%s166 + $0xac] sm:$0xf]
      %v219 = vld [vmem:[%s166 + $0xb0] sm:$0xf]
      %v220 = vld [vmem:[%s166 + $0xb4] sm:$0xf]
      %v221 = vld [vmem:[%s166 + $0xb8] sm:$0xf]
      %v222 = vld [vmem:[%s166 + $0xbc] sm:$0xf]
      %v223 = vld [vmem:[%s166 + $0xc0] sm:$0xf]
      %v224 = vld [vmem:[%s166 + $0xc4] sm:$0xf]
      %v225 = vld [vmem:[%s166 + $0xc8] sm:$0xf]
      %v226 = vld [vmem:[%s166 + $0xcc] sm:$0xf]
      %v227 = vld [vmem:[%s166 + $0xd0] sm:$0xf]
      %v228 = vld [vmem:[%s166 + $0xd4] sm:$0xf]
      %v229 = vld [vmem:[%s166 + $0xd8] sm:$0xf]
      %v230 = vld [vmem:[%s166 + $0xdc] sm:$0xf]
      %v231 = vld [vmem:[%s166 + $0xe0] sm:$0xf]
      %v232 = vld [vmem:[%s166 + $0xe4] sm:$0xf]
      %v233 = vld [vmem:[%s166 + $0xe8] sm:$0xf]
      %v234 = vld [vmem:[%s166 + $0xec] sm:$0xf]
      %v235 = vld [vmem:[%s166 + $0xf0] sm:$0xf]
      %v236 = vld [vmem:[%s166 + $0xf4] sm:$0xf]
      %v237 = vld [vmem:[%s166 + $0xf8] sm:$0xf]
      %v238 = vld [vmem:[%s166 + $0xfc] sm:$0xf]
      %v239 = vld [vmem:[%s166 + $0x100] sm:$0xf]
      %v240 = vld [vmem:[%s166 + $0x104] sm:$0xf]
      %v241 = vld [vmem:[%s166 + $0x108] sm:$0xf]
      %v242 = vld [vmem:[%s166 + $0x10c] sm:$0xf]
      %v243 = vld [vmem:[%s166 + $0x110] sm:$0xf]
      %v244 = vld [vmem:[%s166 + $0x114] sm:$0xf]
      %v245 = vld [vmem:[%s166 + $0x118] sm:$0xf]
      %v246 = vld [vmem:[%s166 + $0x11c] sm:$0xf]
      %v247 = vld [vmem:[%s166 + $0x120] sm:$0xf]
      %v248 = vld [vmem:[%s166 + $0x124] sm:$0xf]
      %v249 = vld [vmem:[%s166 + $0x128] sm:$0xf]
      %v250 = vld [vmem:[%s166 + $0x12c] sm:$0xf]
      %v251 = vld [vmem:[%s166 + $0x130] sm:$0xf]
      %v252 = vld [vmem:[%s166 + $0x134] sm:$0xf]
      %v253 = vld [vmem:[%s166 + $0x138] sm:$0xf]
      %v254 = vld [vmem:[%s166 + $0x13c] sm:$0xf]
      %v255 = vld [vmem:[%s166 + $0x140] sm:$0xf]
      %v256 = vld [vmem:[%s166 + $0x144] sm:$0xf]
      %v257 = vld [vmem:[%s166 + $0x148] sm:$0xf]
      %v258 = vld [vmem:[%s166 + $0x14c] sm:$0xf]
      %v259 = vld [vmem:[%s166 + $0x150] sm:$0xf]
      %v260 = vld [vmem:[%s166 + $0x154] sm:$0xf]
      %v261 = vld [vmem:[%s166 + $0x158] sm:$0xf]
      %v262 = vld [vmem:[%s166 + $0x15c] sm:$0xf]
      %v263 = vld [vmem:[%s166 + $0x160] sm:$0xf]
      %v264 = vld [vmem:[%s166 + $0x164] sm:$0xf]
      %v265 = vld [vmem:[%s166 + $0x168] sm:$0xf]
      %v266 = vld [vmem:[%s166 + $0x16c] sm:$0xf]
      %v267 = vld [vmem:[%s166 + $0x170] sm:$0xf]
      %v268 = vld [vmem:[%s166 + $0x174] sm:$0xf]
      %v269 = vld [vmem:[%s166 + $0x178] sm:$0xf]
      %v270 = vld [vmem:[%s166 + $0x17c] sm:$0xf]
      %v271 = vld [vmem:[%s166 + $0x180] sm:$0xf]
      %v272 = vld [vmem:[%s166 + $0x184] sm:$0xf]
      %v273 = vld [vmem:[%s166 + $0x188] sm:$0xf]
      %v274 = vld [vmem:[%s166 + $0x18c] sm:$0xf]
      %v275 = vld [vmem:[%s166 + $0x190] sm:$0xf]
      %v276 = vld [vmem:[%s166 + $0x194] sm:$0xf]
      %v277 = vld [vmem:[%s166 + $0x198] sm:$0xf]
      %v278 = vld [vmem:[%s166 + $0x19c] sm:$0xf]
      %v279 = vld [vmem:[%s166 + $0x1a0] sm:$0xf]
      %v280 = vld [vmem:[%s166 + $0x1a4] sm:$0xf]
      %v281 = vld [vmem:[%s166 + $0x1a8] sm:$0xf]
      %v282 = vld [vmem:[%s166 + $0x1ac] sm:$0xf]
      %v283 = vld [vmem:[%s166 + $0x1b0] sm:$0xf]
      %v284 = vld [vmem:[%s166 + $0x1b4] sm:$0xf]
      %v285 = vld [vmem:[%s166 + $0x1b8] sm:$0xf]
      %v286 = vld [vmem:[%s166 + $0x1bc] sm:$0xf]
      %v287 = vld [vmem:[%s166 + $0x1c0] sm:$0xf]
      %v288 = vld [vmem:[%s166 + $0x1c4] sm:$0xf]
      %v289 = vld [vmem:[%s166 + $0x1c8] sm:$0xf]
      %v290 = vld [vmem:[%s166 + $0x1cc] sm:$0xf]
      %v291 = vld [vmem:[%s166 + $0x1d0] sm:$0xf]
      %v292 = vld [vmem:[%s166 + $0x1d4] sm:$0xf]
      %v293 = vld [vmem:[%s166 + $0x1d8] sm:$0xf]
      %v294 = vld [vmem:[%s166 + $0x1dc] sm:$0xf]
      %v295 = vld [vmem:[%s166 + $0x1e0] sm:$0xf]
      %v296 = vld [vmem:[%s166 + $0x1e4] sm:$0xf]
      %v297 = vld [vmem:[%s166 + $0x1e8] sm:$0xf]
      %v298 = vld [vmem:[%s166 + $0x1ec] sm:$0xf]
      %v299 = vld [vmem:[%s166 + $0x1f0] sm:$0xf]
      %v300 = vld [vmem:[%s166 + $0x1f4] sm:$0xf]
      %v301 = vld [vmem:[%s166 + $0x1f8] sm:$0xf]
      %v302 = vld [vmem:[%s166 + $0x1fc] sm:$0xf]
      %v303 = vld [vmem:[%s1] sm:$0xf]
      %v304 = vld [vmem:[%s1 + $0x4] sm:$0xf]
      %v305 = vld [vmem:[%s1 + $0x8] sm:$0xf]
      %v306 = vld [vmem:[%s1 + $0xc] sm:$0xf]
      %v307 = vld [vmem:[%s1 + $0x10] sm:$0xf]
      %v308 = vld [vmem:[%s1 + $0x14] sm:$0xf]
      %v309 = vld [vmem:[%s2] sm:$0x1]
      %v311 = vlaneseq
      %v312 = vshrl.u32 %v311, 7
      %v313 = vsub.s32 0, %v312
      %v314 = vrot.slane %v309, %v313
      %v444 = vunpack.c.l.b16 %v175
      %v445 = vunpack.c.l.b16 %v176
      %v446 = vunpack.c.l.b16 %v177
      %v447 = vunpack.c.l.b16 %v178
      %v448 = vunpack.c.l.b16 %v179
      %v449 = vunpack.c.l.b16 %v180
      %v450 = vunpack.c.l.b16 %v181
      %v451 = vunpack.c.l.b16 %v182
      %v452 = vunpack.c.l.b16 %v183
      %v453 = vunpack.c.l.b16 %v184
      %v454 = vunpack.c.l.b16 %v185
      %v455 = vunpack.c.l.b16 %v186
      %v456 = vunpack.c.l.b16 %v187
      %v457 = vunpack.c.l.b16 %v188
      %v458 = vunpack.c.l.b16 %v189
      %v459 = vunpack.c.l.b16 %v190
      %v460 = vunpack.c.l.b16 %v191
      %v461 = vunpack.c.l.b16 %v192
      %v462 = vunpack.c.l.b16 %v193
      %v463 = vunpack.c.l.b16 %v194
      %v464 = vunpack.c.l.b16 %v195
      %v465 = vunpack.c.l.b16 %v196
      %v466 = vunpack.c.l.b16 %v197
      %v467 = vunpack.c.l.b16 %v198
      %v468 = vunpack.c.l.b16 %v199
      %v469 = vunpack.c.l.b16 %v200
      %v470 = vunpack.c.l.b16 %v201
      %v471 = vunpack.c.l.b16 %v202
      %v472 = vunpack.c.l.b16 %v203
      %v473 = vunpack.c.l.b16 %v204
      %v474 = vunpack.c.l.b16 %v205
      %v475 = vunpack.c.l.b16 %v206
      %v476 = vunpack.c.l.b16 %v207
      %v477 = vunpack.c.l.b16 %v208
      %v478 = vunpack.c.l.b16 %v209
      %v479 = vunpack.c.l.b16 %v210
      %v480 = vunpack.c.l.b16 %v211
      %v481 = vunpack.c.l.b16 %v212
      %v482 = vunpack.c.l.b16 %v213
      %v483 = vunpack.c.l.b16 %v214
      %v484 = vunpack.c.l.b16 %v215
      %v485 = vunpack.c.l.b16 %v216
      %v486 = vunpack.c.l.b16 %v217
      %v487 = vunpack.c.l.b16 %v218
      %v488 = vunpack.c.l.b16 %v219
      %v489 = vunpack.c.l.b16 %v220
      %v490 = vunpack.c.l.b16 %v221
      %v491 = vunpack.c.l.b16 %v222
      %v492 = vunpack.c.l.b16 %v223
      %v493 = vunpack.c.l.b16 %v224
      %v494 = vunpack.c.l.b16 %v225
      %v495 = vunpack.c.l.b16 %v226
      %v496 = vunpack.c.l.b16 %v227
      %v497 = vunpack.c.l.b16 %v228
      %v498 = vunpack.c.l.b16 %v229
      %v499 = vunpack.c.l.b16 %v230
      %v500 = vunpack.c.l.b16 %v231
      %v501 = vunpack.c.l.b16 %v232
      %v502 = vunpack.c.l.b16 %v233
      %v503 = vunpack.c.l.b16 %v234
      %v504 = vunpack.c.l.b16 %v235
      %v505 = vunpack.c.l.b16 %v236
      %v506 = vunpack.c.l.b16 %v237
      %v507 = vunpack.c.l.b16 %v238
      %v508 = vunpack.c.l.b16 %v239
      %v509 = vunpack.c.l.b16 %v240
      %v510 = vunpack.c.l.b16 %v241
      %v511 = vunpack.c.l.b16 %v242
      %v512 = vunpack.c.l.b16 %v243
      %v513 = vunpack.c.l.b16 %v244
      %v514 = vunpack.c.l.b16 %v245
      %v515 = vunpack.c.l.b16 %v246
      %v516 = vunpack.c.l.b16 %v247
      %v517 = vunpack.c.l.b16 %v248
      %v518 = vunpack.c.l.b16 %v249
      %v519 = vunpack.c.l.b16 %v250
      %v520 = vunpack.c.l.b16 %v251
      %v521 = vunpack.c.l.b16 %v252
      %v522 = vunpack.c.l.b16 %v253
      %v523 = vunpack.c.l.b16 %v254
      %v524 = vunpack.c.l.b16 %v255
      %v525 = vunpack.c.l.b16 %v256
      %v526 = vunpack.c.l.b16 %v257
      %v527 = vunpack.c.l.b16 %v258
      %v528 = vunpack.c.l.b16 %v259
      %v529 = vunpack.c.l.b16 %v260
      %v530 = vunpack.c.l.b16 %v261
      %v531 = vunpack.c.l.b16 %v262
      %v532 = vunpack.c.l.b16 %v263
      %v533 = vunpack.c.l.b16 %v264
      %v534 = vunpack.c.l.b16 %v265
      %v535 = vunpack.c.l.b16 %v266
      %v536 = vunpack.c.l.b16 %v267
      %v537 = vunpack.c.l.b16 %v268
      %v538 = vunpack.c.l.b16 %v269
      %v539 = vunpack.c.l.b16 %v270
      %v540 = vunpack.c.l.b16 %v271
      %v541 = vunpack.c.l.b16 %v272
      %v542 = vunpack.c.l.b16 %v273
      %v543 = vunpack.c.l.b16 %v274
      %v544 = vunpack.c.l.b16 %v275
      %v545 = vunpack.c.l.b16 %v276
      %v546 = vunpack.c.l.b16 %v277
      %v547 = vunpack.c.l.b16 %v278
      %v548 = vunpack.c.l.b16 %v279
      %v549 = vunpack.c.l.b16 %v280
      %v550 = vunpack.c.l.b16 %v281
      %v551 = vunpack.c.l.b16 %v282
      %v552 = vunpack.c.l.b16 %v283
      %v553 = vunpack.c.l.b16 %v284
      %v554 = vunpack.c.l.b16 %v285
      %v555 = vunpack.c.l.b16 %v286
      %v556 = vunpack.c.l.b16 %v287
      %v557 = vunpack.c.l.b16 %v288
      %v558 = vunpack.c.l.b16 %v289
      %v559 = vunpack.c.l.b16 %v290
      %v560 = vunpack.c.l.b16 %v291
      %v561 = vunpack.c.l.b16 %v292
      %v562 = vunpack.c.l.b16 %v293
      %v563 = vunpack.c.l.b16 %v294
      %v564 = vunpack.c.l.b16 %v295
      %v565 = vunpack.c.l.b16 %v296
      %v566 = vunpack.c.l.b16 %v297
      %v567 = vunpack.c.l.b16 %v298
      %v568 = vunpack.c.l.b16 %v299
      %v569 = vunpack.c.l.b16 %v300
      %v570 = vunpack.c.l.b16 %v301
      %v571 = vunpack.c.l.b16 %v302
      %v572 = vpack.c.b16 %v445, %v444
      %v573 = vpack.c.b16 %v447, %v446
      %v574 = vpack.c.b16 %v449, %v448
      %v575 = vpack.c.b16 %v451, %v450
      %v576 = vpack.c.b16 %v453, %v452
      %v577 = vpack.c.b16 %v455, %v454
      %v578 = vpack.c.b16 %v457, %v456
      %v579 = vpack.c.b16 %v459, %v458
      %v580 = vpack.c.b16 %v461, %v460
      %v581 = vpack.c.b16 %v463, %v462
      %v582 = vpack.c.b16 %v465, %v464
      %v583 = vpack.c.b16 %v467, %v466
      %v584 = vpack.c.b16 %v469, %v468
      %v585 = vpack.c.b16 %v471, %v470
      %v586 = vpack.c.b16 %v473, %v472
      %v587 = vpack.c.b16 %v475, %v474
      %v588 = vpack.c.b16 %v477, %v476
      %v589 = vpack.c.b16 %v479, %v478
      %v590 = vpack.c.b16 %v481, %v480
      %v591 = vpack.c.b16 %v483, %v482
      %v592 = vpack.c.b16 %v485, %v484
      %v593 = vpack.c.b16 %v487, %v486
      %v594 = vpack.c.b16 %v489, %v488
      %v595 = vpack.c.b16 %v491, %v490
      %v596 = vpack.c.b16 %v493, %v492
      %v597 = vpack.c.b16 %v495, %v494
      %v598 = vpack.c.b16 %v497, %v496
      %v599 = vpack.c.b16 %v499, %v498
      %v600 = vpack.c.b16 %v501, %v500
      %v601 = vpack.c.b16 %v503, %v502
      %v602 = vpack.c.b16 %v505, %v504
      %v603 = vpack.c.b16 %v507, %v506
      %v604 = vpack.c.b16 %v509, %v508
      %v605 = vpack.c.b16 %v511, %v510
      %v606 = vpack.c.b16 %v513, %v512
      %v607 = vpack.c.b16 %v515, %v514
      %v608 = vpack.c.b16 %v517, %v516
      %v609 = vpack.c.b16 %v519, %v518
      %v610 = vpack.c.b16 %v521, %v520
      %v611 = vpack.c.b16 %v523, %v522
      %v612 = vpack.c.b16 %v525, %v524
      %v613 = vpack.c.b16 %v527, %v526
      %v614 = vpack.c.b16 %v529, %v528
      %v615 = vpack.c.b16 %v531, %v530
      %v616 = vpack.c.b16 %v533, %v532
      %v617 = vpack.c.b16 %v535, %v534
      %v618 = vpack.c.b16 %v537, %v536
      %v619 = vpack.c.b16 %v539, %v538
      %v620 = vpack.c.b16 %v541, %v540
      %v621 = vpack.c.b16 %v543, %v542
      %v622 = vpack.c.b16 %v545, %v544
      %v623 = vpack.c.b16 %v547, %v546
      %v624 = vpack.c.b16 %v549, %v548
      %v625 = vpack.c.b16 %v551, %v550
      %v626 = vpack.c.b16 %v553, %v552
      %v627 = vpack.c.b16 %v555, %v554
      %v628 = vpack.c.b16 %v557, %v556
      %v629 = vpack.c.b16 %v559, %v558
      %v630 = vpack.c.b16 %v561, %v560
      %v631 = vpack.c.b16 %v563, %v562
      %v632 = vpack.c.b16 %v565, %v564
      %v633 = vpack.c.b16 %v567, %v566
      %v634 = vpack.c.b16 %v569, %v568
      %v635 = vpack.c.b16 %v571, %v570
      %v642 = vunpack.c.l.b16 %v303
      %v643 = vunpack.c.l.b16 %v304
      %v644 = vunpack.c.l.b16 %v305
      %v645 = vunpack.c.l.b16 %v306
      %v646 = vunpack.c.l.b16 %v307
      %v647 = vunpack.c.l.b16 %v308
      %v648 = vpack.c.b16 %v643, %v642
      %v649 = vpack.c.b16 %v645, %v644
      %v650 = vpack.c.b16 %v647, %v646
      %vm654 = vcmask 392192
      %v656 = vsel %vm654, %v572, 0
      %v659 = vsel %vm654, %v573, 0
      %v662 = vsel %vm654, %v574, 0
      %v665 = vsel %vm654, %v575, 0
      %v668 = vsel %vm654, %v576, 0
      %v671 = vsel %vm654, %v577, 0
      %v674 = vsel %vm654, %v578, 0
      %v677 = vsel %vm654, %v579, 0
      %v680 = vsel %vm654, %v580, 0
      %v683 = vsel %vm654, %v581, 0
      %v686 = vsel %vm654, %v582, 0
      %v689 = vsel %vm654, %v583, 0
      %v692 = vsel %vm654, %v584, 0
      %v695 = vsel %vm654, %v585, 0
      %v698 = vsel %vm654, %v586, 0
      %v701 = vsel %vm654, %v587, 0
      %v704 = vsel %vm654, %v588, 0
      %v707 = vsel %vm654, %v589, 0
      %v710 = vsel %vm654, %v590, 0
      %v713 = vsel %vm654, %v591, 0
      %v716 = vsel %vm654, %v592, 0
      %v719 = vsel %vm654, %v593, 0
      %v722 = vsel %vm654, %v594, 0
      %v725 = vsel %vm654, %v595, 0
      %v728 = vsel %vm654, %v596, 0
      %v731 = vsel %vm654, %v597, 0
      %v734 = vsel %vm654, %v598, 0
      %v737 = vsel %vm654, %v599, 0
      %v740 = vsel %vm654, %v600, 0
      %v743 = vsel %vm654, %v601, 0
      %v746 = vsel %vm654, %v602, 0
      %v749 = vsel %vm654, %v603, 0
      %v752 = vsel %vm654, %v604, 0
      %v755 = vsel %vm654, %v605, 0
      %v758 = vsel %vm654, %v606, 0
      %v761 = vsel %vm654, %v607, 0
      %v764 = vsel %vm654, %v608, 0
      %v767 = vsel %vm654, %v609, 0
      %v770 = vsel %vm654, %v610, 0
      %v773 = vsel %vm654, %v611, 0
      %v776 = vsel %vm654, %v612, 0
      %v779 = vsel %vm654, %v613, 0
      %v782 = vsel %vm654, %v614, 0
      %v785 = vsel %vm654, %v615, 0
      %v788 = vsel %vm654, %v616, 0
      %v791 = vsel %vm654, %v617, 0
      %v794 = vsel %vm654, %v618, 0
      %v797 = vsel %vm654, %v619, 0
      %v800 = vsel %vm654, %v620, 0
      %v803 = vsel %vm654, %v621, 0
      %v806 = vsel %vm654, %v622, 0
      %v809 = vsel %vm654, %v623, 0
      %v812 = vsel %vm654, %v624, 0
      %v815 = vsel %vm654, %v625, 0
      %v818 = vsel %vm654, %v626, 0
      %v821 = vsel %vm654, %v627, 0
      %v824 = vsel %vm654, %v628, 0
      %v827 = vsel %vm654, %v629, 0
      %v830 = vsel %vm654, %v630, 0
      %v833 = vsel %vm654, %v631, 0
      %v836 = vsel %vm654, %v632, 0
      %v839 = vsel %vm654, %v633, 0
      %v842 = vsel %vm654, %v634, 0
      %v845 = vsel %vm654, %v635, 0
      %847 = vmatprep.subr.bf16.mxu0 0
      %848 = vmatpush1.bf16.msra.mxu0 %v648
      %849 = vmatprep.subr.bf16.mxu0 0
      %850 = vmatpush1.bf16.msra.mxu0 %v649
      %851 = vmatprep.subr.bf16.mxu0 0
      %852 = vmatpush1.bf16.msra.mxu0 %v650
      %853 = vmatprep.subr.bf16.mxu0 0
      %854 = vmatpush1.bf16.msra.mxu0 0
      %855 = vmatprep.subr.bf16.mxu0 0
      %856 = vmatpush1.bf16.msra.mxu0 0
      %857 = vmatprep.subr.bf16.mxu0 0
      %858 = vmatpush1.bf16.msra.mxu0 0
      %859 = vmatprep.subr.bf16.mxu0 0
      %860 = vmatpush1.bf16.msra.mxu0 0
      %861 = vmatprep.subr.bf16.mxu0 0
      %862 = vmatpush1.bf16.msra.mxu0 0
      %863 = vmatprep.subr.bf16.mxu0 0
      %864 = vmatpush1.bf16.msra.mxu0 0
      %865 = vmatprep.subr.bf16.mxu0 0
      %866 = vmatpush1.bf16.msra.mxu0 0
      %867 = vmatprep.subr.bf16.mxu0 0
      %868 = vmatpush1.bf16.msra.mxu0 0
      %869 = vmatprep.subr.bf16.mxu0 0
      %870 = vmatpush1.bf16.msra.mxu0 0
      %871 = vmatprep.subr.bf16.mxu0 0
      %872 = vmatpush1.bf16.msra.mxu0 0
      %873 = vmatprep.subr.bf16.mxu0 0
      %874 = vmatpush1.bf16.msra.mxu0 0
      %875 = vmatprep.subr.bf16.mxu0 0
      %876 = vmatpush1.bf16.msra.mxu0 0
      %877 = vmatprep.subr.bf16.mxu0 0
      %878 = vmatpush1.bf16.msra.mxu0 0
      %879 = vmatprep.mubr.bf16.mxu0 0
      %880 = vmatmul.mubr.bf16.gmra.mrb[0].mxu0 %v656
      %v881 = vpop.f32.mrb[0].mxu0
      %v882 = vadd.f32 %v314, %v881
      %v883 = vpop.f32.mrb[0].mxu0
      %v884 = vpop.f32.mrb[0].mxu0
      %v885 = vadd.f32 %v314, %v884
      %v886 = vpop.f32.mrb[0].mxu0
      %887 = vmatprep.mubr.bf16.mxu0 0
      %888 = vmatmul.mubr.bf16.gmra.mrb[0].mxu0 %v659
      %v889 = vpop.f32.mrb[0].mxu0
      %v890 = vadd.f32 %v314, %v889
      %v891 = vpop.f32.mrb[0].mxu0
      %v892 = vpop.f32.mrb[0].mxu0
      %v893 = vadd.f32 %v314, %v892
      %v894 = vpop.f32.mrb[0].mxu0
      %895 = vmatprep.mubr.bf16.mxu0 0
      %896 = vmatmul.mubr.bf16.gmra.mrb[0].mxu0 %v662
      %v897 = vpop.f32.mrb[0].mxu0
      %v898 = vadd.f32 %v314, %v897
      %v899 = vpop.f32.mrb[0].mxu0
      %v900 = vpop.f32.mrb[0].mxu0
      %v901 = vadd.f32 %v314, %v900
      %v902 = vpop.f32.mrb[0].mxu0
      %903 = vmatprep.mubr.bf16.mxu0 0
      %904 = vmatmul.mubr.bf16.gmra.mrb[0].mxu0 %v665
      %v905 = vpop.f32.mrb[0].mxu0
      %v906 = vadd.f32 %v314, %v905
      %v907 = vpop.f32.mrb[0].mxu0
      %v908 = vpop.f32.mrb[0].mxu0
      %v909 = vadd.f32 %v314, %v908
      %v910 = vpop.f32.mrb[0].mxu0
      %911 = vmatprep.mubr.bf16.mxu0 0
      %912 = vmatmul.mubr.bf16.gmra.mrb[0].mxu0 %v668
      %v913 = vpop.f32.mrb[0].mxu0
      %v914 = vadd.f32 %v314, %v913
      %v915 = vpop.f32.mrb[0].mxu0
      %v916 = vpop.f32.mrb[0].mxu0
      %v917 = vadd.f32 %v314, %v916
      %v918 = vpop.f32.mrb[0].mxu0
      %919 = vmatprep.mubr.bf16.mxu0 0
      %920 = vmatmul.mubr.bf16.gmra.mrb[0].mxu0 %v671
      %v921 = vpop.f32.mrb[0].mxu0
      %v922 = vadd.f32 %v314, %v921
      %v923 = vpop.f32.mrb[0].mxu0
      %v924 = vpop.f32.mrb[0].mxu0
      %v925 = vadd.f32 %v314, %v924
      %v926 = vpop.f32.mrb[0].mxu0
      %927 = vmatprep.mubr.bf16.mxu0 0
      %928 = vmatmul.mubr.bf16.gmra.mrb[0].mxu0 %v674
      %v929 = vpop.f32.mrb[0].mxu0
      %v930 = vadd.f32 %v314, %v929
      %v931 = vpop.f32.mrb[0].mxu0
      %v932 = vpop.f32.mrb[0].mxu0
      %v933 = vadd.f32 %v314, %v932
      %v934 = vpop.f32.mrb[0].mxu0
      %935 = vmatprep.mubr.bf16.mxu0 0
      %936 = vmatmul.mubr.bf16.gmra.mrb[0].mxu0 %v677
      %v937 = vpop.f32.mrb[0].mxu0
      %v938 = vadd.f32 %v314, %v937
      %v939 = vpop.f32.mrb[0].mxu0
      %v940 = vpop.f32.mrb[0].mxu0
      %v941 = vadd.f32 %v314, %v940
      %v942 = vpop.f32.mrb[0].mxu0
      %943 = vmatprep.mubr.bf16.mxu0 0
      %944 = vmatmul.mubr.bf16.gmra.mrb[0].mxu0 %v680
      %v945 = vpop.f32.mrb[0].mxu0
      %v946 = vadd.f32 %v314, %v945
      %v947 = vpop.f32.mrb[0].mxu0
      %v948 = vpop.f32.mrb[0].mxu0
      %v949 = vadd.f32 %v314, %v948
      %v950 = vpop.f32.mrb[0].mxu0
      %951 = vmatprep.mubr.bf16.mxu0 0
      %952 = vmatmul.mubr.bf16.gmra.mrb[0].mxu0 %v683
      %v953 = vpop.f32.mrb[0].mxu0
      %v954 = vadd.f32 %v314, %v953
      %v955 = vpop.f32.mrb[0].mxu0
      %v956 = vpop.f32.mrb[0].mxu0
      %v957 = vadd.f32 %v314, %v956
      %v958 = vpop.f32.mrb[0].mxu0
      %959 = vmatprep.mubr.bf16.mxu0 0
      %960 = vmatmul.mubr.bf16.gmra.mrb[0].mxu0 %v686
      %v961 = vpop.f32.mrb[0].mxu0
      %v962 = vadd.f32 %v314, %v961
      %v963 = vpop.f32.mrb[0].mxu0
      %v964 = vpop.f32.mrb[0].mxu0
      %v965 = vadd.f32 %v314, %v964
      %v966 = vpop.f32.mrb[0].mxu0
      %967 = vmatprep.mubr.bf16.mxu0 0
      %968 = vmatmul.mubr.bf16.gmra.mrb[0].mxu0 %v689
      %v969 = vpop.f32.mrb[0].mxu0
      %v970 = vadd.f32 %v314, %v969
      %v971 = vpop.f32.mrb[0].mxu0
      %v972 = vpop.f32.mrb[0].mxu0
      %v973 = vadd.f32 %v314, %v972
      %v974 = vpop.f32.mrb[0].mxu0
      %975 = vmatprep.mubr.bf16.mxu0 0
      %976 = vmatmul.mubr.bf16.gmra.mrb[0].mxu0 %v692
      %v977 = vpop.f32.mrb[0].mxu0
      %v978 = vadd.f32 %v314, %v977
      %v979 = vpop.f32.mrb[0].mxu0
      %v980 = vpop.f32.mrb[0].mxu0
      %v981 = vadd.f32 %v314, %v980
      %v982 = vpop.f32.mrb[0].mxu0
      %983 = vmatprep.mubr.bf16.mxu0 0
      %984 = vmatmul.mubr.bf16.gmra.mrb[0].mxu0 %v695
      %v985 = vpop.f32.mrb[0].mxu0
      %v986 = vadd.f32 %v314, %v985
      %v987 = vpop.f32.mrb[0].mxu0
      %v988 = vpop.f32.mrb[0].mxu0
      %v989 = vadd.f32 %v314, %v988
      %v990 = vpop.f32.mrb[0].mxu0
      %991 = vmatprep.mubr.bf16.mxu0 0
      %992 = vmatmul.mubr.bf16.gmra.mrb[0].mxu0 %v698
      %v993 = vpop.f32.mrb[0].mxu0
      %v994 = vadd.f32 %v314, %v993
      %v995 = vpop.f32.mrb[0].mxu0
      %v996 = vpop.f32.mrb[0].mxu0
      %v997 = vadd.f32 %v314, %v996
      %v998 = vpop.f32.mrb[0].mxu0
      %999 = vmatprep.mubr.bf16.mxu0 0
      %1000 = vmatmul.mubr.bf16.gmra.mrb[0].mxu0 %v701
      %v1001 = vpop.f32.mrb[0].mxu0
      %v1002 = vadd.f32 %v314, %v1001
      %v1003 = vpop.f32.mrb[0].mxu0
      %v1004 = vpop.f32.mrb[0].mxu0
      %v1005 = vadd.f32 %v314, %v1004
      %v1006 = vpop.f32.mrb[0].mxu0
      %1007 = vmatprep.mubr.bf16.mxu0 0
      %1008 = vmatmul.mubr.bf16.gmra.mrb[0].mxu0 %v704
      %v1009 = vpop.f32.mrb[0].mxu0
      %v1010 = vadd.f32 %v314, %v1009
      %v1011 = vpop.f32.mrb[0].mxu0
      %v1012 = vpop.f32.mrb[0].mxu0
      %v1013 = vadd.f32 %v314, %v1012
      %v1014 = vpop.f32.mrb[0].mxu0
      %1015 = vmatprep.mubr.bf16.mxu0 0
      %1016 = vmatmul.mubr.bf16.gmra.mrb[0].mxu0 %v707
      %v1017 = vpop.f32.mrb[0].mxu0
      %v1018 = vadd.f32 %v314, %v1017
      %v1019 = vpop.f32.mrb[0].mxu0
      %v1020 = vpop.f32.mrb[0].mxu0
      %v1021 = vadd.f32 %v314, %v1020
      %v1022 = vpop.f32.mrb[0].mxu0
      %1023 = vmatprep.mubr.bf16.mxu0 0
      %1024 = vmatmul.mubr.bf16.gmra.mrb[0].mxu0 %v710
      %v1025 = vpop.f32.mrb[0].mxu0
      %v1026 = vadd.f32 %v314, %v1025
      %v1027 = vpop.f32.mrb[0].mxu0
      %v1028 = vpop.f32.mrb[0].mxu0
      %v1029 = vadd.f32 %v314, %v1028
      %v1030 = vpop.f32.mrb[0].mxu0
      %1031 = vmatprep.mubr.bf16.mxu0 0
      %1032 = vmatmul.mubr.bf16.gmra.mrb[0].mxu0 %v713
      %v1033 = vpop.f32.mrb[0].mxu0
      %v1034 = vadd.f32 %v314, %v1033
      %v1035 = vpop.f32.mrb[0].mxu0
      %v1036 = vpop.f32.mrb[0].mxu0
      %v1037 = vadd.f32 %v314, %v1036
      %v1038 = vpop.f32.mrb[0].mxu0
      %1039 = vmatprep.mubr.bf16.mxu0 0
      %1040 = vmatmul.mubr.bf16.gmra.mrb[0].mxu0 %v716
      %v1041 = vpop.f32.mrb[0].mxu0
      %v1042 = vadd.f32 %v314, %v1041
      %v1043 = vpop.f32.mrb[0].mxu0
      %v1044 = vpop.f32.mrb[0].mxu0
      %v1045 = vadd.f32 %v314, %v1044
      %v1046 = vpop.f32.mrb[0].mxu0
      %1047 = vmatprep.mubr.bf16.mxu0 0
      %1048 = vmatmul.mubr.bf16.gmra.mrb[0].mxu0 %v719
      %v1049 = vpop.f32.mrb[0].mxu0
      %v1050 = vadd.f32 %v314, %v1049
      %v1051 = vpop.f32.mrb[0].mxu0
      %v1052 = vpop.f32.mrb[0].mxu0
      %v1053 = vadd.f32 %v314, %v1052
      %v1054 = vpop.f32.mrb[0].mxu0
      %1055 = vmatprep.mubr.bf16.mxu0 0
      %1056 = vmatmul.mubr.bf16.gmra.mrb[0].mxu0 %v722
      %v1057 = vpop.f32.mrb[0].mxu0
      %v1058 = vadd.f32 %v314, %v1057
      %v1059 = vpop.f32.mrb[0].mxu0
      %v1060 = vpop.f32.mrb[0].mxu0
      %v1061 = vadd.f32 %v314, %v1060
      %v1062 = vpop.f32.mrb[0].mxu0
      %1063 = vmatprep.mubr.bf16.mxu0 0
      %1064 = vmatmul.mubr.bf16.gmra.mrb[0].mxu0 %v725
      %v1065 = vpop.f32.mrb[0].mxu0
      %v1066 = vadd.f32 %v314, %v1065
      %v1067 = vpop.f32.mrb[0].mxu0
      %v1068 = vpop.f32.mrb[0].mxu0
      %v1069 = vadd.f32 %v314, %v1068
      %v1070 = vpop.f32.mrb[0].mxu0
      %1071 = vmatprep.mubr.bf16.mxu0 0
      %1072 = vmatmul.mubr.bf16.gmra.mrb[0].mxu0 %v728
      %v1073 = vpop.f32.mrb[0].mxu0
      %v1074 = vadd.f32 %v314, %v1073
      %v1075 = vpop.f32.mrb[0].mxu0
      %v1076 = vpop.f32.mrb[0].mxu0
      %v1077 = vadd.f32 %v314, %v1076
      %v1078 = vpop.f32.mrb[0].mxu0
      %1079 = vmatprep.mubr.bf16.mxu0 0
      %1080 = vmatmul.mubr.bf16.gmra.mrb[0].mxu0 %v731
      %v1081 = vpop.f32.mrb[0].mxu0
      %v1082 = vadd.f32 %v314, %v1081
      %v1083 = vpop.f32.mrb[0].mxu0
      %v1084 = vpop.f32.mrb[0].mxu0
      %v1085 = vadd.f32 %v314, %v1084
      %v1086 = vpop.f32.mrb[0].mxu0
      %1087 = vmatprep.mubr.bf16.mxu0 0
      %1088 = vmatmul.mubr.bf16.gmra.mrb[0].mxu0 %v734
      %v1089 = vpop.f32.mrb[0].mxu0
      %v1090 = vadd.f32 %v314, %v1089
      %v1091 = vpop.f32.mrb[0].mxu0
      %v1092 = vpop.f32.mrb[0].mxu0
      %v1093 = vadd.f32 %v314, %v1092
      %v1094 = vpop.f32.mrb[0].mxu0
      %1095 = vmatprep.mubr.bf16.mxu0 0
      %1096 = vmatmul.mubr.bf16.gmra.mrb[0].mxu0 %v737
      %v1097 = vpop.f32.mrb[0].mxu0
      %v1098 = vadd.f32 %v314, %v1097
      %v1099 = vpop.f32.mrb[0].mxu0
      %v1100 = vpop.f32.mrb[0].mxu0
      %v1101 = vadd.f32 %v314, %v1100
      %v1102 = vpop.f32.mrb[0].mxu0
      %1103 = vmatprep.mubr.bf16.mxu0 0
      %1104 = vmatmul.mubr.bf16.gmra.mrb[0].mxu0 %v740
      %v1105 = vpop.f32.mrb[0].mxu0
      %v1106 = vadd.f32 %v314, %v1105
      %v1107 = vpop.f32.mrb[0].mxu0
      %v1108 = vpop.f32.mrb[0].mxu0
      %v1109 = vadd.f32 %v314, %v1108
      %v1110 = vpop.f32.mrb[0].mxu0
      %1111 = vmatprep.mubr.bf16.mxu0 0
      %1112 = vmatmul.mubr.bf16.gmra.mrb[0].mxu0 %v743
      %v1113 = vpop.f32.mrb[0].mxu0
      %v1114 = vadd.f32 %v314, %v1113
      %v1115 = vpop.f32.mrb[0].mxu0
      %v1116 = vpop.f32.mrb[0].mxu0
      %v1117 = vadd.f32 %v314, %v1116
      %v1118 = vpop.f32.mrb[0].mxu0
      %1119 = vmatprep.mubr.bf16.mxu0 0
      %1120 = vmatmul.mubr.bf16.gmra.mrb[0].mxu0 %v746
      %v1121 = vpop.f32.mrb[0].mxu0
      %v1122 = vadd.f32 %v314, %v1121
      %v1123 = vpop.f32.mrb[0].mxu0
      %v1124 = vpop.f32.mrb[0].mxu0
      %v1125 = vadd.f32 %v314, %v1124
      %v1126 = vpop.f32.mrb[0].mxu0
      %1127 = vmatprep.mubr.bf16.mxu0 0
      %1128 = vmatmul.mubr.bf16.gmra.mrb[0].mxu0 %v749
      %v1129 = vpop.f32.mrb[0].mxu0
      %v1130 = vadd.f32 %v314, %v1129
      %v1131 = vpop.f32.mrb[0].mxu0
      %v1132 = vpop.f32.mrb[0].mxu0
      %v1133 = vadd.f32 %v314, %v1132
      %v1134 = vpop.f32.mrb[0].mxu0
      %1135 = vmatprep.mubr.bf16.mxu0 0
      %1136 = vmatmul.mubr.bf16.gmra.mrb[0].mxu0 %v752
      %v1137 = vpop.f32.mrb[0].mxu0
      %v1138 = vadd.f32 %v314, %v1137
      %v1139 = vpop.f32.mrb[0].mxu0
      %v1140 = vpop.f32.mrb[0].mxu0
      %v1141 = vadd.f32 %v314, %v1140
      %v1142 = vpop.f32.mrb[0].mxu0
      %1143 = vmatprep.mubr.bf16.mxu0 0
      %1144 = vmatmul.mubr.bf16.gmra.mrb[0].mxu0 %v755
      %v1145 = vpop.f32.mrb[0].mxu0
      %v1146 = vadd.f32 %v314, %v1145
      %v1147 = vpop.f32.mrb[0].mxu0
      %v1148 = vpop.f32.mrb[0].mxu0
      %v1149 = vadd.f32 %v314, %v1148
      %v1150 = vpop.f32.mrb[0].mxu0
      %1151 = vmatprep.mubr.bf16.mxu0 0
      %1152 = vmatmul.mubr.bf16.gmra.mrb[0].mxu0 %v758
      %v1153 = vpop.f32.mrb[0].mxu0
      %v1154 = vadd.f32 %v314, %v1153
      %v1155 = vpop.f32.mrb[0].mxu0
      %v1156 = vpop.f32.mrb[0].mxu0
      %v1157 = vadd.f32 %v314, %v1156
      %v1158 = vpop.f32.mrb[0].mxu0
      %1159 = vmatprep.mubr.bf16.mxu0 0
      %1160 = vmatmul.mubr.bf16.gmra.mrb[0].mxu0 %v761
      %v1161 = vpop.f32.mrb[0].mxu0
      %v1162 = vadd.f32 %v314, %v1161
      %v1163 = vpop.f32.mrb[0].mxu0
      %v1164 = vpop.f32.mrb[0].mxu0
      %v1165 = vadd.f32 %v314, %v1164
      %v1166 = vpop.f32.mrb[0].mxu0
      %1167 = vmatprep.mubr.bf16.mxu0 0
      %1168 = vmatmul.mubr.bf16.gmra.mrb[0].mxu0 %v764
      %v1169 = vpop.f32.mrb[0].mxu0
      %v1170 = vadd.f32 %v314, %v1169
      %v1171 = vpop.f32.mrb[0].mxu0
      %v1172 = vpop.f32.mrb[0].mxu0
      %v1173 = vadd.f32 %v314, %v1172
      %v1174 = vpop.f32.mrb[0].mxu0
      %1175 = vmatprep.mubr.bf16.mxu0 0
      %1176 = vmatmul.mubr.bf16.gmra.mrb[0].mxu0 %v767
      %v1177 = vpop.f32.mrb[0].mxu0
      %v1178 = vadd.f32 %v314, %v1177
      %v1179 = vpop.f32.mrb[0].mxu0
      %v1180 = vpop.f32.mrb[0].mxu0
      %v1181 = vadd.f32 %v314, %v1180
      %v1182 = vpop.f32.mrb[0].mxu0
      %1183 = vmatprep.mubr.bf16.mxu0 0
      %1184 = vmatmul.mubr.bf16.gmra.mrb[0].mxu0 %v770
      %v1185 = vpop.f32.mrb[0].mxu0
      %v1186 = vadd.f32 %v314, %v1185
      %v1187 = vpop.f32.mrb[0].mxu0
      %v1188 = vpop.f32.mrb[0].mxu0
      %v1189 = vadd.f32 %v314, %v1188
      %v1190 = vpop.f32.mrb[0].mxu0
      %1191 = vmatprep.mubr.bf16.mxu0 0
      %1192 = vmatmul.mubr.bf16.gmra.mrb[0].mxu0 %v773
      %v1193 = vpop.f32.mrb[0].mxu0
      %v1194 = vadd.f32 %v314, %v1193
      %v1195 = vpop.f32.mrb[0].mxu0
      %v1196 = vpop.f32.mrb[0].mxu0
      %v1197 = vadd.f32 %v314, %v1196
      %v1198 = vpop.f32.mrb[0].mxu0
      %1199 = vmatprep.mubr.bf16.mxu0 0
      %1200 = vmatmul.mubr.bf16.gmra.mrb[0].mxu0 %v776
      %v1201 = vpop.f32.mrb[0].mxu0
      %v1202 = vadd.f32 %v314, %v1201
      %v1203 = vpop.f32.mrb[0].mxu0
      %v1204 = vpop.f32.mrb[0].mxu0
      %v1205 = vadd.f32 %v314, %v1204
      %v1206 = vpop.f32.mrb[0].mxu0
      %1207 = vmatprep.mubr.bf16.mxu0 0
      %1208 = vmatmul.mubr.bf16.gmra.mrb[0].mxu0 %v779
      %v1209 = vpop.f32.mrb[0].mxu0
      %v1210 = vadd.f32 %v314, %v1209
      %v1211 = vpop.f32.mrb[0].mxu0
      %v1212 = vpop.f32.mrb[0].mxu0
      %v1213 = vadd.f32 %v314, %v1212
      %v1214 = vpop.f32.mrb[0].mxu0
      %1215 = vmatprep.mubr.bf16.mxu0 0
      %1216 = vmatmul.mubr.bf16.gmra.mrb[0].mxu0 %v782
      %v1217 = vpop.f32.mrb[0].mxu0
      %v1218 = vadd.f32 %v314, %v1217
      %v1219 = vpop.f32.mrb[0].mxu0
      %v1220 = vpop.f32.mrb[0].mxu0
      %v1221 = vadd.f32 %v314, %v1220
      %v1222 = vpop.f32.mrb[0].mxu0
      %1223 = vmatprep.mubr.bf16.mxu0 0
      %1224 = vmatmul.mubr.bf16.gmra.mrb[0].mxu0 %v785
      %v1225 = vpop.f32.mrb[0].mxu0
      %v1226 = vadd.f32 %v314, %v1225
      %v1227 = vpop.f32.mrb[0].mxu0
      %v1228 = vpop.f32.mrb[0].mxu0
      %v1229 = vadd.f32 %v314, %v1228
      %v1230 = vpop.f32.mrb[0].mxu0
      %1231 = vmatprep.mubr.bf16.mxu0 0
      %1232 = vmatmul.mubr.bf16.gmra.mrb[0].mxu0 %v788
      %v1233 = vpop.f32.mrb[0].mxu0
      %v1234 = vadd.f32 %v314, %v1233
      %v1235 = vpop.f32.mrb[0].mxu0
      %v1236 = vpop.f32.mrb[0].mxu0
      %v1237 = vadd.f32 %v314, %v1236
      %v1238 = vpop.f32.mrb[0].mxu0
      %1239 = vmatprep.mubr.bf16.mxu0 0
      %1240 = vmatmul.mubr.bf16.gmra.mrb[0].mxu0 %v791
      %v1241 = vpop.f32.mrb[0].mxu0
      %v1242 = vadd.f32 %v314, %v1241
      %v1243 = vpop.f32.mrb[0].mxu0
      %v1244 = vpop.f32.mrb[0].mxu0
      %v1245 = vadd.f32 %v314, %v1244
      %v1246 = vpop.f32.mrb[0].mxu0
      %1247 = vmatprep.mubr.bf16.mxu0 0
      %1248 = vmatmul.mubr.bf16.gmra.mrb[0].mxu0 %v794
      %v1249 = vpop.f32.mrb[0].mxu0
      %v1250 = vadd.f32 %v314, %v1249
      %v1251 = vpop.f32.mrb[0].mxu0
      %v1252 = vpop.f32.mrb[0].mxu0
      %v1253 = vadd.f32 %v314, %v1252
      %v1254 = vpop.f32.mrb[0].mxu0
      %1255 = vmatprep.mubr.bf16.mxu0 0
      %1256 = vmatmul.mubr.bf16.gmra.mrb[0].mxu0 %v797
      %v1257 = vpop.f32.mrb[0].mxu0
      %v1258 = vadd.f32 %v314, %v1257
      %v1259 = vpop.f32.mrb[0].mxu0
      %v1260 = vpop.f32.mrb[0].mxu0
      %v1261 = vadd.f32 %v314, %v1260
      %v1262 = vpop.f32.mrb[0].mxu0
      %1263 = vmatprep.mubr.bf16.mxu0 0
      %1264 = vmatmul.mubr.bf16.gmra.mrb[0].mxu0 %v800
      %v1265 = vpop.f32.mrb[0].mxu0
      %v1266 = vadd.f32 %v314, %v1265
      %v1267 = vpop.f32.mrb[0].mxu0
      %v1268 = vpop.f32.mrb[0].mxu0
      %v1269 = vadd.f32 %v314, %v1268
      %v1270 = vpop.f32.mrb[0].mxu0
      %1271 = vmatprep.mubr.bf16.mxu0 0
      %1272 = vmatmul.mubr.bf16.gmra.mrb[0].mxu0 %v803
      %v1273 = vpop.f32.mrb[0].mxu0
      %v1274 = vadd.f32 %v314, %v1273
      %v1275 = vpop.f32.mrb[0].mxu0
      %v1276 = vpop.f32.mrb[0].mxu0
      %v1277 = vadd.f32 %v314, %v1276
      %v1278 = vpop.f32.mrb[0].mxu0
      %1279 = vmatprep.mubr.bf16.mxu0 0
      %1280 = vmatmul.mubr.bf16.gmra.mrb[0].mxu0 %v806
      %v1281 = vpop.f32.mrb[0].mxu0
      %v1282 = vadd.f32 %v314, %v1281
      %v1283 = vpop.f32.mrb[0].mxu0
      %v1284 = vpop.f32.mrb[0].mxu0
      %v1285 = vadd.f32 %v314, %v1284
      %v1286 = vpop.f32.mrb[0].mxu0
      %1287 = vmatprep.mubr.bf16.mxu0 0
      %1288 = vmatmul.mubr.bf16.gmra.mrb[0].mxu0 %v809
      %v1289 = vpop.f32.mrb[0].mxu0
      %v1290 = vadd.f32 %v314, %v1289
      %v1291 = vpop.f32.mrb[0].mxu0
      %v1292 = vpop.f32.mrb[0].mxu0
      %v1293 = vadd.f32 %v314, %v1292
      %v1294 = vpop.f32.mrb[0].mxu0
      %1295 = vmatprep.mubr.bf16.mxu0 0
      %1296 = vmatmul.mubr.bf16.gmra.mrb[0].mxu0 %v812
      %v1297 = vpop.f32.mrb[0].mxu0
      %v1298 = vadd.f32 %v314, %v1297
      %v1299 = vpop.f32.mrb[0].mxu0
      %v1300 = vpop.f32.mrb[0].mxu0
      %v1301 = vadd.f32 %v314, %v1300
      %v1302 = vpop.f32.mrb[0].mxu0
      %1303 = vmatprep.mubr.bf16.mxu0 0
      %1304 = vmatmul.mubr.bf16.gmra.mrb[0].mxu0 %v815
      %v1305 = vpop.f32.mrb[0].mxu0
      %v1306 = vadd.f32 %v314, %v1305
      %v1307 = vpop.f32.mrb[0].mxu0
      %v1308 = vpop.f32.mrb[0].mxu0
      %v1309 = vadd.f32 %v314, %v1308
      %v1310 = vpop.f32.mrb[0].mxu0
      %1311 = vmatprep.mubr.bf16.mxu0 0
      %1312 = vmatmul.mubr.bf16.gmra.mrb[0].mxu0 %v818
      %v1313 = vpop.f32.mrb[0].mxu0
      %v1314 = vadd.f32 %v314, %v1313
      %v1315 = vpop.f32.mrb[0].mxu0
      %v1316 = vpop.f32.mrb[0].mxu0
      %v1317 = vadd.f32 %v314, %v1316
      %v1318 = vpop.f32.mrb[0].mxu0
      %1319 = vmatprep.mubr.bf16.mxu0 0
      %1320 = vmatmul.mubr.bf16.gmra.mrb[0].mxu0 %v821
      %v1321 = vpop.f32.mrb[0].mxu0
      %v1322 = vadd.f32 %v314, %v1321
      %v1323 = vpop.f32.mrb[0].mxu0
      %v1324 = vpop.f32.mrb[0].mxu0
      %v1325 = vadd.f32 %v314, %v1324
      %v1326 = vpop.f32.mrb[0].mxu0
      %1327 = vmatprep.mubr.bf16.mxu0 0
      %1328 = vmatmul.mubr.bf16.gmra.mrb[0].mxu0 %v824
      %v1329 = vpop.f32.mrb[0].mxu0
      %v1330 = vadd.f32 %v314, %v1329
      %v1331 = vpop.f32.mrb[0].mxu0
      %v1332 = vpop.f32.mrb[0].mxu0
      %v1333 = vadd.f32 %v314, %v1332
      %v1334 = vpop.f32.mrb[0].mxu0
      %1335 = vmatprep.mubr.bf16.mxu0 0
      %1336 = vmatmul.mubr.bf16.gmra.mrb[0].mxu0 %v827
      %v1337 = vpop.f32.mrb[0].mxu0
      %v1338 = vadd.f32 %v314, %v1337
      %v1339 = vpop.f32.mrb[0].mxu0
      %v1340 = vpop.f32.mrb[0].mxu0
      %v1341 = vadd.f32 %v314, %v1340
      %v1342 = vpop.f32.mrb[0].mxu0
      %1343 = vmatprep.mubr.bf16.mxu0 0
      %1344 = vmatmul.mubr.bf16.gmra.mrb[0].mxu0 %v830
      %v1345 = vpop.f32.mrb[0].mxu0
      %v1346 = vadd.f32 %v314, %v1345
      %v1347 = vpop.f32.mrb[0].mxu0
      %v1348 = vpop.f32.mrb[0].mxu0
      %v1349 = vadd.f32 %v314, %v1348
      %v1350 = vpop.f32.mrb[0].mxu0
      %1351 = vmatprep.mubr.bf16.mxu0 0
      %1352 = vmatmul.mubr.bf16.gmra.mrb[0].mxu0 %v833
      %v1353 = vpop.f32.mrb[0].mxu0
      %v1354 = vadd.f32 %v314, %v1353
      %v1355 = vpop.f32.mrb[0].mxu0
      %v1356 = vpop.f32.mrb[0].mxu0
      %v1357 = vadd.f32 %v314, %v1356
      %v1358 = vpop.f32.mrb[0].mxu0
      %1359 = vmatprep.mubr.bf16.mxu0 0
      %1360 = vmatmul.mubr.bf16.gmra.mrb[0].mxu0 %v836
      %v1361 = vpop.f32.mrb[0].mxu0
      %v1362 = vadd.f32 %v314, %v1361
      %v1363 = vpop.f32.mrb[0].mxu0
      %v1364 = vpop.f32.mrb[0].mxu0
      %v1365 = vadd.f32 %v314, %v1364
      %v1366 = vpop.f32.mrb[0].mxu0
      %1367 = vmatprep.mubr.bf16.mxu0 0
      %1368 = vmatmul.mubr.bf16.gmra.mrb[0].mxu0 %v839
      %v1369 = vpop.f32.mrb[0].mxu0
      %v1370 = vadd.f32 %v314, %v1369
      %v1371 = vpop.f32.mrb[0].mxu0
      %v1372 = vpop.f32.mrb[0].mxu0
      %v1373 = vadd.f32 %v314, %v1372
      %v1374 = vpop.f32.mrb[0].mxu0
      %1375 = vmatprep.mubr.bf16.mxu0 0
      %1376 = vmatmul.mubr.bf16.gmra.mrb[0].mxu0 %v842
      %v1377 = vpop.f32.mrb[0].mxu0
      %v1378 = vadd.f32 %v314, %v1377
      %v1379 = vpop.f32.mrb[0].mxu0
      %v1380 = vpop.f32.mrb[0].mxu0
      %v1381 = vadd.f32 %v314, %v1380
      %v1382 = vpop.f32.mrb[0].mxu0
      %1383 = vmatprep.mubr.bf16.mxu0 0
      %1384 = vmatmul.mubr.bf16.gmra.mrb[0].mxu0 %v845
      %v1385 = vpop.f32.mrb[0].mxu0
      %v1386 = vadd.f32 %v314, %v1385
      %v1387 = vpop.f32.mrb[0].mxu0
      %v1388 = vpop.f32.mrb[0].mxu0
      %v1389 = vadd.f32 %v314, %v1388
      %v1390 = vpop.f32.mrb[0].mxu0
      %1391 = vdwg.mxu0
      %v1392 = vmax.f32 %v882, 0.0
      %v1393 = vmax.f32 %v885, 0.0
      %v1394 = vmax.f32 %v890, 0.0
      %v1395 = vmax.f32 %v893, 0.0
      %v1396 = vmax.f32 %v898, 0.0
      %v1397 = vmax.f32 %v901, 0.0
      %v1398 = vmax.f32 %v906, 0.0
      %v1399 = vmax.f32 %v909, 0.0
      %v1400 = vmax.f32 %v914, 0.0
      %v1401 = vmax.f32 %v917, 0.0
      %v1402 = vmax.f32 %v922, 0.0
      %v1403 = vmax.f32 %v925, 0.0
      %v1404 = vmax.f32 %v930, 0.0
      %v1405 = vmax.f32 %v933, 0.0
      %v1406 = vmax.f32 %v938, 0.0
      %v1407 = vmax.f32 %v941, 0.0
      %v1408 = vmax.f32 %v946, 0.0
      %v1409 = vmax.f32 %v949, 0.0
      %v1410 = vmax.f32 %v954, 0.0
      %v1411 = vmax.f32 %v957, 0.0
      %v1412 = vmax.f32 %v962, 0.0
      %v1413 = vmax.f32 %v965, 0.0
      %v1414 = vmax.f32 %v970, 0.0
      %v1415 = vmax.f32 %v973, 0.0
      %v1416 = vmax.f32 %v978, 0.0
      %v1417 = vmax.f32 %v981, 0.0
      %v1418 = vmax.f32 %v986, 0.0
      %v1419 = vmax.f32 %v989, 0.0
      %v1420 = vmax.f32 %v994, 0.0
      %v1421 = vmax.f32 %v997, 0.0
      %v1422 = vmax.f32 %v1002, 0.0
      %v1423 = vmax.f32 %v1005, 0.0
      %v1424 = vmax.f32 %v1010, 0.0
      %v1425 = vmax.f32 %v1013, 0.0
      %v1426 = vmax.f32 %v1018, 0.0
      %v1427 = vmax.f32 %v1021, 0.0
      %v1428 = vmax.f32 %v1026, 0.0
      %v1429 = vmax.f32 %v1029, 0.0
      %v1430 = vmax.f32 %v1034, 0.0
      %v1431 = vmax.f32 %v1037, 0.0
      %v1432 = vmax.f32 %v1042, 0.0
      %v1433 = vmax.f32 %v1045, 0.0
      %v1434 = vmax.f32 %v1050, 0.0
      %v1435 = vmax.f32 %v1053, 0.0
      %v1436 = vmax.f32 %v1058, 0.0
      %v1437 = vmax.f32 %v1061, 0.0
      %v1438 = vmax.f32 %v1066, 0.0
      %v1439 = vmax.f32 %v1069, 0.0
      %v1440 = vmax.f32 %v1074, 0.0
      %v1441 = vmax.f32 %v1077, 0.0
      %v1442 = vmax.f32 %v1082, 0.0
      %v1443 = vmax.f32 %v1085, 0.0
      %v1444 = vmax.f32 %v1090, 0.0
      %v1445 = vmax.f32 %v1093, 0.0
      %v1446 = vmax.f32 %v1098, 0.0
      %v1447 = vmax.f32 %v1101, 0.0
      %v1448 = vmax.f32 %v1106, 0.0
      %v1449 = vmax.f32 %v1109, 0.0
      %v1450 = vmax.f32 %v1114, 0.0
      %v1451 = vmax.f32 %v1117, 0.0
      %v1452 = vmax.f32 %v1122, 0.0
      %v1453 = vmax.f32 %v1125, 0.0
      %v1454 = vmax.f32 %v1130, 0.0
      %v1455 = vmax.f32 %v1133, 0.0
      %v1456 = vmax.f32 %v1138, 0.0
      %v1457 = vmax.f32 %v1141, 0.0
      %v1458 = vmax.f32 %v1146, 0.0
      %v1459 = vmax.f32 %v1149, 0.0
      %v1460 = vmax.f32 %v1154, 0.0
      %v1461 = vmax.f32 %v1157, 0.0
      %v1462 = vmax.f32 %v1162, 0.0
      %v1463 = vmax.f32 %v1165, 0.0
      %v1464 = vmax.f32 %v1170, 0.0
      %v1465 = vmax.f32 %v1173, 0.0
      %v1466 = vmax.f32 %v1178, 0.0
      %v1467 = vmax.f32 %v1181, 0.0
      %v1468 = vmax.f32 %v1186, 0.0
      %v1469 = vmax.f32 %v1189, 0.0
      %v1470 = vmax.f32 %v1194, 0.0
      %v1471 = vmax.f32 %v1197, 0.0
      %v1472 = vmax.f32 %v1202, 0.0
      %v1473 = vmax.f32 %v1205, 0.0
      %v1474 = vmax.f32 %v1210, 0.0
      %v1475 = vmax.f32 %v1213, 0.0
      %v1476 = vmax.f32 %v1218, 0.0
      %v1477 = vmax.f32 %v1221, 0.0
      %v1478 = vmax.f32 %v1226, 0.0
      %v1479 = vmax.f32 %v1229, 0.0
      %v1480 = vmax.f32 %v1234, 0.0
      %v1481 = vmax.f32 %v1237, 0.0
      %v1482 = vmax.f32 %v1242, 0.0
      %v1483 = vmax.f32 %v1245, 0.0
      %v1484 = vmax.f32 %v1250, 0.0
      %v1485 = vmax.f32 %v1253, 0.0
      %v1486 = vmax.f32 %v1258, 0.0
      %v1487 = vmax.f32 %v1261, 0.0
      %v1488 = vmax.f32 %v1266, 0.0
      %v1489 = vmax.f32 %v1269, 0.0
      %v1490 = vmax.f32 %v1274, 0.0
      %v1491 = vmax.f32 %v1277, 0.0
      %v1492 = vmax.f32 %v1282, 0.0
      %v1493 = vmax.f32 %v1285, 0.0
      %v1494 = vmax.f32 %v1290, 0.0
      %v1495 = vmax.f32 %v1293, 0.0
      %v1496 = vmax.f32 %v1298, 0.0
      %v1497 = vmax.f32 %v1301, 0.0
      %v1498 = vmax.f32 %v1306, 0.0
      %v1499 = vmax.f32 %v1309, 0.0
      %v1500 = vmax.f32 %v1314, 0.0
      %v1501 = vmax.f32 %v1317, 0.0
      %v1502 = vmax.f32 %v1322, 0.0
      %v1503 = vmax.f32 %v1325, 0.0
      %v1504 = vmax.f32 %v1330, 0.0
      %v1505 = vmax.f32 %v1333, 0.0
      %v1506 = vmax.f32 %v1338, 0.0
      %v1507 = vmax.f32 %v1341, 0.0
      %v1508 = vmax.f32 %v1346, 0.0
      %v1509 = vmax.f32 %v1349, 0.0
      %v1510 = vmax.f32 %v1354, 0.0
      %v1511 = vmax.f32 %v1357, 0.0
      %v1512 = vmax.f32 %v1362, 0.0
      %v1513 = vmax.f32 %v1365, 0.0
      %v1514 = vmax.f32 %v1370, 0.0
      %v1515 = vmax.f32 %v1373, 0.0
      %v1516 = vmax.f32 %v1378, 0.0
      %v1517 = vmax.f32 %v1381, 0.0
      %v1518 = vmax.f32 %v1386, 0.0
      %v1519 = vmax.f32 %v1389, 0.0
      %v1520 = vpack.c.bf16 %v1393, %v1392
      %v1521 = vpack.c.bf16 %v1395, %v1394
      %v1522 = vpack.c.bf16 %v1397, %v1396
      %v1523 = vpack.c.bf16 %v1399, %v1398
      %v1524 = vpack.c.bf16 %v1401, %v1400
      %v1525 = vpack.c.bf16 %v1403, %v1402
      %v1526 = vpack.c.bf16 %v1405, %v1404
      %v1527 = vpack.c.bf16 %v1407, %v1406
      %v1528 = vpack.c.bf16 %v1409, %v1408
      %v1529 = vpack.c.bf16 %v1411, %v1410
      %v1530 = vpack.c.bf16 %v1413, %v1412
      %v1531 = vpack.c.bf16 %v1415, %v1414
      %v1532 = vpack.c.bf16 %v1417, %v1416
      %v1533 = vpack.c.bf16 %v1419, %v1418
      %v1534 = vpack.c.bf16 %v1421, %v1420
      %v1535 = vpack.c.bf16 %v1423, %v1422
      %v1536 = vpack.c.bf16 %v1425, %v1424
      %v1537 = vpack.c.bf16 %v1427, %v1426
      %v1538 = vpack.c.bf16 %v1429, %v1428
      %v1539 = vpack.c.bf16 %v1431, %v1430
      %v1540 = vpack.c.bf16 %v1433, %v1432
      %v1541 = vpack.c.bf16 %v1435, %v1434
      %v1542 = vpack.c.bf16 %v1437, %v1436
      %v1543 = vpack.c.bf16 %v1439, %v1438
      %v1544 = vpack.c.bf16 %v1441, %v1440
      %v1545 = vpack.c.bf16 %v1443, %v1442
      %v1546 = vpack.c.bf16 %v1445, %v1444
      %v1547 = vpack.c.bf16 %v1447, %v1446
      %v1548 = vpack.c.bf16 %v1449, %v1448
      %v1549 = vpack.c.bf16 %v1451, %v1450
      %v1550 = vpack.c.bf16 %v1453, %v1452
      %v1551 = vpack.c.bf16 %v1455, %v1454
      %v1552 = vpack.c.bf16 %v1457, %v1456
      %v1553 = vpack.c.bf16 %v1459, %v1458
      %v1554 = vpack.c.bf16 %v1461, %v1460
      %v1555 = vpack.c.bf16 %v1463, %v1462
      %v1556 = vpack.c.bf16 %v1465, %v1464
      %v1557 = vpack.c.bf16 %v1467, %v1466
      %v1558 = vpack.c.bf16 %v1469, %v1468
      %v1559 = vpack.c.bf16 %v1471, %v1470
      %v1560 = vpack.c.bf16 %v1473, %v1472
      %v1561 = vpack.c.bf16 %v1475, %v1474
      %v1562 = vpack.c.bf16 %v1477, %v1476
      %v1563 = vpack.c.bf16 %v1479, %v1478
      %v1564 = vpack.c.bf16 %v1481, %v1480
      %v1565 = vpack.c.bf16 %v1483, %v1482
      %v1566 = vpack.c.bf16 %v1485, %v1484
      %v1567 = vpack.c.bf16 %v1487, %v1486
      %v1568 = vpack.c.bf16 %v1489, %v1488
      %v1569 = vpack.c.bf16 %v1491, %v1490
      %v1570 = vpack.c.bf16 %v1493, %v1492
      %v1571 = vpack.c.bf16 %v1495, %v1494
      %v1572 = vpack.c.bf16 %v1497, %v1496
      %v1573 = vpack.c.bf16 %v1499, %v1498
      %v1574 = vpack.c.bf16 %v1501, %v1500
      %v1575 = vpack.c.bf16 %v1503, %v1502
      %v1576 = vpack.c.bf16 %v1505, %v1504
      %v1577 = vpack.c.bf16 %v1507, %v1506
      %v1578 = vpack.c.bf16 %v1509, %v1508
      %v1579 = vpack.c.bf16 %v1511, %v1510
      %v1580 = vpack.c.bf16 %v1513, %v1512
      %v1581 = vpack.c.bf16 %v1515, %v1514
      %v1582 = vpack.c.bf16 %v1517, %v1516
      %v1583 = vpack.c.bf16 %v1519, %v1518
      %v1648 = vunpack.c.l.b16 %v1520
      %v1649 = vunpack.c.h.b16 %v1520
      %v1650 = vunpack.c.l.b16 %v1521
      %v1651 = vunpack.c.h.b16 %v1521
      %v1652 = vunpack.c.l.b16 %v1522
      %v1653 = vunpack.c.h.b16 %v1522
      %v1654 = vunpack.c.l.b16 %v1523
      %v1655 = vunpack.c.h.b16 %v1523
      %v1656 = vunpack.c.l.b16 %v1524
      %v1657 = vunpack.c.h.b16 %v1524
      %v1658 = vunpack.c.l.b16 %v1525
      %v1659 = vunpack.c.h.b16 %v1525
      %v1660 = vunpack.c.l.b16 %v1526
      %v1661 = vunpack.c.h.b16 %v1526
      %v1662 = vunpack.c.l.b16 %v1527
      %v1663 = vunpack.c.h.b16 %v1527
      %v1664 = vunpack.c.l.b16 %v1528
      %v1665 = vunpack.c.h.b16 %v1528
      %v1666 = vunpack.c.l.b16 %v1529
      %v1667 = vunpack.c.h.b16 %v1529
      %v1668 = vunpack.c.l.b16 %v1530
      %v1669 = vunpack.c.h.b16 %v1530
      %v1670 = vunpack.c.l.b16 %v1531
      %v1671 = vunpack.c.h.b16 %v1531
      %v1672 = vunpack.c.l.b16 %v1532
      %v1673 = vunpack.c.h.b16 %v1532
      %v1674 = vunpack.c.l.b16 %v1533
      %v1675 = vunpack.c.h.b16 %v1533
      %v1676 = vunpack.c.l.b16 %v1534
      %v1677 = vunpack.c.h.b16 %v1534
      %v1678 = vunpack.c.l.b16 %v1535
      %v1679 = vunpack.c.h.b16 %v1535
      %v1680 = vunpack.c.l.b16 %v1536
      %v1681 = vunpack.c.h.b16 %v1536
      %v1682 = vunpack.c.l.b16 %v1537
      %v1683 = vunpack.c.h.b16 %v1537
      %v1684 = vunpack.c.l.b16 %v1538
      %v1685 = vunpack.c.h.b16 %v1538
      %v1686 = vunpack.c.l.b16 %v1539
      %v1687 = vunpack.c.h.b16 %v1539
      %v1688 = vunpack.c.l.b16 %v1540
      %v1689 = vunpack.c.h.b16 %v1540
      %v1690 = vunpack.c.l.b16 %v1541
      %v1691 = vunpack.c.h.b16 %v1541
      %v1692 = vunpack.c.l.b16 %v1542
      %v1693 = vunpack.c.h.b16 %v1542
      %v1694 = vunpack.c.l.b16 %v1543
      %v1695 = vunpack.c.h.b16 %v1543
      %v1696 = vunpack.c.l.b16 %v1544
      %v1697 = vunpack.c.h.b16 %v1544
      %v1698 = vunpack.c.l.b16 %v1545
      %v1699 = vunpack.c.h.b16 %v1545
      %v1700 = vunpack.c.l.b16 %v1546
      %v1701 = vunpack.c.h.b16 %v1546
      %v1702 = vunpack.c.l.b16 %v1547
      %v1703 = vunpack.c.h.b16 %v1547
      %v1704 = vunpack.c.l.b16 %v1548
      %v1705 = vunpack.c.h.b16 %v1548
      %v1706 = vunpack.c.l.b16 %v1549
      %v1707 = vunpack.c.h.b16 %v1549
      %v1708 = vunpack.c.l.b16 %v1550
      %v1709 = vunpack.c.h.b16 %v1550
      %v1710 = vunpack.c.l.b16 %v1551
      %v1711 = vunpack.c.h.b16 %v1551
      %v1712 = vunpack.c.l.b16 %v1552
      %v1713 = vunpack.c.h.b16 %v1552
      %v1714 = vunpack.c.l.b16 %v1553
      %v1715 = vunpack.c.h.b16 %v1553
      %v1716 = vunpack.c.l.b16 %v1554
      %v1717 = vunpack.c.h.b16 %v1554
      %v1718 = vunpack.c.l.b16 %v1555
      %v1719 = vunpack.c.h.b16 %v1555
      %v1720 = vunpack.c.l.b16 %v1556
      %v1721 = vunpack.c.h.b16 %v1556
      %v1722 = vunpack.c.l.b16 %v1557
      %v1723 = vunpack.c.h.b16 %v1557
      %v1724 = vunpack.c.l.b16 %v1558
      %v1725 = vunpack.c.h.b16 %v1558
      %v1726 = vunpack.c.l.b16 %v1559
      %v1727 = vunpack.c.h.b16 %v1559
      %v1728 = vunpack.c.l.b16 %v1560
      %v1729 = vunpack.c.h.b16 %v1560
      %v1730 = vunpack.c.l.b16 %v1561
      %v1731 = vunpack.c.h.b16 %v1561
      %v1732 = vunpack.c.l.b16 %v1562
      %v1733 = vunpack.c.h.b16 %v1562
      %v1734 = vunpack.c.l.b16 %v1563
      %v1735 = vunpack.c.h.b16 %v1563
      %v1736 = vunpack.c.l.b16 %v1564
      %v1737 = vunpack.c.h.b16 %v1564
      %v1738 = vunpack.c.l.b16 %v1565
      %v1739 = vunpack.c.h.b16 %v1565
      %v1740 = vunpack.c.l.b16 %v1566
      %v1741 = vunpack.c.h.b16 %v1566
      %v1742 = vunpack.c.l.b16 %v1567
      %v1743 = vunpack.c.h.b16 %v1567
      %v1744 = vunpack.c.l.b16 %v1568
      %v1745 = vunpack.c.h.b16 %v1568
      %v1746 = vunpack.c.l.b16 %v1569
      %v1747 = vunpack.c.h.b16 %v1569
      %v1748 = vunpack.c.l.b16 %v1570
      %v1749 = vunpack.c.h.b16 %v1570
      %v1750 = vunpack.c.l.b16 %v1571
      %v1751 = vunpack.c.h.b16 %v1571
      %v1752 = vunpack.c.l.b16 %v1572
      %v1753 = vunpack.c.h.b16 %v1572
      %v1754 = vunpack.c.l.b16 %v1573
      %v1755 = vunpack.c.h.b16 %v1573
      %v1756 = vunpack.c.l.b16 %v1574
      %v1757 = vunpack.c.h.b16 %v1574
      %v1758 = vunpack.c.l.b16 %v1575
      %v1759 = vunpack.c.h.b16 %v1575
      %v1760 = vunpack.c.l.b16 %v1576
      %v1761 = vunpack.c.h.b16 %v1576
      %v1762 = vunpack.c.l.b16 %v1577
      %v1763 = vunpack.c.h.b16 %v1577
      %v1764 = vunpack.c.l.b16 %v1578
      %v1765 = vunpack.c.h.b16 %v1578
      %v1766 = vunpack.c.l.b16 %v1579
      %v1767 = vunpack.c.h.b16 %v1579
      %v1768 = vunpack.c.l.b16 %v1580
      %v1769 = vunpack.c.h.b16 %v1580
      %v1770 = vunpack.c.l.b16 %v1581
      %v1771 = vunpack.c.h.b16 %v1581
      %v1772 = vunpack.c.l.b16 %v1582
      %v1773 = vunpack.c.h.b16 %v1582
      %v1774 = vunpack.c.l.b16 %v1583
      %v1775 = vunpack.c.h.b16 %v1583
      %v1776 = vpack.c.b16 %v1648, %v1648
      %v1777 = vpack.c.b16 %v1649, %v1649
      %v1778 = vpack.c.b16 %v1650, %v1650
      %v1779 = vpack.c.b16 %v1651, %v1651
      %v1780 = vpack.c.b16 %v1652, %v1652
      %v1781 = vpack.c.b16 %v1653, %v1653
      %v1782 = vpack.c.b16 %v1654, %v1654
      %v1783 = vpack.c.b16 %v1655, %v1655
      %v1784 = vpack.c.b16 %v1656, %v1656
      %v1785 = vpack.c.b16 %v1657, %v1657
      %v1786 = vpack.c.b16 %v1658, %v1658
      %v1787 = vpack.c.b16 %v1659, %v1659
      %v1788 = vpack.c.b16 %v1660, %v1660
      %v1789 = vpack.c.b16 %v1661, %v1661
      %v1790 = vpack.c.b16 %v1662, %v1662
      %v1791 = vpack.c.b16 %v1663, %v1663
      %v1792 = vpack.c.b16 %v1664, %v1664
      %v1793 = vpack.c.b16 %v1665, %v1665
      %v1794 = vpack.c.b16 %v1666, %v1666
      %v1795 = vpack.c.b16 %v1667, %v1667
      %v1796 = vpack.c.b16 %v1668, %v1668
      %v1797 = vpack.c.b16 %v1669, %v1669
      %v1798 = vpack.c.b16 %v1670, %v1670
      %v1799 = vpack.c.b16 %v1671, %v1671
      %v1800 = vpack.c.b16 %v1672, %v1672
      %v1801 = vpack.c.b16 %v1673, %v1673
      %v1802 = vpack.c.b16 %v1674, %v1674
      %v1803 = vpack.c.b16 %v1675, %v1675
      %v1804 = vpack.c.b16 %v1676, %v1676
      %v1805 = vpack.c.b16 %v1677, %v1677
      %v1806 = vpack.c.b16 %v1678, %v1678
      %v1807 = vpack.c.b16 %v1679, %v1679
      %v1808 = vpack.c.b16 %v1680, %v1680
      %v1809 = vpack.c.b16 %v1681, %v1681
      %v1810 = vpack.c.b16 %v1682, %v1682
      %v1811 = vpack.c.b16 %v1683, %v1683
      %v1812 = vpack.c.b16 %v1684, %v1684
      %v1813 = vpack.c.b16 %v1685, %v1685
      %v1814 = vpack.c.b16 %v1686, %v1686
      %v1815 = vpack.c.b16 %v1687, %v1687
      %v1816 = vpack.c.b16 %v1688, %v1688
      %v1817 = vpack.c.b16 %v1689, %v1689
      %v1818 = vpack.c.b16 %v1690, %v1690
      %v1819 = vpack.c.b16 %v1691, %v1691
      %v1820 = vpack.c.b16 %v1692, %v1692
      %v1821 = vpack.c.b16 %v1693, %v1693
      %v1822 = vpack.c.b16 %v1694, %v1694
      %v1823 = vpack.c.b16 %v1695, %v1695
      %v1824 = vpack.c.b16 %v1696, %v1696
      %v1825 = vpack.c.b16 %v1697, %v1697
      %v1826 = vpack.c.b16 %v1698, %v1698
      %v1827 = vpack.c.b16 %v1699, %v1699
      %v1828 = vpack.c.b16 %v1700, %v1700
      %v1829 = vpack.c.b16 %v1701, %v1701
      %v1830 = vpack.c.b16 %v1702, %v1702
      %v1831 = vpack.c.b16 %v1703, %v1703
      %v1832 = vpack.c.b16 %v1704, %v1704
      %v1833 = vpack.c.b16 %v1705, %v1705
      %v1834 = vpack.c.b16 %v1706, %v1706
      %v1835 = vpack.c.b16 %v1707, %v1707
      %v1836 = vpack.c.b16 %v1708, %v1708
      %v1837 = vpack.c.b16 %v1709, %v1709
      %v1838 = vpack.c.b16 %v1710, %v1710
      %v1839 = vpack.c.b16 %v1711, %v1711
      %v1840 = vpack.c.b16 %v1712, %v1712
      %v1841 = vpack.c.b16 %v1713, %v1713
      %v1842 = vpack.c.b16 %v1714, %v1714
      %v1843 = vpack.c.b16 %v1715, %v1715
      %v1844 = vpack.c.b16 %v1716, %v1716
      %v1845 = vpack.c.b16 %v1717, %v1717
      %v1846 = vpack.c.b16 %v1718, %v1718
      %v1847 = vpack.c.b16 %v1719, %v1719
      %v1848 = vpack.c.b16 %v1720, %v1720
      %v1849 = vpack.c.b16 %v1721, %v1721
      %v1850 = vpack.c.b16 %v1722, %v1722
      %v1851 = vpack.c.b16 %v1723, %v1723
      %v1852 = vpack.c.b16 %v1724, %v1724
      %v1853 = vpack.c.b16 %v1725, %v1725
      %v1854 = vpack.c.b16 %v1726, %v1726
      %v1855 = vpack.c.b16 %v1727, %v1727
      %v1856 = vpack.c.b16 %v1728, %v1728
      %v1857 = vpack.c.b16 %v1729, %v1729
      %v1858 = vpack.c.b16 %v1730, %v1730
      %v1859 = vpack.c.b16 %v1731, %v1731
      %v1860 = vpack.c.b16 %v1732, %v1732
      %v1861 = vpack.c.b16 %v1733, %v1733
      %v1862 = vpack.c.b16 %v1734, %v1734
      %v1863 = vpack.c.b16 %v1735, %v1735
      %v1864 = vpack.c.b16 %v1736, %v1736
      %v1865 = vpack.c.b16 %v1737, %v1737
      %v1866 = vpack.c.b16 %v1738, %v1738
      %v1867 = vpack.c.b16 %v1739, %v1739
      %v1868 = vpack.c.b16 %v1740, %v1740
      %v1869 = vpack.c.b16 %v1741, %v1741
      %v1870 = vpack.c.b16 %v1742, %v1742
      %v1871 = vpack.c.b16 %v1743, %v1743
      %v1872 = vpack.c.b16 %v1744, %v1744
      %v1873 = vpack.c.b16 %v1745, %v1745
      %v1874 = vpack.c.b16 %v1746, %v1746
      %v1875 = vpack.c.b16 %v1747, %v1747
      %v1876 = vpack.c.b16 %v1748, %v1748
      %v1877 = vpack.c.b16 %v1749, %v1749
      %v1878 = vpack.c.b16 %v1750, %v1750
      %v1879 = vpack.c.b16 %v1751, %v1751
      %v1880 = vpack.c.b16 %v1752, %v1752
      %v1881 = vpack.c.b16 %v1753, %v1753
      %v1882 = vpack.c.b16 %v1754, %v1754
      %v1883 = vpack.c.b16 %v1755, %v1755
      %v1884 = vpack.c.b16 %v1756, %v1756
      %v1885 = vpack.c.b16 %v1757, %v1757
      %v1886 = vpack.c.b16 %v1758, %v1758
      %v1887 = vpack.c.b16 %v1759, %v1759
      %v1888 = vpack.c.b16 %v1760, %v1760
      %v1889 = vpack.c.b16 %v1761, %v1761
      %v1890 = vpack.c.b16 %v1762, %v1762
      %v1891 = vpack.c.b16 %v1763, %v1763
      %v1892 = vpack.c.b16 %v1764, %v1764
      %v1893 = vpack.c.b16 %v1765, %v1765
      %v1894 = vpack.c.b16 %v1766, %v1766
      %v1895 = vpack.c.b16 %v1767, %v1767
      %v1896 = vpack.c.b16 %v1768, %v1768
      %v1897 = vpack.c.b16 %v1769, %v1769
      %v1898 = vpack.c.b16 %v1770, %v1770
      %v1899 = vpack.c.b16 %v1771, %v1771
      %v1900 = vpack.c.b16 %v1772, %v1772
      %v1901 = vpack.c.b16 %v1773, %v1773
      %v1902 = vpack.c.b16 %v1774, %v1774
      %v1903 = vpack.c.b16 %v1775, %v1775
      %vm2032 = vcmask 125952
      %2033 = vst.msk [vmem:[%s172] sm:$0xf] %vm2032, %v1776
      %2034 = vst.msk [vmem:[%s172 + $0x4] sm:$0xf] %vm2032, %v1777
      %2035 = vst.msk [vmem:[%s172 + $0x8] sm:$0xf] %vm2032, %v1778
      %2036 = vst.msk [vmem:[%s172 + $0xc] sm:$0xf] %vm2032, %v1779
      %2037 = vst.msk [vmem:[%s172 + $0x10] sm:$0xf] %vm2032, %v1780
      %2038 = vst.msk [vmem:[%s172 + $0x14] sm:$0xf] %vm2032, %v1781
      %2039 = vst.msk [vmem:[%s172 + $0x18] sm:$0xf] %vm2032, %v1782
      %2040 = vst.msk [vmem:[%s172 + $0x1c] sm:$0xf] %vm2032, %v1783
      %2041 = vst.msk [vmem:[%s172 + $0x20] sm:$0xf] %vm2032, %v1784
      %2042 = vst.msk [vmem:[%s172 + $0x24] sm:$0xf] %vm2032, %v1785
      %2043 = vst.msk [vmem:[%s172 + $0x28] sm:$0xf] %vm2032, %v1786
      %2044 = vst.msk [vmem:[%s172 + $0x2c] sm:$0xf] %vm2032, %v1787
      %2045 = vst.msk [vmem:[%s172 + $0x30] sm:$0xf] %vm2032, %v1788
      %2046 = vst.msk [vmem:[%s172 + $0x34] sm:$0xf] %vm2032, %v1789
      %2047 = vst.msk [vmem:[%s172 + $0x38] sm:$0xf] %vm2032, %v1790
      %2048 = vst.msk [vmem:[%s172 + $0x3c] sm:$0xf] %vm2032, %v1791
      %2049 = vst.msk [vmem:[%s172 + $0x40] sm:$0xf] %vm2032, %v1792
      %2050 = vst.msk [vmem:[%s172 + $0x44] sm:$0xf] %vm2032, %v1793
      %2051 = vst.msk [vmem:[%s172 + $0x48] sm:$0xf] %vm2032, %v1794
      %2052 = vst.msk [vmem:[%s172 + $0x4c] sm:$0xf] %vm2032, %v1795
      %2053 = vst.msk [vmem:[%s172 + $0x50] sm:$0xf] %vm2032, %v1796
      %2054 = vst.msk [vmem:[%s172 + $0x54] sm:$0xf] %vm2032, %v1797
      %2055 = vst.msk [vmem:[%s172 + $0x58] sm:$0xf] %vm2032, %v1798
      %2056 = vst.msk [vmem:[%s172 + $0x5c] sm:$0xf] %vm2032, %v1799
      %2057 = vst.msk [vmem:[%s172 + $0x60] sm:$0xf] %vm2032, %v1800
      %2058 = vst.msk [vmem:[%s172 + $0x64] sm:$0xf] %vm2032, %v1801
      %2059 = vst.msk [vmem:[%s172 + $0x68] sm:$0xf] %vm2032, %v1802
      %2060 = vst.msk [vmem:[%s172 + $0x6c] sm:$0xf] %vm2032, %v1803
      %2061 = vst.msk [vmem:[%s172 + $0x70] sm:$0xf] %vm2032, %v1804
      %2062 = vst.msk [vmem:[%s172 + $0x74] sm:$0xf] %vm2032, %v1805
      %2063 = vst.msk [vmem:[%s172 + $0x78] sm:$0xf] %vm2032, %v1806
      %2064 = vst.msk [vmem:[%s172 + $0x7c] sm:$0xf] %vm2032, %v1807
      %2065 = vst.msk [vmem:[%s172 + $0x80] sm:$0xf] %vm2032, %v1808
      %2066 = vst.msk [vmem:[%s172 + $0x84] sm:$0xf] %vm2032, %v1809
      %2067 = vst.msk [vmem:[%s172 + $0x88] sm:$0xf] %vm2032, %v1810
      %2068 = vst.msk [vmem:[%s172 + $0x8c] sm:$0xf] %vm2032, %v1811
      %2069 = vst.msk [vmem:[%s172 + $0x90] sm:$0xf] %vm2032, %v1812
      %2070 = vst.msk [vmem:[%s172 + $0x94] sm:$0xf] %vm2032, %v1813
      %2071 = vst.msk [vmem:[%s172 + $0x98] sm:$0xf] %vm2032, %v1814
      %2072 = vst.msk [vmem:[%s172 + $0x9c] sm:$0xf] %vm2032, %v1815
      %2073 = vst.msk [vmem:[%s172 + $0xa0] sm:$0xf] %vm2032, %v1816
      %2074 = vst.msk [vmem:[%s172 + $0xa4] sm:$0xf] %vm2032, %v1817
      %2075 = vst.msk [vmem:[%s172 + $0xa8] sm:$0xf] %vm2032, %v1818
      %2076 = vst.msk [vmem:[%s172 + $0xac] sm:$0xf] %vm2032, %v1819
      %2077 = vst.msk [vmem:[%s172 + $0xb0] sm:$0xf] %vm2032, %v1820
      %2078 = vst.msk [vmem:[%s172 + $0xb4] sm:$0xf] %vm2032, %v1821
      %2079 = vst.msk [vmem:[%s172 + $0xb8] sm:$0xf] %vm2032, %v1822
      %2080 = vst.msk [vmem:[%s172 + $0xbc] sm:$0xf] %vm2032, %v1823
      %2081 = vst.msk [vmem:[%s172 + $0xc0] sm:$0xf] %vm2032, %v1824
      %2082 = vst.msk [vmem:[%s172 + $0xc4] sm:$0xf] %vm2032, %v1825
      %2083 = vst.msk [vmem:[%s172 + $0xc8] sm:$0xf] %vm2032, %v1826
      %2084 = vst.msk [vmem:[%s172 + $0xcc] sm:$0xf] %vm2032, %v1827
      %2085 = vst.msk [vmem:[%s172 + $0xd0] sm:$0xf] %vm2032, %v1828
      %2086 = vst.msk [vmem:[%s172 + $0xd4] sm:$0xf] %vm2032, %v1829
      %2087 = vst.msk [vmem:[%s172 + $0xd8] sm:$0xf] %vm2032, %v1830
      %2088 = vst.msk [vmem:[%s172 + $0xdc] sm:$0xf] %vm2032, %v1831
      %2089 = vst.msk [vmem:[%s172 + $0xe0] sm:$0xf] %vm2032, %v1832
      %2090 = vst.msk [vmem:[%s172 + $0xe4] sm:$0xf] %vm2032, %v1833
      %2091 = vst.msk [vmem:[%s172 + $0xe8] sm:$0xf] %vm2032, %v1834
      %2092 = vst.msk [vmem:[%s172 + $0xec] sm:$0xf] %vm2032, %v1835
      %2093 = vst.msk [vmem:[%s172 + $0xf0] sm:$0xf] %vm2032, %v1836
      %2094 = vst.msk [vmem:[%s172 + $0xf4] sm:$0xf] %vm2032, %v1837
      %2095 = vst.msk [vmem:[%s172 + $0xf8] sm:$0xf] %vm2032, %v1838
      %2096 = vst.msk [vmem:[%s172 + $0xfc] sm:$0xf] %vm2032, %v1839
      %2097 = vst.msk [vmem:[%s172 + $0x100] sm:$0xf] %vm2032, %v1840
      %2098 = vst.msk [vmem:[%s172 + $0x104] sm:$0xf] %vm2032, %v1841
      %2099 = vst.msk [vmem:[%s172 + $0x108] sm:$0xf] %vm2032, %v1842
      %2100 = vst.msk [vmem:[%s172 + $0x10c] sm:$0xf] %vm2032, %v1843
      %2101 = vst.msk [vmem:[%s172 + $0x110] sm:$0xf] %vm2032, %v1844
      %2102 = vst.msk [vmem:[%s172 + $0x114] sm:$0xf] %vm2032, %v1845
      %2103 = vst.msk [vmem:[%s172 + $0x118] sm:$0xf] %vm2032, %v1846
      %2104 = vst.msk [vmem:[%s172 + $0x11c] sm:$0xf] %vm2032, %v1847
      %2105 = vst.msk [vmem:[%s172 + $0x120] sm:$0xf] %vm2032, %v1848
      %2106 = vst.msk [vmem:[%s172 + $0x124] sm:$0xf] %vm2032, %v1849
      %2107 = vst.msk [vmem:[%s172 + $0x128] sm:$0xf] %vm2032, %v1850
      %2108 = vst.msk [vmem:[%s172 + $0x12c] sm:$0xf] %vm2032, %v1851
      %2109 = vst.msk [vmem:[%s172 + $0x130] sm:$0xf] %vm2032, %v1852
      %2110 = vst.msk [vmem:[%s172 + $0x134] sm:$0xf] %vm2032, %v1853
      %2111 = vst.msk [vmem:[%s172 + $0x138] sm:$0xf] %vm2032, %v1854
      %2112 = vst.msk [vmem:[%s172 + $0x13c] sm:$0xf] %vm2032, %v1855
      %2113 = vst.msk [vmem:[%s172 + $0x140] sm:$0xf] %vm2032, %v1856
      %2114 = vst.msk [vmem:[%s172 + $0x144] sm:$0xf] %vm2032, %v1857
      %2115 = vst.msk [vmem:[%s172 + $0x148] sm:$0xf] %vm2032, %v1858
      %2116 = vst.msk [vmem:[%s172 + $0x14c] sm:$0xf] %vm2032, %v1859
      %2117 = vst.msk [vmem:[%s172 + $0x150] sm:$0xf] %vm2032, %v1860
      %2118 = vst.msk [vmem:[%s172 + $0x154] sm:$0xf] %vm2032, %v1861
      %2119 = vst.msk [vmem:[%s172 + $0x158] sm:$0xf] %vm2032, %v1862
      %2120 = vst.msk [vmem:[%s172 + $0x15c] sm:$0xf] %vm2032, %v1863
      %2121 = vst.msk [vmem:[%s172 + $0x160] sm:$0xf] %vm2032, %v1864
      %2122 = vst.msk [vmem:[%s172 + $0x164] sm:$0xf] %vm2032, %v1865
      %2123 = vst.msk [vmem:[%s172 + $0x168] sm:$0xf] %vm2032, %v1866
      %2124 = vst.msk [vmem:[%s172 + $0x16c] sm:$0xf] %vm2032, %v1867
      %2125 = vst.msk [vmem:[%s172 + $0x170] sm:$0xf] %vm2032, %v1868
      %2126 = vst.msk [vmem:[%s172 + $0x174] sm:$0xf] %vm2032, %v1869
      %2127 = vst.msk [vmem:[%s172 + $0x178] sm:$0xf] %vm2032, %v1870
      %2128 = vst.msk [vmem:[%s172 + $0x17c] sm:$0xf] %vm2032, %v1871
      %2129 = vst.msk [vmem:[%s172 + $0x180] sm:$0xf] %vm2032, %v1872
      %2130 = vst.msk [vmem:[%s172 + $0x184] sm:$0xf] %vm2032, %v1873
      %2131 = vst.msk [vmem:[%s172 + $0x188] sm:$0xf] %vm2032, %v1874
      %2132 = vst.msk [vmem:[%s172 + $0x18c] sm:$0xf] %vm2032, %v1875
      %2133 = vst.msk [vmem:[%s172 + $0x190] sm:$0xf] %vm2032, %v1876
      %2134 = vst.msk [vmem:[%s172 + $0x194] sm:$0xf] %vm2032, %v1877
      %2135 = vst.msk [vmem:[%s172 + $0x198] sm:$0xf] %vm2032, %v1878
      %2136 = vst.msk [vmem:[%s172 + $0x19c] sm:$0xf] %vm2032, %v1879
      %2137 = vst.msk [vmem:[%s172 + $0x1a0] sm:$0xf] %vm2032, %v1880
      %2138 = vst.msk [vmem:[%s172 + $0x1a4] sm:$0xf] %vm2032, %v1881
      %2139 = vst.msk [vmem:[%s172 + $0x1a8] sm:$0xf] %vm2032, %v1882
      %2140 = vst.msk [vmem:[%s172 + $0x1ac] sm:$0xf] %vm2032, %v1883
      %2141 = vst.msk [vmem:[%s172 + $0x1b0] sm:$0xf] %vm2032, %v1884
      %2142 = vst.msk [vmem:[%s172 + $0x1b4] sm:$0xf] %vm2032, %v1885
      %2143 = vst.msk [vmem:[%s172 + $0x1b8] sm:$0xf] %vm2032, %v1886
      %2144 = vst.msk [vmem:[%s172 + $0x1bc] sm:$0xf] %vm2032, %v1887
      %2145 = vst.msk [vmem:[%s172 + $0x1c0] sm:$0xf] %vm2032, %v1888
      %2146 = vst.msk [vmem:[%s172 + $0x1c4] sm:$0xf] %vm2032, %v1889
      %2147 = vst.msk [vmem:[%s172 + $0x1c8] sm:$0xf] %vm2032, %v1890
      %2148 = vst.msk [vmem:[%s172 + $0x1cc] sm:$0xf] %vm2032, %v1891
      %2149 = vst.msk [vmem:[%s172 + $0x1d0] sm:$0xf] %vm2032, %v1892
      %2150 = vst.msk [vmem:[%s172 + $0x1d4] sm:$0xf] %vm2032, %v1893
      %2151 = vst.msk [vmem:[%s172 + $0x1d8] sm:$0xf] %vm2032, %v1894
      %2152 = vst.msk [vmem:[%s172 + $0x1dc] sm:$0xf] %vm2032, %v1895
      %2153 = vst.msk [vmem:[%s172 + $0x1e0] sm:$0xf] %vm2032, %v1896
      %2154 = vst.msk [vmem:[%s172 + $0x1e4] sm:$0xf] %vm2032, %v1897
      %2155 = vst.msk [vmem:[%s172 + $0x1e8] sm:$0xf] %vm2032, %v1898
      %2156 = vst.msk [vmem:[%s172 + $0x1ec] sm:$0xf] %vm2032, %v1899
      %2157 = vst.msk [vmem:[%s172 + $0x1f0] sm:$0xf] %vm2032, %v1900
      %2158 = vst.msk [vmem:[%s172 + $0x1f4] sm:$0xf] %vm2032, %v1901
      %2159 = vst.msk [vmem:[%s172 + $0x1f8] sm:$0xf] %vm2032, %v1902
      %2160 = vst.msk [vmem:[%s172 + $0x1fc] sm:$0xf] %vm2032, %v1903
      %s2161 = smul.u32 128, %s14
      %p2162 = scmp.lt.s32.totalorder %s2161, 255
      %s2163 = scalar_select %p2162, %s2161, 255
      %s2164 = smul.addr %s2163, 4
      %s2165 = scalar_lea.vmem %s3, %s2164
      // Predicated region
      $region33: #{discriminator_forward.4} parent=31 // pred_check
        %p2166 = pneg %p100
      $region34: #{discriminator_forward.4} parent=31 // pred_check_branch
        %2168 = sbr.rel (%p2166) target = $region36
      $region35: #{discriminator_forward.4} parent=31 // pred_region
        %s2169 = smul.u32 128, %s14
      $region36: #{discriminator_forward.4} parent=31 // pred_fallthru
        _
    $region32: #{discriminator_forward.4} parent=5 // pred_fallthru
      _
    %p2170 = scmp.le.s32.totalorder 2, %s9
    // Predicated region
    $region37: #{discriminator_forward.4} parent=5 // pred_check
      %p2171 = pneg %p2170
    $region38: #{discriminator_forward.4} parent=5 // pred_check_branch
      %2173 = sbr.rel (%p2171) target = $region40
    $region39: #{discriminator_forward.4} parent=5 // pred_region
      %s2174 = ssub.s32 %s9, 2
      // Predicated region
      $region41: #{discriminator_forward.4} parent=39 // pred_check
        %p2175 = pneg %p106
      $region42: #{discriminator_forward.4} parent=39 // pred_check_branch
        %2177 = sbr.rel (%p2175) target = $region44
      $region43: #{discriminator_forward.4} parent=39 // pred_region
        %s2178 = smul.u32 128, %s15
        %p2179 = scmp.lt.s32.totalorder %s2178, 255
        %s2180 = scalar_select %p2179, %s2178, 255
        %s2181 = smul.addr %s2180, 4
        %s2182 = scalar_lea.vmem %s3, %s2181
      $region44: #{discriminator_forward.4} parent=39 // pred_fallthru
        _
    $region40: #{discriminator_forward.4} parent=5 // pred_fallthru
      _
  $region6: #{discriminator_forward.4} parent=0 // loop_footer
    %s13 = sadd.s32 1, %s9
  $region7: #{discriminator_forward.4} parent=0 // loop_footer_branch
    %8 = sbr.rel target = $region3
  $region8: #{discriminator_forward.4} parent=0 // loop_exit
    _

// kernel: discriminator_forward.5
$region0: #{discriminator_forward.5}
  #allocation0 [shape = 'u32[]', space=smem, size = 0x4, offset = 0x4, fixed_abs, tag = 'smem constant byte address 0x4 - core index']
  #allocation1 [shape = 'u32[144,128]{1,0:T(1,128)}', space=vmem, size = 0x12000, scoped, tag = 'internal scratch']
  %s0 = inlined_call_operand.vmem [shape: bf16[512,256], index: 0, kind: input, shape index: {}]
  %s1 = inlined_call_operand.vmem [shape: bf16[256,32], index: 1, kind: input, shape index: {}]
  %s2 = inlined_call_operand.vmem [shape: f32[1,32], index: 2, kind: input, shape index: {}]
  %s3 = inlined_call_operand.vmem [shape: bf16[512,32], index: 3, kind: output, shape index: {0}]
  %s4 = inlined_call_operand.vmem [shape: f32[1,2,32], index: 4, kind: output, shape index: {1}]
  %5 = xla_tuple %s3, %s4
  %s6 = sld [smem:[#allocation0]]
  $region30: #{discriminator_forward.5} parent=0
    _
  %s8 = ssub.s32 1, %s6
  %s9 = scalar_select 0, %s8, %s6
  // Predicated region
  $region2: #{discriminator_forward.5} parent=0 // pred_check
    _
  $region3: #{discriminator_forward.5} parent=0 // pred_check_branch
    %11 = sbr.rel (0) target = $region5
  $region4: #{discriminator_forward.5} parent=0 // pred_region
    _
  $region5: #{discriminator_forward.5} parent=0 // pred_fallthru
    _
  // Predicated region
  $region6: #{discriminator_forward.5} parent=0 // pred_check
    _
  $region7: #{discriminator_forward.5} parent=0 // pred_check_branch
    %13 = sbr.rel (0) target = $region9
  $region8: #{discriminator_forward.5} parent=0 // pred_region
    _
  $region9: #{discriminator_forward.5} parent=0 // pred_fallthru
    _
  // Predicated region
  $region10: #{discriminator_forward.5} parent=0 // pred_check
    _
  $region11: #{discriminator_forward.5} parent=0 // pred_check_branch
    %15 = sbr.rel (0) target = $region13
  $region12: #{discriminator_forward.5} parent=0 // pred_region
    _
  $region13: #{discriminator_forward.5} parent=0 // pred_fallthru
    _
  %v17 = vld [vmem:[%s0] sm:$0xff]
  %v18 = vld [vmem:[%s0 + $0x8] sm:$0xff]
  %v19 = vld [vmem:[%s0 + $0x10] sm:$0xff]
  %v20 = vld [vmem:[%s0 + $0x18] sm:$0xff]
  %v21 = vld [vmem:[%s0 + $0x20] sm:$0xff]
  %v22 = vld [vmem:[%s0 + $0x28] sm:$0xff]
  %v23 = vld [vmem:[%s0 + $0x30] sm:$0xff]
  %v24 = vld [vmem:[%s0 + $0x38] sm:$0xff]
  %v25 = vld [vmem:[%s0 + $0x40] sm:$0xff]
  %v26 = vld [vmem:[%s0 + $0x48] sm:$0xff]
  %v27 = vld [vmem:[%s0 + $0x50] sm:$0xff]
  %v28 = vld [vmem:[%s0 + $0x58] sm:$0xff]
  %v29 = vld [vmem:[%s0 + $0x60] sm:$0xff]
  %v30 = vld [vmem:[%s0 + $0x68] sm:$0xff]
  %v31 = vld [vmem:[%s0 + $0x70] sm:$0xff]
  %v32 = vld [vmem:[%s0 + $0x78] sm:$0xff]
  %v33 = vld [vmem:[%s0 + $0x80] sm:$0xff]
  %v34 = vld [vmem:[%s0 + $0x88] sm:$0xff]
  %v35 = vld [vmem:[%s0 + $0x90] sm:$0xff]
  %v36 = vld [vmem:[%s0 + $0x98] sm:$0xff]
  %v37 = vld [vmem:[%s0 + $0xa0] sm:$0xff]
  %v38 = vld [vmem:[%s0 + $0xa8] sm:$0xff]
  %v39 = vld [vmem:[%s0 + $0xb0] sm:$0xff]
  %v40 = vld [vmem:[%s0 + $0xb8] sm:$0xff]
  %v41 = vld [vmem:[%s0 + $0xc0] sm:$0xff]
  %v42 = vld [vmem:[%s0 + $0xc8] sm:$0xff]
  %v43 = vld [vmem:[%s0 + $0xd0] sm:$0xff]
  %v44 = vld [vmem:[%s0 + $0xd8] sm:$0xff]
  %v45 = vld [vmem:[%s0 + $0xe0] sm:$0xff]
  %v46 = vld [vmem:[%s0 + $0xe8] sm:$0xff]
  %v47 = vld [vmem:[%s0 + $0xf0] sm:$0xff]
  %v48 = vld [vmem:[%s0 + $0xf8] sm:$0xff]
  %v49 = vld [vmem:[%s0 + $0x100] sm:$0xff]
  %v50 = vld [vmem:[%s0 + $0x108] sm:$0xff]
  %v51 = vld [vmem:[%s0 + $0x110] sm:$0xff]
  %v52 = vld [vmem:[%s0 + $0x118] sm:$0xff]
  %v53 = vld [vmem:[%s0 + $0x120] sm:$0xff]
  %v54 = vld [vmem:[%s0 + $0x128] sm:$0xff]
  %v55 = vld [vmem:[%s0 + $0x130] sm:$0xff]
  %v56 = vld [vmem:[%s0 + $0x138] sm:$0xff]
  %v57 = vld [vmem:[%s0 + $0x140] sm:$0xff]
  %v58 = vld [vmem:[%s0 + $0x148] sm:$0xff]
  %v59 = vld [vmem:[%s0 + $0x150] sm:$0xff]
  %v60 = vld [vmem:[%s0 + $0x158] sm:$0xff]
  %v61 = vld [vmem:[%s0 + $0x160] sm:$0xff]
  %v62 = vld [vmem:[%s0 + $0x168] sm:$0xff]
  %v63 = vld [vmem:[%s0 + $0x170] sm:$0xff]
  %v64 = vld [vmem:[%s0 + $0x178] sm:$0xff]
  %v65 = vld [vmem:[%s0 + $0x180] sm:$0xff]
  %v66 = vld [vmem:[%s0 + $0x188] sm:$0xff]
  %v67 = vld [vmem:[%s0 + $0x190] sm:$0xff]
  %v68 = vld [vmem:[%s0 + $0x198] sm:$0xff]
  %v69 = vld [vmem:[%s0 + $0x1a0] sm:$0xff]
  %v70 = vld [vmem:[%s0 + $0x1a8] sm:$0xff]
  %v71 = vld [vmem:[%s0 + $0x1b0] sm:$0xff]
  %v72 = vld [vmem:[%s0 + $0x1b8] sm:$0xff]
  %v73 = vld [vmem:[%s0 + $0x1c0] sm:$0xff]
  %v74 = vld [vmem:[%s0 + $0x1c8] sm:$0xff]
  %v75 = vld [vmem:[%s0 + $0x1d0] sm:$0xff]
  %v76 = vld [vmem:[%s0 + $0x1d8] sm:$0xff]
  %v77 = vld [vmem:[%s0 + $0x1e0] sm:$0xff]
  %v78 = vld [vmem:[%s0 + $0x1e8] sm:$0xff]
  %v79 = vld [vmem:[%s0 + $0x1f0] sm:$0xff]
  %v80 = vld [vmem:[%s0 + $0x1f8] sm:$0xff]
  %v81 = vld [vmem:[%s1] sm:$0xf]
  %v82 = vld [vmem:[%s1 + $0x4] sm:$0xf]
  %v83 = vld [vmem:[%s1 + $0x8] sm:$0xf]
  %v84 = vld [vmem:[%s1 + $0xc] sm:$0xf]
  %v85 = vld [vmem:[%s1 + $0x10] sm:$0xf]
  %v86 = vld [vmem:[%s1 + $0x14] sm:$0xf]
  %v87 = vld [vmem:[%s1 + $0x18] sm:$0xf]
  %v88 = vld [vmem:[%s1 + $0x1c] sm:$0xf]
  %v89 = vld [vmem:[%s1 + $0x20] sm:$0xf]
  %v90 = vld [vmem:[%s1 + $0x24] sm:$0xf]
  %v91 = vld [vmem:[%s1 + $0x28] sm:$0xf]
  %v92 = vld [vmem:[%s1 + $0x2c] sm:$0xf]
  %v93 = vld [vmem:[%s1 + $0x30] sm:$0xf]
  %v94 = vld [vmem:[%s1 + $0x34] sm:$0xf]
  %v95 = vld [vmem:[%s1 + $0x38] sm:$0xf]
  %v96 = vld [vmem:[%s1 + $0x3c] sm:$0xf]
  %v97 = vld [vmem:[%s1 + $0x40] sm:$0xf]
  %v98 = vld [vmem:[%s1 + $0x44] sm:$0xf]
  %v99 = vld [vmem:[%s1 + $0x48] sm:$0xf]
  %v100 = vld [vmem:[%s1 + $0x4c] sm:$0xf]
  %v101 = vld [vmem:[%s1 + $0x50] sm:$0xf]
  %v102 = vld [vmem:[%s1 + $0x54] sm:$0xf]
  %v103 = vld [vmem:[%s1 + $0x58] sm:$0xf]
  %v104 = vld [vmem:[%s1 + $0x5c] sm:$0xf]
  %v105 = vld [vmem:[%s1 + $0x60] sm:$0xf]
  %v106 = vld [vmem:[%s1 + $0x64] sm:$0xf]
  %v107 = vld [vmem:[%s1 + $0x68] sm:$0xf]
  %v108 = vld [vmem:[%s1 + $0x6c] sm:$0xf]
  %v109 = vld [vmem:[%s1 + $0x70] sm:$0xf]
  %v110 = vld [vmem:[%s1 + $0x74] sm:$0xf]
  %v111 = vld [vmem:[%s1 + $0x78] sm:$0xf]
  %v112 = vld [vmem:[%s1 + $0x7c] sm:$0xf]
  %v113 = vld [vmem:[%s2] sm:$0x1]
  %v115 = vlaneseq
  %v116 = vshrl.u32 %v115, 7
  %v117 = vsub.s32 0, %v116
  %v118 = vrot.slane %v113, %v117
  %v184 = vunpack.c.l.b16 %v17
  %v185 = vunpack.c.h.b16 %v17
  %v186 = vunpack.c.l.b16 %v18
  %v187 = vunpack.c.h.b16 %v18
  %v188 = vunpack.c.l.b16 %v19
  %v189 = vunpack.c.h.b16 %v19
  %v190 = vunpack.c.l.b16 %v20
  %v191 = vunpack.c.h.b16 %v20
  %v192 = vunpack.c.l.b16 %v21
  %v193 = vunpack.c.h.b16 %v21
  %v194 = vunpack.c.l.b16 %v22
  %v195 = vunpack.c.h.b16 %v22
  %v196 = vunpack.c.l.b16 %v23
  %v197 = vunpack.c.h.b16 %v23
  %v198 = vunpack.c.l.b16 %v24
  %v199 = vunpack.c.h.b16 %v24
  %v200 = vunpack.c.l.b16 %v25
  %v201 = vunpack.c.h.b16 %v25
  %v202 = vunpack.c.l.b16 %v26
  %v203 = vunpack.c.h.b16 %v26
  %v204 = vunpack.c.l.b16 %v27
  %v205 = vunpack.c.h.b16 %v27
  %v206 = vunpack.c.l.b16 %v28
  %v207 = vunpack.c.h.b16 %v28
  %v208 = vunpack.c.l.b16 %v29
  %v209 = vunpack.c.h.b16 %v29
  %v210 = vunpack.c.l.b16 %v30
  %v211 = vunpack.c.h.b16 %v30
  %v212 = vunpack.c.l.b16 %v31
  %v213 = vunpack.c.h.b16 %v31
  %v214 = vunpack.c.l.b16 %v32
  %v215 = vunpack.c.h.b16 %v32
  %v216 = vunpack.c.l.b16 %v33
  %v217 = vunpack.c.h.b16 %v33
  %v218 = vunpack.c.l.b16 %v34
  %v219 = vunpack.c.h.b16 %v34
  %v220 = vunpack.c.l.b16 %v35
  %v221 = vunpack.c.h.b16 %v35
  %v222 = vunpack.c.l.b16 %v36
  %v223 = vunpack.c.h.b16 %v36
  %v224 = vunpack.c.l.b16 %v37
  %v225 = vunpack.c.h.b16 %v37
  %v226 = vunpack.c.l.b16 %v38
  %v227 = vunpack.c.h.b16 %v38
  %v228 = vunpack.c.l.b16 %v39
  %v229 = vunpack.c.h.b16 %v39
  %v230 = vunpack.c.l.b16 %v40
  %v231 = vunpack.c.h.b16 %v40
  %v232 = vunpack.c.l.b16 %v41
  %v233 = vunpack.c.h.b16 %v41
  %v234 = vunpack.c.l.b16 %v42
  %v235 = vunpack.c.h.b16 %v42
  %v236 = vunpack.c.l.b16 %v43
  %v237 = vunpack.c.h.b16 %v43
  %v238 = vunpack.c.l.b16 %v44
  %v239 = vunpack.c.h.b16 %v44
  %v240 = vunpack.c.l.b16 %v45
  %v241 = vunpack.c.h.b16 %v45
  %v242 = vunpack.c.l.b16 %v46
  %v243 = vunpack.c.h.b16 %v46
  %v244 = vunpack.c.l.b16 %v47
  %v245 = vunpack.c.h.b16 %v47
  %v246 = vunpack.c.l.b16 %v48
  %v247 = vunpack.c.h.b16 %v48
  %v248 = vunpack.c.l.b16 %v49
  %v249 = vunpack.c.h.b16 %v49
  %v250 = vunpack.c.l.b16 %v50
  %v251 = vunpack.c.h.b16 %v50
  %v252 = vunpack.c.l.b16 %v51
  %v253 = vunpack.c.h.b16 %v51
  %v254 = vunpack.c.l.b16 %v52
  %v255 = vunpack.c.h.b16 %v52
  %v256 = vunpack.c.l.b16 %v53
  %v257 = vunpack.c.h.b16 %v53
  %v258 = vunpack.c.l.b16 %v54
  %v259 = vunpack.c.h.b16 %v54
  %v260 = vunpack.c.l.b16 %v55
  %v261 = vunpack.c.h.b16 %v55
  %v262 = vunpack.c.l.b16 %v56
  %v263 = vunpack.c.h.b16 %v56
  %v264 = vunpack.c.l.b16 %v57
  %v265 = vunpack.c.h.b16 %v57
  %v266 = vunpack.c.l.b16 %v58
  %v267 = vunpack.c.h.b16 %v58
  %v268 = vunpack.c.l.b16 %v59
  %v269 = vunpack.c.h.b16 %v59
  %v270 = vunpack.c.l.b16 %v60
  %v271 = vunpack.c.h.b16 %v60
  %v272 = vunpack.c.l.b16 %v61
  %v273 = vunpack.c.h.b16 %v61
  %v274 = vunpack.c.l.b16 %v62
  %v275 = vunpack.c.h.b16 %v62
  %v276 = vunpack.c.l.b16 %v63
  %v277 = vunpack.c.h.b16 %v63
  %v278 = vunpack.c.l.b16 %v64
  %v279 = vunpack.c.h.b16 %v64
  %v280 = vunpack.c.l.b16 %v65
  %v281 = vunpack.c.h.b16 %v65
  %v282 = vunpack.c.l.b16 %v66
  %v283 = vunpack.c.h.b16 %v66
  %v284 = vunpack.c.l.b16 %v67
  %v285 = vunpack.c.h.b16 %v67
  %v286 = vunpack.c.l.b16 %v68
  %v287 = vunpack.c.h.b16 %v68
  %v288 = vunpack.c.l.b16 %v69
  %v289 = vunpack.c.h.b16 %v69
  %v290 = vunpack.c.l.b16 %v70
  %v291 = vunpack.c.h.b16 %v70
  %v292 = vunpack.c.l.b16 %v71
  %v293 = vunpack.c.h.b16 %v71
  %v294 = vunpack.c.l.b16 %v72
  %v295 = vunpack.c.h.b16 %v72
  %v296 = vunpack.c.l.b16 %v73
  %v297 = vunpack.c.h.b16 %v73
  %v298 = vunpack.c.l.b16 %v74
  %v299 = vunpack.c.h.b16 %v74
  %v300 = vunpack.c.l.b16 %v75
  %v301 = vunpack.c.h.b16 %v75
  %v302 = vunpack.c.l.b16 %v76
  %v303 = vunpack.c.h.b16 %v76
  %v304 = vunpack.c.l.b16 %v77
  %v305 = vunpack.c.h.b16 %v77
  %v306 = vunpack.c.l.b16 %v78
  %v307 = vunpack.c.h.b16 %v78
  %v308 = vunpack.c.l.b16 %v79
  %v309 = vunpack.c.h.b16 %v79
  %v310 = vunpack.c.l.b16 %v80
  %v311 = vunpack.c.h.b16 %v80
  %v312 = vpack.c.b16 %v186, %v184
  %v313 = vpack.c.b16 %v187, %v185
  %v314 = vpack.c.b16 %v190, %v188
  %v315 = vpack.c.b16 %v191, %v189
  %v316 = vpack.c.b16 %v194, %v192
  %v317 = vpack.c.b16 %v195, %v193
  %v318 = vpack.c.b16 %v198, %v196
  %v319 = vpack.c.b16 %v199, %v197
  %v320 = vpack.c.b16 %v202, %v200
  %v321 = vpack.c.b16 %v203, %v201
  %v322 = vpack.c.b16 %v206, %v204
  %v323 = vpack.c.b16 %v207, %v205
  %v324 = vpack.c.b16 %v210, %v208
  %v325 = vpack.c.b16 %v211, %v209
  %v326 = vpack.c.b16 %v214, %v212
  %v327 = vpack.c.b16 %v215, %v213
  %v328 = vpack.c.b16 %v218, %v216
  %v329 = vpack.c.b16 %v219, %v217
  %v330 = vpack.c.b16 %v222, %v220
  %v331 = vpack.c.b16 %v223, %v221
  %v332 = vpack.c.b16 %v226, %v224
  %v333 = vpack.c.b16 %v227, %v225
  %v334 = vpack.c.b16 %v230, %v228
  %v335 = vpack.c.b16 %v231, %v229
  %v336 = vpack.c.b16 %v234, %v232
  %v337 = vpack.c.b16 %v235, %v233
  %v338 = vpack.c.b16 %v238, %v236
  %v339 = vpack.c.b16 %v239, %v237
  %v340 = vpack.c.b16 %v242, %v240
  %v341 = vpack.c.b16 %v243, %v241
  %v342 = vpack.c.b16 %v246, %v244
  %v343 = vpack.c.b16 %v247, %v245
  %v344 = vpack.c.b16 %v250, %v248
  %v345 = vpack.c.b16 %v251, %v249
  %v346 = vpack.c.b16 %v254, %v252
  %v347 = vpack.c.b16 %v255, %v253
  %v348 = vpack.c.b16 %v258, %v256
  %v349 = vpack.c.b16 %v259, %v257
  %v350 = vpack.c.b16 %v262, %v260
  %v351 = vpack.c.b16 %v263, %v261
  %v352 = vpack.c.b16 %v266, %v264
  %v353 = vpack.c.b16 %v267, %v265
  %v354 = vpack.c.b16 %v270, %v268
  %v355 = vpack.c.b16 %v271, %v269
  %v356 = vpack.c.b16 %v274, %v272
  %v357 = vpack.c.b16 %v275, %v273
  %v358 = vpack.c.b16 %v278, %v276
  %v359 = vpack.c.b16 %v279, %v277
  %v360 = vpack.c.b16 %v282, %v280
  %v361 = vpack.c.b16 %v283, %v281
  %v362 = vpack.c.b16 %v286, %v284
  %v363 = vpack.c.b16 %v287, %v285
  %v364 = vpack.c.b16 %v290, %v288
  %v365 = vpack.c.b16 %v291, %v289
  %v366 = vpack.c.b16 %v294, %v292
  %v367 = vpack.c.b16 %v295, %v293
  %v368 = vpack.c.b16 %v298, %v296
  %v369 = vpack.c.b16 %v299, %v297
  %v370 = vpack.c.b16 %v302, %v300
  %v371 = vpack.c.b16 %v303, %v301
  %v372 = vpack.c.b16 %v306, %v304
  %v373 = vpack.c.b16 %v307, %v305
  %v374 = vpack.c.b16 %v310, %v308
  %v375 = vpack.c.b16 %v311, %v309
  %v472 = vunpack.c.l.b16 %v81
  %v473 = vunpack.c.l.b16 %v82
  %v474 = vunpack.c.l.b16 %v83
  %v475 = vunpack.c.l.b16 %v84
  %v476 = vunpack.c.l.b16 %v85
  %v477 = vunpack.c.l.b16 %v86
  %v478 = vunpack.c.l.b16 %v87
  %v479 = vunpack.c.l.b16 %v88
  %v480 = vunpack.c.l.b16 %v89
  %v481 = vunpack.c.l.b16 %v90
  %v482 = vunpack.c.l.b16 %v91
  %v483 = vunpack.c.l.b16 %v92
  %v484 = vunpack.c.l.b16 %v93
  %v485 = vunpack.c.l.b16 %v94
  %v486 = vunpack.c.l.b16 %v95
  %v487 = vunpack.c.l.b16 %v96
  %v488 = vunpack.c.l.b16 %v97
  %v489 = vunpack.c.l.b16 %v98
  %v490 = vunpack.c.l.b16 %v99
  %v491 = vunpack.c.l.b16 %v100
  %v492 = vunpack.c.l.b16 %v101
  %v493 = vunpack.c.l.b16 %v102
  %v494 = vunpack.c.l.b16 %v103
  %v495 = vunpack.c.l.b16 %v104
  %v496 = vunpack.c.l.b16 %v105
  %v497 = vunpack.c.l.b16 %v106
  %v498 = vunpack.c.l.b16 %v107
  %v499 = vunpack.c.l.b16 %v108
  %v500 = vunpack.c.l.b16 %v109
  %v501 = vunpack.c.l.b16 %v110
  %v502 = vunpack.c.l.b16 %v111
  %v503 = vunpack.c.l.b16 %v112
  %v504 = vpack.c.b16 %v473, %v472
  %v505 = vpack.c.b16 %v475, %v474
  %v506 = vpack.c.b16 %v477, %v476
  %v507 = vpack.c.b16 %v479, %v478
  %v508 = vpack.c.b16 %v481, %v480
  %v509 = vpack.c.b16 %v483, %v482
  %v510 = vpack.c.b16 %v485, %v484
  %v511 = vpack.c.b16 %v487, %v486
  %v512 = vpack.c.b16 %v489, %v488
  %v513 = vpack.c.b16 %v491, %v490
  %v514 = vpack.c.b16 %v493, %v492
  %v515 = vpack.c.b16 %v495, %v494
  %v516 = vpack.c.b16 %v497, %v496
  %v517 = vpack.c.b16 %v499, %v498
  %v518 = vpack.c.b16 %v501, %v500
  %v519 = vpack.c.b16 %v503, %v502
  %536 = vmatprep.subr.bf16.mxu0 0
  %537 = vmatpush1.bf16.msra.mxu0 %v504
  %538 = vmatprep.subr.bf16.mxu0 0
  %539 = vmatpush1.bf16.msra.mxu0 %v505
  %540 = vmatprep.subr.bf16.mxu0 0
  %541 = vmatpush1.bf16.msra.mxu0 %v506
  %542 = vmatprep.subr.bf16.mxu0 0
  %543 = vmatpush1.bf16.msra.mxu0 %v507
  %544 = vmatprep.subr.bf16.mxu0 0
  %545 = vmatpush1.bf16.msra.mxu0 %v508
  %546 = vmatprep.subr.bf16.mxu0 0
  %547 = vmatpush1.bf16.msra.mxu0 %v509
  %548 = vmatprep.subr.bf16.mxu0 0
  %549 = vmatpush1.bf16.msra.mxu0 %v510
  %550 = vmatprep.subr.bf16.mxu0 0
  %551 = vmatpush1.bf16.msra.mxu0 %v511
  %552 = vmatprep.subr.bf16.mxu0 0
  %553 = vmatpush1.bf16.msra.mxu0 %v512
  %554 = vmatprep.subr.bf16.mxu0 0
  %555 = vmatpush1.bf16.msra.mxu0 %v513
  %556 = vmatprep.subr.bf16.mxu0 0
  %557 = vmatpush1.bf16.msra.mxu0 %v514
  %558 = vmatprep.subr.bf16.mxu0 0
  %559 = vmatpush1.bf16.msra.mxu0 %v515
  %560 = vmatprep.subr.bf16.mxu0 0
  %561 = vmatpush1.bf16.msra.mxu0 %v516
  %562 = vmatprep.subr.bf16.mxu0 0
  %563 = vmatpush1.bf16.msra.mxu0 %v517
  %564 = vmatprep.subr.bf16.mxu0 0
  %565 = vmatpush1.bf16.msra.mxu0 %v518
  %566 = vmatprep.subr.bf16.mxu0 0
  %567 = vmatpush1.bf16.msra.mxu0 %v519
  %568 = vmatprep.mubr.bf16.mxu0 %v313
  %569 = vmatmul.mubr.bf16.gmra.mrb[0].mxu0 %v312
  %v570 = vpop.f32.mrb[0].mxu0
  %v571 = vadd.f32 %v118, %v570
  %v572 = vpop.f32.mrb[0].mxu0
  %v573 = vpop.f32.mrb[0].mxu0
  %v574 = vadd.f32 %v118, %v573
  %v575 = vpop.f32.mrb[0].mxu0
  %576 = vmatprep.mubr.bf16.mxu0 %v315
  %577 = vmatmul.mubr.bf16.gmra.mrb[0].mxu0 %v314
  %v578 = vpop.f32.mrb[0].mxu0
  %v579 = vadd.f32 %v118, %v578
  %v580 = vpop.f32.mrb[0].mxu0
  %v581 = vpop.f32.mrb[0].mxu0
  %v582 = vadd.f32 %v118, %v581
  %v583 = vpop.f32.mrb[0].mxu0
  %584 = vmatprep.mubr.bf16.mxu0 %v317
  %585 = vmatmul.mubr.bf16.gmra.mrb[0].mxu0 %v316
  %v586 = vpop.f32.mrb[0].mxu0
  %v587 = vadd.f32 %v118, %v586
  %v588 = vpop.f32.mrb[0].mxu0
  %v589 = vpop.f32.mrb[0].mxu0
  %v590 = vadd.f32 %v118, %v589
  %v591 = vpop.f32.mrb[0].mxu0
  %592 = vmatprep.mubr.bf16.mxu0 %v319
  %593 = vmatmul.mubr.bf16.gmra.mrb[0].mxu0 %v318
  %v594 = vpop.f32.mrb[0].mxu0
  %v595 = vadd.f32 %v118, %v594
  %v596 = vpop.f32.mrb[0].mxu0
  %v597 = vpop.f32.mrb[0].mxu0
  %v598 = vadd.f32 %v118, %v597
  %v599 = vpop.f32.mrb[0].mxu0
  %600 = vmatprep.mubr.bf16.mxu0 %v321
  %601 = vmatmul.mubr.bf16.gmra.mrb[0].mxu0 %v320
  %v602 = vpop.f32.mrb[0].mxu0
  %v603 = vadd.f32 %v118, %v602
  %v604 = vpop.f32.mrb[0].mxu0
  %v605 = vpop.f32.mrb[0].mxu0
  %v606 = vadd.f32 %v118, %v605
  %v607 = vpop.f32.mrb[0].mxu0
  %608 = vmatprep.mubr.bf16.mxu0 %v323
  %609 = vmatmul.mubr.bf16.gmra.mrb[0].mxu0 %v322
  %v610 = vpop.f32.mrb[0].mxu0
  %v611 = vadd.f32 %v118, %v610
  %v612 = vpop.f32.mrb[0].mxu0
  %v613 = vpop.f32.mrb[0].mxu0
  %v614 = vadd.f32 %v118, %v613
  %v615 = vpop.f32.mrb[0].mxu0
  %616 = vmatprep.mubr.bf16.mxu0 %v325
  %617 = vmatmul.mubr.bf16.gmra.mrb[0].mxu0 %v324
  %v618 = vpop.f32.mrb[0].mxu0
  %v619 = vadd.f32 %v118, %v618
  %v620 = vpop.f32.mrb[0].mxu0
  %v621 = vpop.f32.mrb[0].mxu0
  %v622 = vadd.f32 %v118, %v621
  %v623 = vpop.f32.mrb[0].mxu0
  %624 = vmatprep.mubr.bf16.mxu0 %v327
  %625 = vmatmul.mubr.bf16.gmra.mrb[0].mxu0 %v326
  %v626 = vpop.f32.mrb[0].mxu0
  %v627 = vadd.f32 %v118, %v626
  %v628 = vpop.f32.mrb[0].mxu0
  %v629 = vpop.f32.mrb[0].mxu0
  %v630 = vadd.f32 %v118, %v629
  %v631 = vpop.f32.mrb[0].mxu0
  %632 = vmatprep.mubr.bf16.mxu0 %v329
  %633 = vmatmul.mubr.bf16.gmra.mrb[0].mxu0 %v328
  %v634 = vpop.f32.mrb[0].mxu0
  %v635 = vadd.f32 %v118, %v634
  %v636 = vpop.f32.mrb[0].mxu0
  %v637 = vpop.f32.mrb[0].mxu0
  %v638 = vadd.f32 %v118, %v637
  %v639 = vpop.f32.mrb[0].mxu0
  %640 = vmatprep.mubr.bf16.mxu0 %v331
  %641 = vmatmul.mubr.bf16.gmra.mrb[0].mxu0 %v330
  %v642 = vpop.f32.mrb[0].mxu0
  %v643 = vadd.f32 %v118, %v642
  %v644 = vpop.f32.mrb[0].mxu0
  %v645 = vpop.f32.mrb[0].mxu0
  %v646 = vadd.f32 %v118, %v645
  %v647 = vpop.f32.mrb[0].mxu0
  %648 = vmatprep.mubr.bf16.mxu0 %v333
  %649 = vmatmul.mubr.bf16.gmra.mrb[0].mxu0 %v332
  %v650 = vpop.f32.mrb[0].mxu0
  %v651 = vadd.f32 %v118, %v650
  %v652 = vpop.f32.mrb[0].mxu0
  %v653 = vpop.f32.mrb[0].mxu0
  %v654 = vadd.f32 %v118, %v653
  %v655 = vpop.f32.mrb[0].mxu0
  %656 = vmatprep.mubr.bf16.mxu0 %v335
  %657 = vmatmul.mubr.bf16.gmra.mrb[0].mxu0 %v334
  %v658 = vpop.f32.mrb[0].mxu0
  %v659 = vadd.f32 %v118, %v658
  %v660 = vpop.f32.mrb[0].mxu0
  %v661 = vpop.f32.mrb[0].mxu0
  %v662 = vadd.f32 %v118, %v661
  %v663 = vpop.f32.mrb[0].mxu0
  %664 = vmatprep.mubr.bf16.mxu0 %v337
  %665 = vmatmul.mubr.bf16.gmra.mrb[0].mxu0 %v336
  %v666 = vpop.f32.mrb[0].mxu0
  %v667 = vadd.f32 %v118, %v666
  %v668 = vpop.f32.mrb[0].mxu0
  %v669 = vpop.f32.mrb[0].mxu0
  %v670 = vadd.f32 %v118, %v669
  %v671 = vpop.f32.mrb[0].mxu0
  %672 = vmatprep.mubr.bf16.mxu0 %v339
  %673 = vmatmul.mubr.bf16.gmra.mrb[0].mxu0 %v338
  %v674 = vpop.f32.mrb[0].mxu0
  %v675 = vadd.f32 %v118, %v674
  %v676 = vpop.f32.mrb[0].mxu0
  %v677 = vpop.f32.mrb[0].mxu0
  %v678 = vadd.f32 %v118, %v677
  %v679 = vpop.f32.mrb[0].mxu0
  %680 = vmatprep.mubr.bf16.mxu0 %v341
  %681 = vmatmul.mubr.bf16.gmra.mrb[0].mxu0 %v340
  %v682 = vpop.f32.mrb[0].mxu0
  %v683 = vadd.f32 %v118, %v682
  %v684 = vpop.f32.mrb[0].mxu0
  %v685 = vpop.f32.mrb[0].mxu0
  %v686 = vadd.f32 %v118, %v685
  %v687 = vpop.f32.mrb[0].mxu0
  %688 = vmatprep.mubr.bf16.mxu0 %v343
  %689 = vmatmul.mubr.bf16.gmra.mrb[0].mxu0 %v342
  %v690 = vpop.f32.mrb[0].mxu0
  %v691 = vadd.f32 %v118, %v690
  %v692 = vpop.f32.mrb[0].mxu0
  %v693 = vpop.f32.mrb[0].mxu0
  %v694 = vadd.f32 %v118, %v693
  %v695 = vpop.f32.mrb[0].mxu0
  %696 = vmatprep.mubr.bf16.mxu0 %v345
  %697 = vmatmul.mubr.bf16.gmra.mrb[0].mxu0 %v344
  %v698 = vpop.f32.mrb[0].mxu0
  %v699 = vadd.f32 %v118, %v698
  %v700 = vpop.f32.mrb[0].mxu0
  %v701 = vpop.f32.mrb[0].mxu0
  %v702 = vadd.f32 %v118, %v701
  %v703 = vpop.f32.mrb[0].mxu0
  %704 = vmatprep.mubr.bf16.mxu0 %v347
  %705 = vmatmul.mubr.bf16.gmra.mrb[0].mxu0 %v346
  %v706 = vpop.f32.mrb[0].mxu0
  %v707 = vadd.f32 %v118, %v706
  %v708 = vpop.f32.mrb[0].mxu0
  %v709 = vpop.f32.mrb[0].mxu0
  %v710 = vadd.f32 %v118, %v709
  %v711 = vpop.f32.mrb[0].mxu0
  %712 = vmatprep.mubr.bf16.mxu0 %v349
  %713 = vmatmul.mubr.bf16.gmra.mrb[0].mxu0 %v348
  %v714 = vpop.f32.mrb[0].mxu0
  %v715 = vadd.f32 %v118, %v714
  %v716 = vpop.f32.mrb[0].mxu0
  %v717 = vpop.f32.mrb[0].mxu0
  %v718 = vadd.f32 %v118, %v717
  %v719 = vpop.f32.mrb[0].mxu0
  %720 = vmatprep.mubr.bf16.mxu0 %v351
  %721 = vmatmul.mubr.bf16.gmra.mrb[0].mxu0 %v350
  %v722 = vpop.f32.mrb[0].mxu0
  %v723 = vadd.f32 %v118, %v722
  %v724 = vpop.f32.mrb[0].mxu0
  %v725 = vpop.f32.mrb[0].mxu0
  %v726 = vadd.f32 %v118, %v725
  %v727 = vpop.f32.mrb[0].mxu0
  %728 = vmatprep.mubr.bf16.mxu0 %v353
  %729 = vmatmul.mubr.bf16.gmra.mrb[0].mxu0 %v352
  %v730 = vpop.f32.mrb[0].mxu0
  %v731 = vadd.f32 %v118, %v730
  %v732 = vpop.f32.mrb[0].mxu0
  %v733 = vpop.f32.mrb[0].mxu0
  %v734 = vadd.f32 %v118, %v733
  %v735 = vpop.f32.mrb[0].mxu0
  %736 = vmatprep.mubr.bf16.mxu0 %v355
  %737 = vmatmul.mubr.bf16.gmra.mrb[0].mxu0 %v354
  %v738 = vpop.f32.mrb[0].mxu0
  %v739 = vadd.f32 %v118, %v738
  %v740 = vpop.f32.mrb[0].mxu0
  %v741 = vpop.f32.mrb[0].mxu0
  %v742 = vadd.f32 %v118, %v741
  %v743 = vpop.f32.mrb[0].mxu0
  %744 = vmatprep.mubr.bf16.mxu0 %v357
  %745 = vmatmul.mubr.bf16.gmra.mrb[0].mxu0 %v356
  %v746 = vpop.f32.mrb[0].mxu0
  %v747 = vadd.f32 %v118, %v746
  %v748 = vpop.f32.mrb[0].mxu0
  %v749 = vpop.f32.mrb[0].mxu0
  %v750 = vadd.f32 %v118, %v749
  %v751 = vpop.f32.mrb[0].mxu0
  %752 = vmatprep.mubr.bf16.mxu0 %v359
  %753 = vmatmul.mubr.bf16.gmra.mrb[0].mxu0 %v358
  %v754 = vpop.f32.mrb[0].mxu0
  %v755 = vadd.f32 %v118, %v754
  %v756 = vpop.f32.mrb[0].mxu0
  %v757 = vpop.f32.mrb[0].mxu0
  %v758 = vadd.f32 %v118, %v757
  %v759 = vpop.f32.mrb[0].mxu0
  %760 = vmatprep.mubr.bf16.mxu0 %v361
  %761 = vmatmul.mubr.bf16.gmra.mrb[0].mxu0 %v360
  %v762 = vpop.f32.mrb[0].mxu0
  %v763 = vadd.f32 %v118, %v762
  %v764 = vpop.f32.mrb[0].mxu0
  %v765 = vpop.f32.mrb[0].mxu0
  %v766 = vadd.f32 %v118, %v765
  %v767 = vpop.f32.mrb[0].mxu0
  %768 = vmatprep.mubr.bf16.mxu0 %v363
  %769 = vmatmul.mubr.bf16.gmra.mrb[0].mxu0 %v362
  %v770 = vpop.f32.mrb[0].mxu0
  %v771 = vadd.f32 %v118, %v770
  %v772 = vpop.f32.mrb[0].mxu0
  %v773 = vpop.f32.mrb[0].mxu0
  %v774 = vadd.f32 %v118, %v773
  %v775 = vpop.f32.mrb[0].mxu0
  %776 = vmatprep.mubr.bf16.mxu0 %v365
  %777 = vmatmul.mubr.bf16.gmra.mrb[0].mxu0 %v364
  %v778 = vpop.f32.mrb[0].mxu0
  %v779 = vadd.f32 %v118, %v778
  %v780 = vpop.f32.mrb[0].mxu0
  %v781 = vpop.f32.mrb[0].mxu0
  %v782 = vadd.f32 %v118, %v781
  %v783 = vpop.f32.mrb[0].mxu0
  %784 = vmatprep.mubr.bf16.mxu0 %v367
  %785 = vmatmul.mubr.bf16.gmra.mrb[0].mxu0 %v366
  %v786 = vpop.f32.mrb[0].mxu0
  %v787 = vadd.f32 %v118, %v786
  %v788 = vpop.f32.mrb[0].mxu0
  %v789 = vpop.f32.mrb[0].mxu0
  %v790 = vadd.f32 %v118, %v789
  %v791 = vpop.f32.mrb[0].mxu0
  %792 = vmatprep.mubr.bf16.mxu0 %v369
  %793 = vmatmul.mubr.bf16.gmra.mrb[0].mxu0 %v368
  %v794 = vpop.f32.mrb[0].mxu0
  %v795 = vadd.f32 %v118, %v794
  %v796 = vpop.f32.mrb[0].mxu0
  %v797 = vpop.f32.mrb[0].mxu0
  %v798 = vadd.f32 %v118, %v797
  %v799 = vpop.f32.mrb[0].mxu0
  %800 = vmatprep.mubr.bf16.mxu0 %v371
  %801 = vmatmul.mubr.bf16.gmra.mrb[0].mxu0 %v370
  %v802 = vpop.f32.mrb[0].mxu0
  %v803 = vadd.f32 %v118, %v802
  %v804 = vpop.f32.mrb[0].mxu0
  %v805 = vpop.f32.mrb[0].mxu0
  %v806 = vadd.f32 %v118, %v805
  %v807 = vpop.f32.mrb[0].mxu0
  %808 = vmatprep.mubr.bf16.mxu0 %v373
  %809 = vmatmul.mubr.bf16.gmra.mrb[0].mxu0 %v372
  %v810 = vpop.f32.mrb[0].mxu0
  %v811 = vadd.f32 %v118, %v810
  %v812 = vpop.f32.mrb[0].mxu0
  %v813 = vpop.f32.mrb[0].mxu0
  %v814 = vadd.f32 %v118, %v813
  %v815 = vpop.f32.mrb[0].mxu0
  %816 = vmatprep.mubr.bf16.mxu0 %v375
  %817 = vmatmul.mubr.bf16.gmra.mrb[0].mxu0 %v374
  %v818 = vpop.f32.mrb[0].mxu0
  %v819 = vadd.f32 %v118, %v818
  %v820 = vpop.f32.mrb[0].mxu0
  %v821 = vpop.f32.mrb[0].mxu0
  %v822 = vadd.f32 %v118, %v821
  %v823 = vpop.f32.mrb[0].mxu0
  %824 = vdwg.mxu0
  %vm825 = vcmask 261120
  %v826 = vsel %vm825, %v571, 0.0
  %v827 = vsel %vm825, %v574, 0.0
  %v828 = vadd.f32 %v826, %v827
  %v829 = vsel %vm825, %v579, 0.0
  %v830 = vadd.f32 %v828, %v829
  %v831 = vsel %vm825, %v582, 0.0
  %v832 = vadd.f32 %v830, %v831
  %v833 = vsel %vm825, %v587, 0.0
  %v834 = vadd.f32 %v832, %v833
  %v835 = vsel %vm825, %v590, 0.0
  %v836 = vadd.f32 %v834, %v835
  %v837 = vsel %vm825, %v595, 0.0
  %v838 = vadd.f32 %v836, %v837
  %v839 = vsel %vm825, %v598, 0.0
  %v840 = vadd.f32 %v838, %v839
  %v841 = vsel %vm825, %v603, 0.0
  %v842 = vadd.f32 %v840, %v841
  %v843 = vsel %vm825, %v606, 0.0
  %v844 = vadd.f32 %v842, %v843
  %v845 = vsel %vm825, %v611, 0.0
  %v846 = vadd.f32 %v844, %v845
  %v847 = vsel %vm825, %v614, 0.0
  %v848 = vadd.f32 %v846, %v847
  %v849 = vsel %vm825, %v619, 0.0
  %v850 = vadd.f32 %v848, %v849
  %v851 = vsel %vm825, %v622, 0.0
  %v852 = vadd.f32 %v850, %v851
  %v853 = vsel %vm825, %v627, 0.0
  %v854 = vadd.f32 %v852, %v853
  %v855 = vsel %vm825, %v630, 0.0
  %v856 = vadd.f32 %v854, %v855
  %v857 = vsel %vm825, %v635, 0.0
  %v858 = vadd.f32 %v856, %v857
  %v859 = vsel %vm825, %v638, 0.0
  %v860 = vadd.f32 %v858, %v859
  %v861 = vsel %vm825, %v643, 0.0
  %v862 = vadd.f32 %v860, %v861
  %v863 = vsel %vm825, %v646, 0.0
  %v864 = vadd.f32 %v862, %v863
  %v865 = vsel %vm825, %v651, 0.0
  %v866 = vadd.f32 %v864, %v865
  %v867 = vsel %vm825, %v654, 0.0
  %v868 = vadd.f32 %v866, %v867
  %v869 = vsel %vm825, %v659, 0.0
  %v870 = vadd.f32 %v868, %v869
  %v871 = vsel %vm825, %v662, 0.0
  %v872 = vadd.f32 %v870, %v871
  %v873 = vsel %vm825, %v667, 0.0
  %v874 = vadd.f32 %v872, %v873
  %v875 = vsel %vm825, %v670, 0.0
  %v876 = vadd.f32 %v874, %v875
  %v877 = vsel %vm825, %v675, 0.0
  %v878 = vadd.f32 %v876, %v877
  %v879 = vsel %vm825, %v678, 0.0
  %v880 = vadd.f32 %v878, %v879
  %v881 = vsel %vm825, %v683, 0.0
  %v882 = vadd.f32 %v880, %v881
  %v883 = vsel %vm825, %v686, 0.0
  %v884 = vadd.f32 %v882, %v883
  %v885 = vsel %vm825, %v691, 0.0
  %v886 = vadd.f32 %v884, %v885
  %v887 = vsel %vm825, %v694, 0.0
  %v888 = vadd.f32 %v886, %v887
  %v889 = vsel %vm825, %v699, 0.0
  %v890 = vadd.f32 %v888, %v889
  %v891 = vsel %vm825, %v702, 0.0
  %v892 = vadd.f32 %v890, %v891
  %v893 = vsel %vm825, %v707, 0.0
  %v894 = vadd.f32 %v892, %v893
  %v895 = vsel %vm825, %v710, 0.0
  %v896 = vadd.f32 %v894, %v895
  %v897 = vsel %vm825, %v715, 0.0
  %v898 = vadd.f32 %v896, %v897
  %v899 = vsel %vm825, %v718, 0.0
  %v900 = vadd.f32 %v898, %v899
  %v901 = vsel %vm825, %v723, 0.0
  %v902 = vadd.f32 %v900, %v901
  %v903 = vsel %vm825, %v726, 0.0
  %v904 = vadd.f32 %v902, %v903
  %v905 = vsel %vm825, %v731, 0.0
  %v906 = vadd.f32 %v904, %v905
  %v907 = vsel %vm825, %v734, 0.0
  %v908 = vadd.f32 %v906, %v907
  %v909 = vsel %vm825, %v739, 0.0
  %v910 = vadd.f32 %v908, %v909
  %v911 = vsel %vm825, %v742, 0.0
  %v912 = vadd.f32 %v910, %v911
  %v913 = vsel %vm825, %v747, 0.0
  %v914 = vadd.f32 %v912, %v913
  %v915 = vsel %vm825, %v750, 0.0
  %v916 = vadd.f32 %v914, %v915
  %v917 = vsel %vm825, %v755, 0.0
  %v918 = vadd.f32 %v916, %v917
  %v919 = vsel %vm825, %v758, 0.0
  %v920 = vadd.f32 %v918, %v919
  %v921 = vsel %vm825, %v763, 0.0
  %v922 = vadd.f32 %v920, %v921
  %v923 = vsel %vm825, %v766, 0.0
  %v924 = vadd.f32 %v922, %v923
  %v925 = vsel %vm825, %v771, 0.0
  %v926 = vadd.f32 %v924, %v925
  %v927 = vsel %vm825, %v774, 0.0
  %v928 = vadd.f32 %v926, %v927
  %v929 = vsel %vm825, %v779, 0.0
  %v930 = vadd.f32 %v928, %v929
  %v931 = vsel %vm825, %v782, 0.0
  %v932 = vadd.f32 %v930, %v931
  %v933 = vsel %vm825, %v787, 0.0
  %v934 = vadd.f32 %v932, %v933
  %v935 = vsel %vm825, %v790, 0.0
  %v936 = vadd.f32 %v934, %v935
  %v937 = vsel %vm825, %v795, 0.0
  %v938 = vadd.f32 %v936, %v937
  %v939 = vsel %vm825, %v798, 0.0
  %v940 = vadd.f32 %v938, %v939
  %v941 = vsel %vm825, %v803, 0.0
  %v942 = vadd.f32 %v940, %v941
  %v943 = vsel %vm825, %v806, 0.0
  %v944 = vadd.f32 %v942, %v943
  %v945 = vsel %vm825, %v811, 0.0
  %v946 = vadd.f32 %v944, %v945
  %v947 = vsel %vm825, %v814, 0.0
  %v948 = vadd.f32 %v946, %v947
  %v949 = vsel %vm825, %v819, 0.0
  %v950 = vadd.f32 %v948, %v949
  %v951 = vsel %vm825, %v822, 0.0
  %v952 = vadd.f32 %v950, %v951
  %v953 = vrot.slane %v952, 4
  %v954 = vadd.f32 %v952, %v953
  %v955 = vrot.slane %v954, 2
  %v956 = vadd.f32 %v954, %v955
  %v957 = vrot.slane %v956, 1
  %v958 = vadd.f32 %v956, %v957
  %vm959 = vcmask 253952
  %960 = vst.msk [vmem:[%s4] sm:$0x1] %vm959, %v958
  %v961 = vmul.f32 %v571, %v571
  %v962 = vmul.f32 %v574, %v574
  %v963 = vmul.f32 %v579, %v579
  %v964 = vmul.f32 %v582, %v582
  %v965 = vmul.f32 %v587, %v587
  %v966 = vmul.f32 %v590, %v590
  %v967 = vmul.f32 %v595, %v595
  %v968 = vmul.f32 %v598, %v598
  %v969 = vmul.f32 %v603, %v603
  %v970 = vmul.f32 %v606, %v606
  %v971 = vmul.f32 %v611, %v611
  %v972 = vmul.f32 %v614, %v614
  %v973 = vmul.f32 %v619, %v619
  %v974 = vmul.f32 %v622, %v622
  %v975 = vmul.f32 %v627, %v627
  %v976 = vmul.f32 %v630, %v630
  %v977 = vmul.f32 %v635, %v635
  %v978 = vmul.f32 %v638, %v638
  %v979 = vmul.f32 %v643, %v643
  %v980 = vmul.f32 %v646, %v646
  %v981 = vmul.f32 %v651, %v651
  %v982 = vmul.f32 %v654, %v654
  %v983 = vmul.f32 %v659, %v659
  %v984 = vmul.f32 %v662, %v662
  %v985 = vmul.f32 %v667, %v667
  %v986 = vmul.f32 %v670, %v670
  %v987 = vmul.f32 %v675, %v675
  %v988 = vmul.f32 %v678, %v678
  %v989 = vmul.f32 %v683, %v683
  %v990 = vmul.f32 %v686, %v686
  %v991 = vmul.f32 %v691, %v691
  %v992 = vmul.f32 %v694, %v694
  %v993 = vmul.f32 %v699, %v699
  %v994 = vmul.f32 %v702, %v702
  %v995 = vmul.f32 %v707, %v707
  %v996 = vmul.f32 %v710, %v710
  %v997 = vmul.f32 %v715, %v715
  %v998 = vmul.f32 %v718, %v718
  %v999 = vmul.f32 %v723, %v723
  %v1000 = vmul.f32 %v726, %v726
  %v1001 = vmul.f32 %v731, %v731
  %v1002 = vmul.f32 %v734, %v734
  %v1003 = vmul.f32 %v739, %v739
  %v1004 = vmul.f32 %v742, %v742
  %v1005 = vmul.f32 %v747, %v747
  %v1006 = vmul.f32 %v750, %v750
  %v1007 = vmul.f32 %v755, %v755
  %v1008 = vmul.f32 %v758, %v758
  %v1009 = vmul.f32 %v763, %v763
  %v1010 = vmul.f32 %v766, %v766
  %v1011 = vmul.f32 %v771, %v771
  %v1012 = vmul.f32 %v774, %v774
  %v1013 = vmul.f32 %v779, %v779
  %v1014 = vmul.f32 %v782, %v782
  %v1015 = vmul.f32 %v787, %v787
  %v1016 = vmul.f32 %v790, %v790
  %v1017 = vmul.f32 %v795, %v795
  %v1018 = vmul.f32 %v798, %v798
  %v1019 = vmul.f32 %v803, %v803
  %v1020 = vmul.f32 %v806, %v806
  %v1021 = vmul.f32 %v811, %v811
  %v1022 = vmul.f32 %v814, %v814
  %v1023 = vmul.f32 %v819, %v819
  %v1024 = vmul.f32 %v822, %v822
  %v1025 = vsel %vm825, %v961, 0.0
  %v1026 = vsel %vm825, %v962, 0.0
  %v1027 = vadd.f32 %v1025, %v1026
  %v1028 = vsel %vm825, %v963, 0.0
  %v1029 = vadd.f32 %v1027, %v1028
  %v1030 = vsel %vm825, %v964, 0.0
  %v1031 = vadd.f32 %v1029, %v1030
  %v1032 = vsel %vm825, %v965, 0.0
  %v1033 = vadd.f32 %v1031, %v1032
  %v1034 = vsel %vm825, %v966, 0.0
  %v1035 = vadd.f32 %v1033, %v1034
  %v1036 = vsel %vm825, %v967, 0.0
  %v1037 = vadd.f32 %v1035, %v1036
  %v1038 = vsel %vm825, %v968, 0.0
  %v1039 = vadd.f32 %v1037, %v1038
  %v1040 = vsel %vm825, %v969, 0.0
  %v1041 = vadd.f32 %v1039, %v1040
  %v1042 = vsel %vm825, %v970, 0.0
  %v1043 = vadd.f32 %v1041, %v1042
  %v1044 = vsel %vm825, %v971, 0.0
  %v1045 = vadd.f32 %v1043, %v1044
  %v1046 = vsel %vm825, %v972, 0.0
  %v1047 = vadd.f32 %v1045, %v1046
  %v1048 = vsel %vm825, %v973, 0.0
  %v1049 = vadd.f32 %v1047, %v1048
  %v1050 = vsel %vm825, %v974, 0.0
  %v1051 = vadd.f32 %v1049, %v1050
  %v1052 = vsel %vm825, %v975, 0.0
  %v1053 = vadd.f32 %v1051, %v1052
  %v1054 = vsel %vm825, %v976, 0.0
  %v1055 = vadd.f32 %v1053, %v1054
  %v1056 = vsel %vm825, %v977, 0.0
  %v1057 = vadd.f32 %v1055, %v1056
  %v1058 = vsel %vm825, %v978, 0.0
  %v1059 = vadd.f32 %v1057, %v1058
  %v1060 = vsel %vm825, %v979, 0.0
  %v1061 = vadd.f32 %v1059, %v1060
  %v1062 = vsel %vm825, %v980, 0.0
  %v1063 = vadd.f32 %v1061, %v1062
  %v1064 = vsel %vm825, %v981, 0.0
  %v1065 = vadd.f32 %v1063, %v1064
  %v1066 = vsel %vm825, %v982, 0.0
  %v1067 = vadd.f32 %v1065, %v1066
  %v1068 = vsel %vm825, %v983, 0.0
  %v1069 = vadd.f32 %v1067, %v1068
  %v1070 = vsel %vm825, %v984, 0.0
  %v1071 = vadd.f32 %v1069, %v1070
  %v1072 = vsel %vm825, %v985, 0.0
  %v1073 = vadd.f32 %v1071, %v1072
  %v1074 = vsel %vm825, %v986, 0.0
  %v1075 = vadd.f32 %v1073, %v1074
  %v1076 = vsel %vm825, %v987, 0.0
  %v1077 = vadd.f32 %v1075, %v1076
  %v1078 = vsel %vm825, %v988, 0.0
  %v1079 = vadd.f32 %v1077, %v1078
  %v1080 = vsel %vm825, %v989, 0.0
  %v1081 = vadd.f32 %v1079, %v1080
  %v1082 = vsel %vm825, %v990, 0.0
  %v1083 = vadd.f32 %v1081, %v1082
  %v1084 = vsel %vm825, %v991, 0.0
  %v1085 = vadd.f32 %v1083, %v1084
  %v1086 = vsel %vm825, %v992, 0.0
  %v1087 = vadd.f32 %v1085, %v1086
  %v1088 = vsel %vm825, %v993, 0.0
  %v1089 = vadd.f32 %v1087, %v1088
  %v1090 = vsel %vm825, %v994, 0.0
  %v1091 = vadd.f32 %v1089, %v1090
  %v1092 = vsel %vm825, %v995, 0.0
  %v1093 = vadd.f32 %v1091, %v1092
  %v1094 = vsel %vm825, %v996, 0.0
  %v1095 = vadd.f32 %v1093, %v1094
  %v1096 = vsel %vm825, %v997, 0.0
  %v1097 = vadd.f32 %v1095, %v1096
  %v1098 = vsel %vm825, %v998, 0.0
  %v1099 = vadd.f32 %v1097, %v1098
  %v1100 = vsel %vm825, %v999, 0.0
  %v1101 = vadd.f32 %v1099, %v1100
  %v1102 = vsel %vm825, %v1000, 0.0
  %v1103 = vadd.f32 %v1101, %v1102
  %v1104 = vsel %vm825, %v1001, 0.0
  %v1105 = vadd.f32 %v1103, %v1104
  %v1106 = vsel %vm825, %v1002, 0.0
  %v1107 = vadd.f32 %v1105, %v1106
  %v1108 = vsel %vm825, %v1003, 0.0
  %v1109 = vadd.f32 %v1107, %v1108
  %v1110 = vsel %vm825, %v1004, 0.0
  %v1111 = vadd.f32 %v1109, %v1110
  %v1112 = vsel %vm825, %v1005, 0.0
  %v1113 = vadd.f32 %v1111, %v1112
  %v1114 = vsel %vm825, %v1006, 0.0
  %v1115 = vadd.f32 %v1113, %v1114
  %v1116 = vsel %vm825, %v1007, 0.0
  %v1117 = vadd.f32 %v1115, %v1116
  %v1118 = vsel %vm825, %v1008, 0.0
  %v1119 = vadd.f32 %v1117, %v1118
  %v1120 = vsel %vm825, %v1009, 0.0
  %v1121 = vadd.f32 %v1119, %v1120
  %v1122 = vsel %vm825, %v1010, 0.0
  %v1123 = vadd.f32 %v1121, %v1122
  %v1124 = vsel %vm825, %v1011, 0.0
  %v1125 = vadd.f32 %v1123, %v1124
  %v1126 = vsel %vm825, %v1012, 0.0
  %v1127 = vadd.f32 %v1125, %v1126
  %v1128 = vsel %vm825, %v1013, 0.0
  %v1129 = vadd.f32 %v1127, %v1128
  %v1130 = vsel %vm825, %v1014, 0.0
  %v1131 = vadd.f32 %v1129, %v1130
  %v1132 = vsel %vm825, %v1015, 0.0
  %v1133 = vadd.f32 %v1131, %v1132
  %v1134 = vsel %vm825, %v1016, 0.0
  %v1135 = vadd.f32 %v1133, %v1134
  %v1136 = vsel %vm825, %v1017, 0.0
  %v1137 = vadd.f32 %v1135, %v1136
  %v1138 = vsel %vm825, %v1018, 0.0
  %v1139 = vadd.f32 %v1137, %v1138
  %v1140 = vsel %vm825, %v1019, 0.0
  %v1141 = vadd.f32 %v1139, %v1140
  %v1142 = vsel %vm825, %v1020, 0.0
  %v1143 = vadd.f32 %v1141, %v1142
  %v1144 = vsel %vm825, %v1021, 0.0
  %v1145 = vadd.f32 %v1143, %v1144
  %v1146 = vsel %vm825, %v1022, 0.0
  %v1147 = vadd.f32 %v1145, %v1146
  %v1148 = vsel %vm825, %v1023, 0.0
  %v1149 = vadd.f32 %v1147, %v1148
  %v1150 = vsel %vm825, %v1024, 0.0
  %v1151 = vadd.f32 %v1149, %v1150
  %v1152 = vrot.slane %v1151, 4
  %v1153 = vadd.f32 %v1151, %v1152
  %v1154 = vrot.slane %v1153, 2
  %v1155 = vadd.f32 %v1153, %v1154
  %v1156 = vrot.slane %v1155, 1
  %v1157 = vadd.f32 %v1155, %v1156
  %1158 = vst.msk [vmem:[%s4 + $0x1] sm:$0x1] %vm959, %v1157
  %v1159 = vpack.c.bf16 %v574, %v571
  %v1160 = vpack.c.bf16 %v582, %v579
  %v1161 = vpack.c.bf16 %v590, %v587
  %v1162 = vpack.c.bf16 %v598, %v595
  %v1163 = vpack.c.bf16 %v606, %v603
  %v1164 = vpack.c.bf16 %v614, %v611
  %v1165 = vpack.c.bf16 %v622, %v619
  %v1166 = vpack.c.bf16 %v630, %v627
  %v1167 = vpack.c.bf16 %v638, %v635
  %v1168 = vpack.c.bf16 %v646, %v643
  %v1169 = vpack.c.bf16 %v654, %v651
  %v1170 = vpack.c.bf16 %v662, %v659
  %v1171 = vpack.c.bf16 %v670, %v667
  %v1172 = vpack.c.bf16 %v678, %v675
  %v1173 = vpack.c.bf16 %v686, %v683
  %v1174 = vpack.c.bf16 %v694, %v691
  %v1175 = vpack.c.bf16 %v702, %v699
  %v1176 = vpack.c.bf16 %v710, %v707
  %v1177 = vpack.c.bf16 %v718, %v715
  %v1178 = vpack.c.bf16 %v726, %v723
  %v1179 = vpack.c.bf16 %v734, %v731
  %v1180 = vpack.c.bf16 %v742, %v739
  %v1181 = vpack.c.bf16 %v750, %v747
  %v1182 = vpack.c.bf16 %v758, %v755
  %v1183 = vpack.c.bf16 %v766, %v763
  %v1184 = vpack.c.bf16 %v774, %v771
  %v1185 = vpack.c.bf16 %v782, %v779
  %v1186 = vpack.c.bf16 %v790, %v787
  %v1187 = vpack.c.bf16 %v798, %v795
  %v1188 = vpack.c.bf16 %v806, %v803
  %v1189 = vpack.c.bf16 %v814, %v811
  %v1190 = vpack.c.bf16 %v822, %v819
  %v1223 = vunpack.c.l.b16 %v1159
  %v1224 = vunpack.c.h.b16 %v1159
  %v1225 = vunpack.c.l.b16 %v1160
  %v1226 = vunpack.c.h.b16 %v1160
  %v1227 = vunpack.c.l.b16 %v1161
  %v1228 = vunpack.c.h.b16 %v1161
  %v1229 = vunpack.c.l.b16 %v1162
  %v1230 = vunpack.c.h.b16 %v1162
  %v1231 = vunpack.c.l.b16 %v1163
  %v1232 = vunpack.c.h.b16 %v1163
  %v1233 = vunpack.c.l.b16 %v1164
  %v1234 = vunpack.c.h.b16 %v1164
  %v1235 = vunpack.c.l.b16 %v1165
  %v1236 = vunpack.c.h.b16 %v1165
  %v1237 = vunpack.c.l.b16 %v1166
  %v1238 = vunpack.c.h.b16 %v1166
  %v1239 = vunpack.c.l.b16 %v1167
  %v1240 = vunpack.c.h.b16 %v1167
  %v1241 = vunpack.c.l.b16 %v1168
  %v1242 = vunpack.c.h.b16 %v1168
  %v1243 = vunpack.c.l.b16 %v1169
  %v1244 = vunpack.c.h.b16 %v1169
  %v1245 = vunpack.c.l.b16 %v1170
  %v1246 = vunpack.c.h.b16 %v1170
  %v1247 = vunpack.c.l.b16 %v1171
  %v1248 = vunpack.c.h.b16 %v1171
  %v1249 = vunpack.c.l.b16 %v1172
  %v1250 = vunpack.c.h.b16 %v1172
  %v1251 = vunpack.c.l.b16 %v1173
  %v1252 = vunpack.c.h.b16 %v1173
  %v1253 = vunpack.c.l.b16 %v1174
  %v1254 = vunpack.c.h.b16 %v1174
  %v1255 = vunpack.c.l.b16 %v1175
  %v1256 = vunpack.c.h.b16 %v1175
  %v1257 = vunpack.c.l.b16 %v1176
  %v1258 = vunpack.c.h.b16 %v1176
  %v1259 = vunpack.c.l.b16 %v1177
  %v1260 = vunpack.c.h.b16 %v1177
  %v1261 = vunpack.c.l.b16 %v1178
  %v1262 = vunpack.c.h.b16 %v1178
  %v1263 = vunpack.c.l.b16 %v1179
  %v1264 = vunpack.c.h.b16 %v1179
  %v1265 = vunpack.c.l.b16 %v1180
  %v1266 = vunpack.c.h.b16 %v1180
  %v1267 = vunpack.c.l.b16 %v1181
  %v1268 = vunpack.c.h.b16 %v1181
  %v1269 = vunpack.c.l.b16 %v1182
  %v1270 = vunpack.c.h.b16 %v1182
  %v1271 = vunpack.c.l.b16 %v1183
  %v1272 = vunpack.c.h.b16 %v1183
  %v1273 = vunpack.c.l.b16 %v1184
  %v1274 = vunpack.c.h.b16 %v1184
  %v1275 = vunpack.c.l.b16 %v1185
  %v1276 = vunpack.c.h.b16 %v1185
  %v1277 = vunpack.c.l.b16 %v1186
  %v1278 = vunpack.c.h.b16 %v1186
  %v1279 = vunpack.c.l.b16 %v1187
  %v1280 = vunpack.c.h.b16 %v1187
  %v1281 = vunpack.c.l.b16 %v1188
  %v1282 = vunpack.c.h.b16 %v1188
  %v1283 = vunpack.c.l.b16 %v1189
  %v1284 = vunpack.c.h.b16 %v1189
  %v1285 = vunpack.c.l.b16 %v1190
  %v1286 = vunpack.c.h.b16 %v1190
  %v1287 = vpack.c.b16 %v1223, %v1223
  %v1288 = vpack.c.b16 %v1224, %v1224
  %v1289 = vpack.c.b16 %v1225, %v1225
  %v1290 = vpack.c.b16 %v1226, %v1226
  %v1291 = vpack.c.b16 %v1227, %v1227
  %v1292 = vpack.c.b16 %v1228, %v1228
  %v1293 = vpack.c.b16 %v1229, %v1229
  %v1294 = vpack.c.b16 %v1230, %v1230
  %v1295 = vpack.c.b16 %v1231, %v1231
  %v1296 = vpack.c.b16 %v1232, %v1232
  %v1297 = vpack.c.b16 %v1233, %v1233
  %v1298 = vpack.c.b16 %v1234, %v1234
  %v1299 = vpack.c.b16 %v1235, %v1235
  %v1300 = vpack.c.b16 %v1236, %v1236
  %v1301 = vpack.c.b16 %v1237, %v1237
  %v1302 = vpack.c.b16 %v1238, %v1238
  %v1303 = vpack.c.b16 %v1239, %v1239
  %v1304 = vpack.c.b16 %v1240, %v1240
  %v1305 = vpack.c.b16 %v1241, %v1241
  %v1306 = vpack.c.b16 %v1242, %v1242
  %v1307 = vpack.c.b16 %v1243, %v1243
  %v1308 = vpack.c.b16 %v1244, %v1244
  %v1309 = vpack.c.b16 %v1245, %v1245
  %v1310 = vpack.c.b16 %v1246, %v1246
  %v1311 = vpack.c.b16 %v1247, %v1247
  %v1312 = vpack.c.b16 %v1248, %v1248
  %v1313 = vpack.c.b16 %v1249, %v1249
  %v1314 = vpack.c.b16 %v1250, %v1250
  %v1315 = vpack.c.b16 %v1251, %v1251
  %v1316 = vpack.c.b16 %v1252, %v1252
  %v1317 = vpack.c.b16 %v1253, %v1253
  %v1318 = vpack.c.b16 %v1254, %v1254
  %v1319 = vpack.c.b16 %v1255, %v1255
  %v1320 = vpack.c.b16 %v1256, %v1256
  %v1321 = vpack.c.b16 %v1257, %v1257
  %v1322 = vpack.c.b16 %v1258, %v1258
  %v1323 = vpack.c.b16 %v1259, %v1259
  %v1324 = vpack.c.b16 %v1260, %v1260
  %v1325 = vpack.c.b16 %v1261, %v1261
  %v1326 = vpack.c.b16 %v1262, %v1262
  %v1327 = vpack.c.b16 %v1263, %v1263
  %v1328 = vpack.c.b16 %v1264, %v1264
  %v1329 = vpack.c.b16 %v1265, %v1265
  %v1330 = vpack.c.b16 %v1266, %v1266
  %v1331 = vpack.c.b16 %v1267, %v1267
  %v1332 = vpack.c.b16 %v1268, %v1268
  %v1333 = vpack.c.b16 %v1269, %v1269
  %v1334 = vpack.c.b16 %v1270, %v1270
  %v1335 = vpack.c.b16 %v1271, %v1271
  %v1336 = vpack.c.b16 %v1272, %v1272
  %v1337 = vpack.c.b16 %v1273, %v1273
  %v1338 = vpack.c.b16 %v1274, %v1274
  %v1339 = vpack.c.b16 %v1275, %v1275
  %v1340 = vpack.c.b16 %v1276, %v1276
  %v1341 = vpack.c.b16 %v1277, %v1277
  %v1342 = vpack.c.b16 %v1278, %v1278
  %v1343 = vpack.c.b16 %v1279, %v1279
  %v1344 = vpack.c.b16 %v1280, %v1280
  %v1345 = vpack.c.b16 %v1281, %v1281
  %v1346 = vpack.c.b16 %v1282, %v1282
  %v1347 = vpack.c.b16 %v1283, %v1283
  %v1348 = vpack.c.b16 %v1284, %v1284
  %v1349 = vpack.c.b16 %v1285, %v1285
  %v1350 = vpack.c.b16 %v1286, %v1286
  %vm1415 = vcmask 257024
  %1416 = vst.msk [vmem:[%s3] sm:$0xf] %vm1415, %v1287
  %1417 = vst.msk [vmem:[%s3 + $0x4] sm:$0xf] %vm1415, %v1288
  %1418 = vst.msk [vmem:[%s3 + $0x8] sm:$0xf] %vm1415, %v1289
  %1419 = vst.msk [vmem:[%s3 + $0xc] sm:$0xf] %vm1415, %v1290
  %1420 = vst.msk [vmem:[%s3 + $0x10] sm:$0xf] %vm1415, %v1291
  %1421 = vst.msk [vmem:[%s3 + $0x14] sm:$0xf] %vm1415, %v1292
  %1422 = vst.msk [vmem:[%s3 + $0x18] sm:$0xf] %vm1415, %v1293
  %1423 = vst.msk [vmem:[%s3 + $0x1c] sm:$0xf] %vm1415, %v1294
  %1424 = vst.msk [vmem:[%s3 + $0x20] sm:$0xf] %vm1415, %v1295
  %1425 = vst.msk [vmem:[%s3 + $0x24] sm:$0xf] %vm1415, %v1296
  %1426 = vst.msk [vmem:[%s3 + $0x28] sm:$0xf] %vm1415, %v1297
  %1427 = vst.msk [vmem:[%s3 + $0x2c] sm:$0xf] %vm1415, %v1298
  %1428 = vst.msk [vmem:[%s3 + $0x30] sm:$0xf] %vm1415, %v1299
  %1429 = vst.msk [vmem:[%s3 + $0x34] sm:$0xf] %vm1415, %v1300
  %1430 = vst.msk [vmem:[%s3 + $0x38] sm:$0xf] %vm1415, %v1301
  %1431 = vst.msk [vmem:[%s3 + $0x3c] sm:$0xf] %vm1415, %v1302
  %1432 = vst.msk [vmem:[%s3 + $0x40] sm:$0xf] %vm1415, %v1303
  %1433 = vst.msk [vmem:[%s3 + $0x44] sm:$0xf] %vm1415, %v1304
  %1434 = vst.msk [vmem:[%s3 + $0x48] sm:$0xf] %vm1415, %v1305
  %1435 = vst.msk [vmem:[%s3 + $0x4c] sm:$0xf] %vm1415, %v1306
  %1436 = vst.msk [vmem:[%s3 + $0x50] sm:$0xf] %vm1415, %v1307
  %1437 = vst.msk [vmem:[%s3 + $0x54] sm:$0xf] %vm1415, %v1308
  %1438 = vst.msk [vmem:[%s3 + $0x58] sm:$0xf] %vm1415, %v1309
  %1439 = vst.msk [vmem:[%s3 + $0x5c] sm:$0xf] %vm1415, %v1310
  %1440 = vst.msk [vmem:[%s3 + $0x60] sm:$0xf] %vm1415, %v1311
  %1441 = vst.msk [vmem:[%s3 + $0x64] sm:$0xf] %vm1415, %v1312
  %1442 = vst.msk [vmem:[%s3 + $0x68] sm:$0xf] %vm1415, %v1313
  %1443 = vst.msk [vmem:[%s3 + $0x6c] sm:$0xf] %vm1415, %v1314
  %1444 = vst.msk [vmem:[%s3 + $0x70] sm:$0xf] %vm1415, %v1315
  %1445 = vst.msk [vmem:[%s3 + $0x74] sm:$0xf] %vm1415, %v1316
  %1446 = vst.msk [vmem:[%s3 + $0x78] sm:$0xf] %vm1415, %v1317
  %1447 = vst.msk [vmem:[%s3 + $0x7c] sm:$0xf] %vm1415, %v1318
  %1448 = vst.msk [vmem:[%s3 + $0x80] sm:$0xf] %vm1415, %v1319
  %1449 = vst.msk [vmem:[%s3 + $0x84] sm:$0xf] %vm1415, %v1320
  %1450 = vst.msk [vmem:[%s3 + $0x88] sm:$0xf] %vm1415, %v1321
  %1451 = vst.msk [vmem:[%s3 + $0x8c] sm:$0xf] %vm1415, %v1322
  %1452 = vst.msk [vmem:[%s3 + $0x90] sm:$0xf] %vm1415, %v1323
  %1453 = vst.msk [vmem:[%s3 + $0x94] sm:$0xf] %vm1415, %v1324
  %1454 = vst.msk [vmem:[%s3 + $0x98] sm:$0xf] %vm1415, %v1325
  %1455 = vst.msk [vmem:[%s3 + $0x9c] sm:$0xf] %vm1415, %v1326
  %1456 = vst.msk [vmem:[%s3 + $0xa0] sm:$0xf] %vm1415, %v1327
  %1457 = vst.msk [vmem:[%s3 + $0xa4] sm:$0xf] %vm1415, %v1328
  %1458 = vst.msk [vmem:[%s3 + $0xa8] sm:$0xf] %vm1415, %v1329
  %1459 = vst.msk [vmem:[%s3 + $0xac] sm:$0xf] %vm1415, %v1330
  %1460 = vst.msk [vmem:[%s3 + $0xb0] sm:$0xf] %vm1415, %v1331
  %1461 = vst.msk [vmem:[%s3 + $0xb4] sm:$0xf] %vm1415, %v1332
  %1462 = vst.msk [vmem:[%s3 + $0xb8] sm:$0xf] %vm1415, %v1333
  %1463 = vst.msk [vmem:[%s3 + $0xbc] sm:$0xf] %vm1415, %v1334
  %1464 = vst.msk [vmem:[%s3 + $0xc0] sm:$0xf] %vm1415, %v1335
  %1465 = vst.msk [vmem:[%s3 + $0xc4] sm:$0xf] %vm1415, %v1336
  %1466 = vst.msk [vmem:[%s3 + $0xc8] sm:$0xf] %vm1415, %v1337
  %1467 = vst.msk [vmem:[%s3 + $0xcc] sm:$0xf] %vm1415, %v1338
  %1468 = vst.msk [vmem:[%s3 + $0xd0] sm:$0xf] %vm1415, %v1339
  %1469 = vst.msk [vmem:[%s3 + $0xd4] sm:$0xf] %vm1415, %v1340
  %1470 = vst.msk [vmem:[%s3 + $0xd8] sm:$0xf] %vm1415, %v1341
  %1471 = vst.msk [vmem:[%s3 + $0xdc] sm:$0xf] %vm1415, %v1342
  %1472 = vst.msk [vmem:[%s3 + $0xe0] sm:$0xf] %vm1415, %v1343
  %1473 = vst.msk [vmem:[%s3 + $0xe4] sm:$0xf] %vm1415, %v1344
  %1474 = vst.msk [vmem:[%s3 + $0xe8] sm:$0xf] %vm1415, %v1345
  %1475 = vst.msk [vmem:[%s3 + $0xec] sm:$0xf] %vm1415, %v1346
  %1476 = vst.msk [vmem:[%s3 + $0xf0] sm:$0xf] %vm1415, %v1347
  %1477 = vst.msk [vmem:[%s3 + $0xf4] sm:$0xf] %vm1415, %v1348
  %1478 = vst.msk [vmem:[%s3 + $0xf8] sm:$0xf] %vm1415, %v1349
  %1479 = vst.msk [vmem:[%s3 + $0xfc] sm:$0xf] %vm1415, %v1350
  // Predicated region
  $region14: #{discriminator_forward.5} parent=0 // pred_check
    _
  $region15: #{discriminator_forward.5} parent=0 // pred_check_branch
    %1481 = sbr.rel (0) target = $region17
  $region16: #{discriminator_forward.5} parent=0 // pred_region
    _
  $region17: #{discriminator_forward.5} parent=0 // pred_fallthru
    _
  // Predicated region
  $region18: #{discriminator_forward.5} parent=0 // pred_check
    _
  $region19: #{discriminator_forward.5} parent=0 // pred_check_branch
    %1483 = sbr.rel (0) target = $region21
  $region20: #{discriminator_forward.5} parent=0 // pred_region
    _
  $region21: #{discriminator_forward.5} parent=0 // pred_fallthru
    _
  // Predicated region
  $region22: #{discriminator_forward.5} parent=0 // pred_check
    _
  $region23: #{discriminator_forward.5} parent=0 // pred_check_branch
    %1485 = sbr.rel (0) target = $region25
  $region24: #{discriminator_forward.5} parent=0 // pred_region
    _
  $region25: #{discriminator_forward.5} parent=0 // pred_fallthru
    _
  // Predicated region
  $region26: #{discriminator_forward.5} parent=0 // pred_check
    _
  $region27: #{discriminator_forward.5} parent=0 // pred_check_branch
    %1487 = sbr.rel (0) target = $region29
  $region28: #{discriminator_forward.5} parent=0 // pred_region
    _
  $region29: #{discriminator_forward.5} parent=0 // pred_fallthru
    _

// kernel: discriminator_forward.6
$region0: #{discriminator_forward.6}
  #allocation0 [shape = 'u32[]', space=smem, size = 0x4, offset = 0x4, fixed_abs, tag = 'smem constant byte address 0x4 - core index']
  #allocation1 [shape = 'u32[144,128]{1,0:T(1,128)}', space=vmem, size = 0x12000, scoped, tag = 'internal scratch']
  %s0 = inlined_call_operand.vmem [shape: bf16[128,512], index: 0, kind: input, shape index: {}]
  %s1 = inlined_call_operand.vmem [shape: bf16[512,64], index: 1, kind: input, shape index: {}]
  %s2 = inlined_call_operand.vmem [shape: f32[1,64], index: 2, kind: input, shape index: {}]
  %s3 = inlined_call_operand.vmem [shape: bf16[128,64], index: 3, kind: output, shape index: {0}]
  %s4 = inlined_call_operand.vmem [shape: f32[1,2,64], index: 4, kind: output, shape index: {1}]
  %5 = xla_tuple %s3, %s4
  %s6 = sld [smem:[#allocation0]]
  $region30: #{discriminator_forward.6} parent=0
    _
  %s8 = ssub.s32 1, %s6
  %s9 = scalar_select 0, %s8, %s6
  // Predicated region
  $region2: #{discriminator_forward.6} parent=0 // pred_check
    _
  $region3: #{discriminator_forward.6} parent=0 // pred_check_branch
    %11 = sbr.rel (0) target = $region5
  $region4: #{discriminator_forward.6} parent=0 // pred_region
    _
  $region5: #{discriminator_forward.6} parent=0 // pred_fallthru
    _
  // Predicated region
  $region6: #{discriminator_forward.6} parent=0 // pred_check
    _
  $region7: #{discriminator_forward.6} parent=0 // pred_check_branch
    %13 = sbr.rel (0) target = $region9
  $region8: #{discriminator_forward.6} parent=0 // pred_region
    _
  $region9: #{discriminator_forward.6} parent=0 // pred_fallthru
    _
  // Predicated region
  $region10: #{discriminator_forward.6} parent=0 // pred_check
    _
  $region11: #{discriminator_forward.6} parent=0 // pred_check_branch
    %15 = sbr.rel (0) target = $region13
  $region12: #{discriminator_forward.6} parent=0 // pred_region
    _
  $region13: #{discriminator_forward.6} parent=0 // pred_fallthru
    _
  %v17 = vld [vmem:[%s0] sm:$0xff]
  %v18 = vld [vmem:[%s0 + $0x8] sm:$0xff]
  %v19 = vld [vmem:[%s0 + $0x10] sm:$0xff]
  %v20 = vld [vmem:[%s0 + $0x18] sm:$0xff]
  %v21 = vld [vmem:[%s0 + $0x20] sm:$0xff]
  %v22 = vld [vmem:[%s0 + $0x28] sm:$0xff]
  %v23 = vld [vmem:[%s0 + $0x30] sm:$0xff]
  %v24 = vld [vmem:[%s0 + $0x38] sm:$0xff]
  %v25 = vld [vmem:[%s0 + $0x40] sm:$0xff]
  %v26 = vld [vmem:[%s0 + $0x48] sm:$0xff]
  %v27 = vld [vmem:[%s0 + $0x50] sm:$0xff]
  %v28 = vld [vmem:[%s0 + $0x58] sm:$0xff]
  %v29 = vld [vmem:[%s0 + $0x60] sm:$0xff]
  %v30 = vld [vmem:[%s0 + $0x68] sm:$0xff]
  %v31 = vld [vmem:[%s0 + $0x70] sm:$0xff]
  %v32 = vld [vmem:[%s0 + $0x78] sm:$0xff]
  %v33 = vld [vmem:[%s0 + $0x80] sm:$0xff]
  %v34 = vld [vmem:[%s0 + $0x88] sm:$0xff]
  %v35 = vld [vmem:[%s0 + $0x90] sm:$0xff]
  %v36 = vld [vmem:[%s0 + $0x98] sm:$0xff]
  %v37 = vld [vmem:[%s0 + $0xa0] sm:$0xff]
  %v38 = vld [vmem:[%s0 + $0xa8] sm:$0xff]
  %v39 = vld [vmem:[%s0 + $0xb0] sm:$0xff]
  %v40 = vld [vmem:[%s0 + $0xb8] sm:$0xff]
  %v41 = vld [vmem:[%s0 + $0xc0] sm:$0xff]
  %v42 = vld [vmem:[%s0 + $0xc8] sm:$0xff]
  %v43 = vld [vmem:[%s0 + $0xd0] sm:$0xff]
  %v44 = vld [vmem:[%s0 + $0xd8] sm:$0xff]
  %v45 = vld [vmem:[%s0 + $0xe0] sm:$0xff]
  %v46 = vld [vmem:[%s0 + $0xe8] sm:$0xff]
  %v47 = vld [vmem:[%s0 + $0xf0] sm:$0xff]
  %v48 = vld [vmem:[%s0 + $0xf8] sm:$0xff]
  %v49 = vld [vmem:[%s1] sm:$0xf]
  %v50 = vld [vmem:[%s1 + $0x4] sm:$0xf]
  %v51 = vld [vmem:[%s1 + $0x8] sm:$0xf]
  %v52 = vld [vmem:[%s1 + $0xc] sm:$0xf]
  %v53 = vld [vmem:[%s1 + $0x10] sm:$0xf]
  %v54 = vld [vmem:[%s1 + $0x14] sm:$0xf]
  %v55 = vld [vmem:[%s1 + $0x18] sm:$0xf]
  %v56 = vld [vmem:[%s1 + $0x1c] sm:$0xf]
  %v57 = vld [vmem:[%s1 + $0x20] sm:$0xf]
  %v58 = vld [vmem:[%s1 + $0x24] sm:$0xf]
  %v59 = vld [vmem:[%s1 + $0x28] sm:$0xf]
  %v60 = vld [vmem:[%s1 + $0x2c] sm:$0xf]
  %v61 = vld [vmem:[%s1 + $0x30] sm:$0xf]
  %v62 = vld [vmem:[%s1 + $0x34] sm:$0xf]
  %v63 = vld [vmem:[%s1 + $0x38] sm:$0xf]
  %v64 = vld [vmem:[%s1 + $0x3c] sm:$0xf]
  %v65 = vld [vmem:[%s1 + $0x40] sm:$0xf]
  %v66 = vld [vmem:[%s1 + $0x44] sm:$0xf]
  %v67 = vld [vmem:[%s1 + $0x48] sm:$0xf]
  %v68 = vld [vmem:[%s1 + $0x4c] sm:$0xf]
  %v69 = vld [vmem:[%s1 + $0x50] sm:$0xf]
  %v70 = vld [vmem:[%s1 + $0x54] sm:$0xf]
  %v71 = vld [vmem:[%s1 + $0x58] sm:$0xf]
  %v72 = vld [vmem:[%s1 + $0x5c] sm:$0xf]
  %v73 = vld [vmem:[%s1 + $0x60] sm:$0xf]
  %v74 = vld [vmem:[%s1 + $0x64] sm:$0xf]
  %v75 = vld [vmem:[%s1 + $0x68] sm:$0xf]
  %v76 = vld [vmem:[%s1 + $0x6c] sm:$0xf]
  %v77 = vld [vmem:[%s1 + $0x70] sm:$0xf]
  %v78 = vld [vmem:[%s1 + $0x74] sm:$0xf]
  %v79 = vld [vmem:[%s1 + $0x78] sm:$0xf]
  %v80 = vld [vmem:[%s1 + $0x7c] sm:$0xf]
  %v81 = vld [vmem:[%s1 + $0x80] sm:$0xf]
  %v82 = vld [vmem:[%s1 + $0x84] sm:$0xf]
  %v83 = vld [vmem:[%s1 + $0x88] sm:$0xf]
  %v84 = vld [vmem:[%s1 + $0x8c] sm:$0xf]
  %v85 = vld [vmem:[%s1 + $0x90] sm:$0xf]
  %v86 = vld [vmem:[%s1 + $0x94] sm:$0xf]
  %v87 = vld [vmem:[%s1 + $0x98] sm:$0xf]
  %v88 = vld [vmem:[%s1 + $0x9c] sm:$0xf]
  %v89 = vld [vmem:[%s1 + $0xa0] sm:$0xf]
  %v90 = vld [vmem:[%s1 + $0xa4] sm:$0xf]
  %v91 = vld [vmem:[%s1 + $0xa8] sm:$0xf]
  %v92 = vld [vmem:[%s1 + $0xac] sm:$0xf]
  %v93 = vld [vmem:[%s1 + $0xb0] sm:$0xf]
  %v94 = vld [vmem:[%s1 + $0xb4] sm:$0xf]
  %v95 = vld [vmem:[%s1 + $0xb8] sm:$0xf]
  %v96 = vld [vmem:[%s1 + $0xbc] sm:$0xf]
  %v97 = vld [vmem:[%s1 + $0xc0] sm:$0xf]
  %v98 = vld [vmem:[%s1 + $0xc4] sm:$0xf]
  %v99 = vld [vmem:[%s1 + $0xc8] sm:$0xf]
  %v100 = vld [vmem:[%s1 + $0xcc] sm:$0xf]
  %v101 = vld [vmem:[%s1 + $0xd0] sm:$0xf]
  %v102 = vld [vmem:[%s1 + $0xd4] sm:$0xf]
  %v103 = vld [vmem:[%s1 + $0xd8] sm:$0xf]
  %v104 = vld [vmem:[%s1 + $0xdc] sm:$0xf]
  %v105 = vld [vmem:[%s1 + $0xe0] sm:$0xf]
  %v106 = vld [vmem:[%s1 + $0xe4] sm:$0xf]
  %v107 = vld [vmem:[%s1 + $0xe8] sm:$0xf]
  %v108 = vld [vmem:[%s1 + $0xec] sm:$0xf]
  %v109 = vld [vmem:[%s1 + $0xf0] sm:$0xf]
  %v110 = vld [vmem:[%s1 + $0xf4] sm:$0xf]
  %v111 = vld [vmem:[%s1 + $0xf8] sm:$0xf]
  %v112 = vld [vmem:[%s1 + $0xfc] sm:$0xf]
  %v113 = vld [vmem:[%s2] sm:$0x1]
  %v115 = vlaneseq
  %v116 = vshrl.u32 %v115, 7
  %v117 = vsub.s32 0, %v116
  %v118 = vrot.slane %v113, %v117
  %v152 = vunpack.c.l.b16 %v17
  %v153 = vunpack.c.h.b16 %v17
  %v154 = vunpack.c.l.b16 %v18
  %v155 = vunpack.c.h.b16 %v18
  %v156 = vunpack.c.l.b16 %v19
  %v157 = vunpack.c.h.b16 %v19
  %v158 = vunpack.c.l.b16 %v20
  %v159 = vunpack.c.h.b16 %v20
  %v160 = vunpack.c.l.b16 %v21
  %v161 = vunpack.c.h.b16 %v21
  %v162 = vunpack.c.l.b16 %v22
  %v163 = vunpack.c.h.b16 %v22
  %v164 = vunpack.c.l.b16 %v23
  %v165 = vunpack.c.h.b16 %v23
  %v166 = vunpack.c.l.b16 %v24
  %v167 = vunpack.c.h.b16 %v24
  %v168 = vunpack.c.l.b16 %v25
  %v169 = vunpack.c.h.b16 %v25
  %v170 = vunpack.c.l.b16 %v26
  %v171 = vunpack.c.h.b16 %v26
  %v172 = vunpack.c.l.b16 %v27
  %v173 = vunpack.c.h.b16 %v27
  %v174 = vunpack.c.l.b16 %v28
  %v175 = vunpack.c.h.b16 %v28
  %v176 = vunpack.c.l.b16 %v29
  %v177 = vunpack.c.h.b16 %v29
  %v178 = vunpack.c.l.b16 %v30
  %v179 = vunpack.c.h.b16 %v30
  %v180 = vunpack.c.l.b16 %v31
  %v181 = vunpack.c.h.b16 %v31
  %v182 = vunpack.c.l.b16 %v32
  %v183 = vunpack.c.h.b16 %v32
  %v184 = vunpack.c.l.b16 %v33
  %v185 = vunpack.c.h.b16 %v33
  %v186 = vunpack.c.l.b16 %v34
  %v187 = vunpack.c.h.b16 %v34
  %v188 = vunpack.c.l.b16 %v35
  %v189 = vunpack.c.h.b16 %v35
  %v190 = vunpack.c.l.b16 %v36
  %v191 = vunpack.c.h.b16 %v36
  %v192 = vunpack.c.l.b16 %v37
  %v193 = vunpack.c.h.b16 %v37
  %v194 = vunpack.c.l.b16 %v38
  %v195 = vunpack.c.h.b16 %v38
  %v196 = vunpack.c.l.b16 %v39
  %v197 = vunpack.c.h.b16 %v39
  %v198 = vunpack.c.l.b16 %v40
  %v199 = vunpack.c.h.b16 %v40
  %v200 = vunpack.c.l.b16 %v41
  %v201 = vunpack.c.h.b16 %v41
  %v202 = vunpack.c.l.b16 %v42
  %v203 = vunpack.c.h.b16 %v42
  %v204 = vunpack.c.l.b16 %v43
  %v205 = vunpack.c.h.b16 %v43
  %v206 = vunpack.c.l.b16 %v44
  %v207 = vunpack.c.h.b16 %v44
  %v208 = vunpack.c.l.b16 %v45
  %v209 = vunpack.c.h.b16 %v45
  %v210 = vunpack.c.l.b16 %v46
  %v211 = vunpack.c.h.b16 %v46
  %v212 = vunpack.c.l.b16 %v47
  %v213 = vunpack.c.h.b16 %v47
  %v214 = vunpack.c.l.b16 %v48
  %v215 = vunpack.c.h.b16 %v48
  %v216 = vpack.c.b16 %v156, %v152
  %v217 = vpack.c.b16 %v157, %v153
  %v218 = vpack.c.b16 %v158, %v154
  %v219 = vpack.c.b16 %v159, %v155
  %v220 = vpack.c.b16 %v164, %v160
  %v221 = vpack.c.b16 %v165, %v161
  %v222 = vpack.c.b16 %v166, %v162
  %v223 = vpack.c.b16 %v167, %v163
  %v224 = vpack.c.b16 %v172, %v168
  %v225 = vpack.c.b16 %v173, %v169
  %v226 = vpack.c.b16 %v174, %v170
  %v227 = vpack.c.b16 %v175, %v171
  %v228 = vpack.c.b16 %v180, %v176
  %v229 = vpack.c.b16 %v181, %v177
  %v230 = vpack.c.b16 %v182, %v178
  %v231 = vpack.c.b16 %v183, %v179
  %v232 = vpack.c.b16 %v188, %v184
  %v233 = vpack.c.b16 %v189, %v185
  %v234 = vpack.c.b16 %v190, %v186
  %v235 = vpack.c.b16 %v191, %v187
  %v236 = vpack.c.b16 %v196, %v192
  %v237 = vpack.c.b16 %v197, %v193
  %v238 = vpack.c.b16 %v198, %v194
  %v239 = vpack.c.b16 %v199, %v195
  %v240 = vpack.c.b16 %v204, %v200
  %v241 = vpack.c.b16 %v205, %v201
  %v242 = vpack.c.b16 %v206, %v202
  %v243 = vpack.c.b16 %v207, %v203
  %v244 = vpack.c.b16 %v212, %v208
  %v245 = vpack.c.b16 %v213, %v209
  %v246 = vpack.c.b16 %v214, %v210
  %v247 = vpack.c.b16 %v215, %v211
  %v344 = vunpack.c.l.b16 %v49
  %v345 = vunpack.c.l.b16 %v50
  %v346 = vunpack.c.l.b16 %v51
  %v347 = vunpack.c.l.b16 %v52
  %v348 = vunpack.c.l.b16 %v53
  %v349 = vunpack.c.l.b16 %v54
  %v350 = vunpack.c.l.b16 %v55
  %v351 = vunpack.c.l.b16 %v56
  %v352 = vunpack.c.l.b16 %v57
  %v353 = vunpack.c.l.b16 %v58
  %v354 = vunpack.c.l.b16 %v59
  %v355 = vunpack.c.l.b16 %v60
  %v356 = vunpack.c.l.b16 %v61
  %v357 = vunpack.c.l.b16 %v62
  %v358 = vunpack.c.l.b16 %v63
  %v359 = vunpack.c.l.b16 %v64
  %v360 = vunpack.c.l.b16 %v65
  %v361 = vunpack.c.l.b16 %v66
  %v362 = vunpack.c.l.b16 %v67
  %v363 = vunpack.c.l.b16 %v68
  %v364 = vunpack.c.l.b16 %v69
  %v365 = vunpack.c.l.b16 %v70
  %v366 = vunpack.c.l.b16 %v71
  %v367 = vunpack.c.l.b16 %v72
  %v368 = vunpack.c.l.b16 %v73
  %v369 = vunpack.c.l.b16 %v74
  %v370 = vunpack.c.l.b16 %v75
  %v371 = vunpack.c.l.b16 %v76
  %v372 = vunpack.c.l.b16 %v77
  %v373 = vunpack.c.l.b16 %v78
  %v374 = vunpack.c.l.b16 %v79
  %v375 = vunpack.c.l.b16 %v80
  %v376 = vunpack.c.l.b16 %v81
  %v377 = vunpack.c.l.b16 %v82
  %v378 = vunpack.c.l.b16 %v83
  %v379 = vunpack.c.l.b16 %v84
  %v380 = vunpack.c.l.b16 %v85
  %v381 = vunpack.c.l.b16 %v86
  %v382 = vunpack.c.l.b16 %v87
  %v383 = vunpack.c.l.b16 %v88
  %v384 = vunpack.c.l.b16 %v89
  %v385 = vunpack.c.l.b16 %v90
  %v386 = vunpack.c.l.b16 %v91
  %v387 = vunpack.c.l.b16 %v92
  %v388 = vunpack.c.l.b16 %v93
  %v389 = vunpack.c.l.b16 %v94
  %v390 = vunpack.c.l.b16 %v95
  %v391 = vunpack.c.l.b16 %v96
  %v392 = vunpack.c.l.b16 %v97
  %v393 = vunpack.c.l.b16 %v98
  %v394 = vunpack.c.l.b16 %v99
  %v395 = vunpack.c.l.b16 %v100
  %v396 = vunpack.c.l.b16 %v101
  %v397 = vunpack.c.l.b16 %v102
  %v398 = vunpack.c.l.b16 %v103
  %v399 = vunpack.c.l.b16 %v104
  %v400 = vunpack.c.l.b16 %v105
  %v401 = vunpack.c.l.b16 %v106
  %v402 = vunpack.c.l.b16 %v107
  %v403 = vunpack.c.l.b16 %v108
  %v404 = vunpack.c.l.b16 %v109
  %v405 = vunpack.c.l.b16 %v110
  %v406 = vunpack.c.l.b16 %v111
  %v407 = vunpack.c.l.b16 %v112
  %v408 = vpack.c.b16 %v345, %v344
  %v409 = vpack.c.b16 %v347, %v346
  %v410 = vpack.c.b16 %v349, %v348
  %v411 = vpack.c.b16 %v351, %v350
  %v412 = vpack.c.b16 %v353, %v352
  %v413 = vpack.c.b16 %v355, %v354
  %v414 = vpack.c.b16 %v357, %v356
  %v415 = vpack.c.b16 %v359, %v358
  %v416 = vpack.c.b16 %v361, %v360
  %v417 = vpack.c.b16 %v363, %v362
  %v418 = vpack.c.b16 %v365, %v364
  %v419 = vpack.c.b16 %v367, %v366
  %v420 = vpack.c.b16 %v369, %v368
  %v421 = vpack.c.b16 %v371, %v370
  %v422 = vpack.c.b16 %v373, %v372
  %v423 = vpack.c.b16 %v375, %v374
  %v424 = vpack.c.b16 %v377, %v376
  %v425 = vpack.c.b16 %v379, %v378
  %v426 = vpack.c.b16 %v381, %v380
  %v427 = vpack.c.b16 %v383, %v382
  %v428 = vpack.c.b16 %v385, %v384
  %v429 = vpack.c.b16 %v387, %v386
  %v430 = vpack.c.b16 %v389, %v388
  %v431 = vpack.c.b16 %v391, %v390
  %v432 = vpack.c.b16 %v393, %v392
  %v433 = vpack.c.b16 %v395, %v394
  %v434 = vpack.c.b16 %v397, %v396
  %v435 = vpack.c.b16 %v399, %v398
  %v436 = vpack.c.b16 %v401, %v400
  %v437 = vpack.c.b16 %v403, %v402
  %v438 = vpack.c.b16 %v405, %v404
  %v439 = vpack.c.b16 %v407, %v406
  %472 = vmatprep.subr.bf16.mxu0 0
  %473 = vmatpush1.bf16.msra.mxu0 %v408
  %474 = vmatprep.subr.bf16.mxu0 0
  %475 = vmatpush1.bf16.msra.mxu0 %v409
  %476 = vmatprep.subr.bf16.mxu0 0
  %477 = vmatpush1.bf16.msra.mxu0 %v410
  %478 = vmatprep.subr.bf16.mxu0 0
  %479 = vmatpush1.bf16.msra.mxu0 %v411
  %480 = vmatprep.subr.bf16.mxu0 0
  %481 = vmatpush1.bf16.msra.mxu0 %v412
  %482 = vmatprep.subr.bf16.mxu0 0
  %483 = vmatpush1.bf16.msra.mxu0 %v413
  %484 = vmatprep.subr.bf16.mxu0 0
  %485 = vmatpush1.bf16.msra.mxu0 %v414
  %486 = vmatprep.subr.bf16.mxu0 0
  %487 = vmatpush1.bf16.msra.mxu0 %v415
  %488 = vmatprep.subr.bf16.mxu0 0
  %489 = vmatpush1.bf16.msra.mxu0 %v416
  %490 = vmatprep.subr.bf16.mxu0 0
  %491 = vmatpush1.bf16.msra.mxu0 %v417
  %492 = vmatprep.subr.bf16.mxu0 0
  %493 = vmatpush1.bf16.msra.mxu0 %v418
  %494 = vmatprep.subr.bf16.mxu0 0
  %495 = vmatpush1.bf16.msra.mxu0 %v419
  %496 = vmatprep.subr.bf16.mxu0 0
  %497 = vmatpush1.bf16.msra.mxu0 %v420
  %498 = vmatprep.subr.bf16.mxu0 0
  %499 = vmatpush1.bf16.msra.mxu0 %v421
  %500 = vmatprep.subr.bf16.mxu0 0
  %501 = vmatpush1.bf16.msra.mxu0 %v422
  %502 = vmatprep.subr.bf16.mxu0 0
  %503 = vmatpush1.bf16.msra.mxu0 %v423
  %504 = vmatprep.mubr.bf16.mxu0 %v217
  %505 = vmatmul.mubr.bf16.gmra.mrb[0].mxu0 %v216
  %v506 = vpop.f32.mrb[0].mxu0
  %v507 = vadd.f32 %v118, %v506
  %v508 = vpop.f32.mrb[0].mxu0
  %v509 = vpop.f32.mrb[0].mxu0
  %v510 = vadd.f32 %v118, %v509
  %v511 = vpop.f32.mrb[0].mxu0
  %512 = vmatprep.mubr.bf16.mxu0 %v221
  %513 = vmatmul.mubr.bf16.gmra.mrb[0].mxu0 %v220
  %v514 = vpop.f32.mrb[0].mxu0
  %v515 = vadd.f32 %v118, %v514
  %v516 = vpop.f32.mrb[0].mxu0
  %v517 = vpop.f32.mrb[0].mxu0
  %v518 = vadd.f32 %v118, %v517
  %v519 = vpop.f32.mrb[0].mxu0
  %520 = vmatprep.mubr.bf16.mxu0 %v225
  %521 = vmatmul.mubr.bf16.gmra.mrb[0].mxu0 %v224
  %v522 = vpop.f32.mrb[0].mxu0
  %v523 = vadd.f32 %v118, %v522
  %v524 = vpop.f32.mrb[0].mxu0
  %v525 = vpop.f32.mrb[0].mxu0
  %v526 = vadd.f32 %v118, %v525
  %v527 = vpop.f32.mrb[0].mxu0
  %528 = vmatprep.mubr.bf16.mxu0 %v229
  %529 = vmatmul.mubr.bf16.gmra.mrb[0].mxu0 %v228
  %v530 = vpop.f32.mrb[0].mxu0
  %v531 = vadd.f32 %v118, %v530
  %v532 = vpop.f32.mrb[0].mxu0
  %v533 = vpop.f32.mrb[0].mxu0
  %v534 = vadd.f32 %v118, %v533
  %v535 = vpop.f32.mrb[0].mxu0
  %536 = vmatprep.mubr.bf16.mxu0 %v233
  %537 = vmatmul.mubr.bf16.gmra.mrb[0].mxu0 %v232
  %v538 = vpop.f32.mrb[0].mxu0
  %v539 = vadd.f32 %v118, %v538
  %v540 = vpop.f32.mrb[0].mxu0
  %v541 = vpop.f32.mrb[0].mxu0
  %v542 = vadd.f32 %v118, %v541
  %v543 = vpop.f32.mrb[0].mxu0
  %544 = vmatprep.mubr.bf16.mxu0 %v237
  %545 = vmatmul.mubr.bf16.gmra.mrb[0].mxu0 %v236
  %v546 = vpop.f32.mrb[0].mxu0
  %v547 = vadd.f32 %v118, %v546
  %v548 = vpop.f32.mrb[0].mxu0
  %v549 = vpop.f32.mrb[0].mxu0
  %v550 = vadd.f32 %v118, %v549
  %v551 = vpop.f32.mrb[0].mxu0
  %552 = vmatprep.mubr.bf16.mxu0 %v241
  %553 = vmatmul.mubr.bf16.gmra.mrb[0].mxu0 %v240
  %v554 = vpop.f32.mrb[0].mxu0
  %v555 = vadd.f32 %v118, %v554
  %v556 = vpop.f32.mrb[0].mxu0
  %v557 = vpop.f32.mrb[0].mxu0
  %v558 = vadd.f32 %v118, %v557
  %v559 = vpop.f32.mrb[0].mxu0
  %560 = vmatprep.mubr.bf16.mxu0 %v245
  %561 = vmatmul.mubr.bf16.gmra.mrb[0].mxu0 %v244
  %v562 = vpop.f32.mrb[0].mxu0
  %v563 = vadd.f32 %v118, %v562
  %v564 = vpop.f32.mrb[0].mxu0
  %v565 = vpop.f32.mrb[0].mxu0
  %v566 = vadd.f32 %v118, %v565
  %v567 = vpop.f32.mrb[0].mxu0
  %568 = vdwg.mxu0
  %569 = vmatprep.subr.bf16.mxu0 0
  %570 = vmatpush1.bf16.msra.mxu0 %v424
  %571 = vmatprep.subr.bf16.mxu0 0
  %572 = vmatpush1.bf16.msra.mxu0 %v425
  %573 = vmatprep.subr.bf16.mxu0 0
  %574 = vmatpush1.bf16.msra.mxu0 %v426
  %575 = vmatprep.subr.bf16.mxu0 0
  %576 = vmatpush1.bf16.msra.mxu0 %v427
  %577 = vmatprep.subr.bf16.mxu0 0
  %578 = vmatpush1.bf16.msra.mxu0 %v428
  %579 = vmatprep.subr.bf16.mxu0 0
  %580 = vmatpush1.bf16.msra.mxu0 %v429
  %581 = vmatprep.subr.bf16.mxu0 0
  %582 = vmatpush1.bf16.msra.mxu0 %v430
  %583 = vmatprep.subr.bf16.mxu0 0
  %584 = vmatpush1.bf16.msra.mxu0 %v431
  %585 = vmatprep.subr.bf16.mxu0 0
  %586 = vmatpush1.bf16.msra.mxu0 %v432
  %587 = vmatprep.subr.bf16.mxu0 0
  %588 = vmatpush1.bf16.msra.mxu0 %v433
  %589 = vmatprep.subr.bf16.mxu0 0
  %590 = vmatpush1.bf16.msra.mxu0 %v434
  %591 = vmatprep.subr.bf16.mxu0 0
  %592 = vmatpush1.bf16.msra.mxu0 %v435
  %593 = vmatprep.subr.bf16.mxu0 0
  %594 = vmatpush1.bf16.msra.mxu0 %v436
  %595 = vmatprep.subr.bf16.mxu0 0
  %596 = vmatpush1.bf16.msra.mxu0 %v437
  %597 = vmatprep.subr.bf16.mxu0 0
  %598 = vmatpush1.bf16.msra.mxu0 %v438
  %599 = vmatprep.subr.bf16.mxu0 0
  %600 = vmatpush1.bf16.msra.mxu0 %v439
  %601 = vmatprep.mubr.bf16.mxu0 %v219
  %602 = vmatmul.mubr.bf16.gmra.mrb[0].mxu0 %v218
  %v603 = vpop.f32.mrb[0].mxu0
  %v604 = vadd.f32 %v507, %v603
  %v605 = vpop.f32.mrb[0].mxu0
  %v606 = vpop.f32.mrb[0].mxu0
  %v607 = vadd.f32 %v510, %v606
  %v608 = vpop.f32.mrb[0].mxu0
  %609 = vmatprep.mubr.bf16.mxu0 %v223
  %610 = vmatmul.mubr.bf16.gmra.mrb[0].mxu0 %v222
  %v611 = vpop.f32.mrb[0].mxu0
  %v612 = vadd.f32 %v515, %v611
  %v613 = vpop.f32.mrb[0].mxu0
  %v614 = vpop.f32.mrb[0].mxu0
  %v615 = vadd.f32 %v518, %v614
  %v616 = vpop.f32.mrb[0].mxu0
  %617 = vmatprep.mubr.bf16.mxu0 %v227
  %618 = vmatmul.mubr.bf16.gmra.mrb[0].mxu0 %v226
  %v619 = vpop.f32.mrb[0].mxu0
  %v620 = vadd.f32 %v523, %v619
  %v621 = vpop.f32.mrb[0].mxu0
  %v622 = vpop.f32.mrb[0].mxu0
  %v623 = vadd.f32 %v526, %v622
  %v624 = vpop.f32.mrb[0].mxu0
  %625 = vmatprep.mubr.bf16.mxu0 %v231
  %626 = vmatmul.mubr.bf16.gmra.mrb[0].mxu0 %v230
  %v627 = vpop.f32.mrb[0].mxu0
  %v628 = vadd.f32 %v531, %v627
  %v629 = vpop.f32.mrb[0].mxu0
  %v630 = vpop.f32.mrb[0].mxu0
  %v631 = vadd.f32 %v534, %v630
  %v632 = vpop.f32.mrb[0].mxu0
  %633 = vmatprep.mubr.bf16.mxu0 %v235
  %634 = vmatmul.mubr.bf16.gmra.mrb[0].mxu0 %v234
  %v635 = vpop.f32.mrb[0].mxu0
  %v636 = vadd.f32 %v539, %v635
  %v637 = vpop.f32.mrb[0].mxu0
  %v638 = vpop.f32.mrb[0].mxu0
  %v639 = vadd.f32 %v542, %v638
  %v640 = vpop.f32.mrb[0].mxu0
  %641 = vmatprep.mubr.bf16.mxu0 %v239
  %642 = vmatmul.mubr.bf16.gmra.mrb[0].mxu0 %v238
  %v643 = vpop.f32.mrb[0].mxu0
  %v644 = vadd.f32 %v547, %v643
  %v645 = vpop.f32.mrb[0].mxu0
  %v646 = vpop.f32.mrb[0].mxu0
  %v647 = vadd.f32 %v550, %v646
  %v648 = vpop.f32.mrb[0].mxu0
  %649 = vmatprep.mubr.bf16.mxu0 %v243
  %650 = vmatmul.mubr.bf16.gmra.mrb[0].mxu0 %v242
  %v651 = vpop.f32.mrb[0].mxu0
  %v652 = vadd.f32 %v555, %v651
  %v653 = vpop.f32.mrb[0].mxu0
  %v654 = vpop.f32.mrb[0].mxu0
  %v655 = vadd.f32 %v558, %v654
  %v656 = vpop.f32.mrb[0].mxu0
  %657 = vmatprep.mubr.bf16.mxu0 %v247
  %658 = vmatmul.mubr.bf16.gmra.mrb[0].mxu0 %v246
  %v659 = vpop.f32.mrb[0].mxu0
  %v660 = vadd.f32 %v563, %v659
  %v661 = vpop.f32.mrb[0].mxu0
  %v662 = vpop.f32.mrb[0].mxu0
  %v663 = vadd.f32 %v566, %v662
  %v664 = vpop.f32.mrb[0].mxu0
  %665 = vdwg.mxu0
  %vm666 = vcmask 523264
  %v667 = vsel %vm666, %v604, 0.0
  %v668 = vsel %vm666, %v607, 0.0
  %v669 = vadd.f32 %v667, %v668
  %v670 = vsel %vm666, %v612, 0.0
  %v671 = vadd.f32 %v669, %v670
  %v672 = vsel %vm666, %v615, 0.0
  %v673 = vadd.f32 %v671, %v672
  %v674 = vsel %vm666, %v620, 0.0
  %v675 = vadd.f32 %v673, %v674
  %v676 = vsel %vm666, %v623, 0.0
  %v677 = vadd.f32 %v675, %v676
  %v678 = vsel %vm666, %v628, 0.0
  %v679 = vadd.f32 %v677, %v678
  %v680 = vsel %vm666, %v631, 0.0
  %v681 = vadd.f32 %v679, %v680
  %v682 = vsel %vm666, %v636, 0.0
  %v683 = vadd.f32 %v681, %v682
  %v684 = vsel %vm666, %v639, 0.0
  %v685 = vadd.f32 %v683, %v684
  %v686 = vsel %vm666, %v644, 0.0
  %v687 = vadd.f32 %v685, %v686
  %v688 = vsel %vm666, %v647, 0.0
  %v689 = vadd.f32 %v687, %v688
  %v690 = vsel %vm666, %v652, 0.0
  %v691 = vadd.f32 %v689, %v690
  %v692 = vsel %vm666, %v655, 0.0
  %v693 = vadd.f32 %v691, %v692
  %v694 = vsel %vm666, %v660, 0.0
  %v695 = vadd.f32 %v693, %v694
  %v696 = vsel %vm666, %v663, 0.0
  %v697 = vadd.f32 %v695, %v696
  %v698 = vrot.slane %v697, 4
  %v699 = vadd.f32 %v697, %v698
  %v700 = vrot.slane %v699, 2
  %v701 = vadd.f32 %v699, %v700
  %v702 = vrot.slane %v701, 1
  %v703 = vadd.f32 %v701, %v702
  %vm704 = vcmask 516096
  %705 = vst.msk [vmem:[%s4] sm:$0x1] %vm704, %v703
  %v706 = vmul.f32 %v604, %v604
  %v707 = vmul.f32 %v607, %v607
  %v708 = vmul.f32 %v612, %v612
  %v709 = vmul.f32 %v615, %v615
  %v710 = vmul.f32 %v620, %v620
  %v711 = vmul.f32 %v623, %v623
  %v712 = vmul.f32 %v628, %v628
  %v713 = vmul.f32 %v631, %v631
  %v714 = vmul.f32 %v636, %v636
  %v715 = vmul.f32 %v639, %v639
  %v716 = vmul.f32 %v644, %v644
  %v717 = vmul.f32 %v647, %v647
  %v718 = vmul.f32 %v652, %v652
  %v719 = vmul.f32 %v655, %v655
  %v720 = vmul.f32 %v660, %v660
  %v721 = vmul.f32 %v663, %v663
  %v722 = vsel %vm666, %v706, 0.0
  %v723 = vsel %vm666, %v707, 0.0
  %v724 = vadd.f32 %v722, %v723
  %v725 = vsel %vm666, %v708, 0.0
  %v726 = vadd.f32 %v724, %v725
  %v727 = vsel %vm666, %v709, 0.0
  %v728 = vadd.f32 %v726, %v727
  %v729 = vsel %vm666, %v710, 0.0
  %v730 = vadd.f32 %v728, %v729
  %v731 = vsel %vm666, %v711, 0.0
  %v732 = vadd.f32 %v730, %v731
  %v733 = vsel %vm666, %v712, 0.0
  %v734 = vadd.f32 %v732, %v733
  %v735 = vsel %vm666, %v713, 0.0
  %v736 = vadd.f32 %v734, %v735
  %v737 = vsel %vm666, %v714, 0.0
  %v738 = vadd.f32 %v736, %v737
  %v739 = vsel %vm666, %v715, 0.0
  %v740 = vadd.f32 %v738, %v739
  %v741 = vsel %vm666, %v716, 0.0
  %v742 = vadd.f32 %v740, %v741
  %v743 = vsel %vm666, %v717, 0.0
  %v744 = vadd.f32 %v742, %v743
  %v745 = vsel %vm666, %v718, 0.0
  %v746 = vadd.f32 %v744, %v745
  %v747 = vsel %vm666, %v719, 0.0
  %v748 = vadd.f32 %v746, %v747
  %v749 = vsel %vm666, %v720, 0.0
  %v750 = vadd.f32 %v748, %v749
  %v751 = vsel %vm666, %v721, 0.0
  %v752 = vadd.f32 %v750, %v751
  %v753 = vrot.slane %v752, 4
  %v754 = vadd.f32 %v752, %v753
  %v755 = vrot.slane %v754, 2
  %v756 = vadd.f32 %v754, %v755
  %v757 = vrot.slane %v756, 1
  %v758 = vadd.f32 %v756, %v757
  %759 = vst.msk [vmem:[%s4 + $0x1] sm:$0x1] %vm704, %v758
  %v760 = vpack.c.bf16 %v607, %v604
  %v761 = vpack.c.bf16 %v615, %v612
  %v762 = vpack.c.bf16 %v623, %v620
  %v763 = vpack.c.bf16 %v631, %v628
  %v764 = vpack.c.bf16 %v639, %v636
  %v765 = vpack.c.bf16 %v647, %v644
  %v766 = vpack.c.bf16 %v655, %v652
  %v767 = vpack.c.bf16 %v663, %v660
  %v776 = vunpack.c.l.b16 %v760
  %v777 = vunpack.c.h.b16 %v760
  %v778 = vunpack.c.l.b16 %v761
  %v779 = vunpack.c.h.b16 %v761
  %v780 = vunpack.c.l.b16 %v762
  %v781 = vunpack.c.h.b16 %v762
  %v782 = vunpack.c.l.b16 %v763
  %v783 = vunpack.c.h.b16 %v763
  %v784 = vunpack.c.l.b16 %v764
  %v785 = vunpack.c.h.b16 %v764
  %v786 = vunpack.c.l.b16 %v765
  %v787 = vunpack.c.h.b16 %v765
  %v788 = vunpack.c.l.b16 %v766
  %v789 = vunpack.c.h.b16 %v766
  %v790 = vunpack.c.l.b16 %v767
  %v791 = vunpack.c.h.b16 %v767
  %v792 = vpack.c.b16 %v776, %v776
  %v793 = vpack.c.b16 %v777, %v777
  %v794 = vpack.c.b16 %v778, %v778
  %v795 = vpack.c.b16 %v779, %v779
  %v796 = vpack.c.b16 %v780, %v780
  %v797 = vpack.c.b16 %v781, %v781
  %v798 = vpack.c.b16 %v782, %v782
  %v799 = vpack.c.b16 %v783, %v783
  %v800 = vpack.c.b16 %v784, %v784
  %v801 = vpack.c.b16 %v785, %v785
  %v802 = vpack.c.b16 %v786, %v786
  %v803 = vpack.c.b16 %v787, %v787
  %v804 = vpack.c.b16 %v788, %v788
  %v805 = vpack.c.b16 %v789, %v789
  %v806 = vpack.c.b16 %v790, %v790
  %v807 = vpack.c.b16 %v791, %v791
  %vm824 = vcmask 519168
  %825 = vst.msk [vmem:[%s3] sm:$0xf] %vm824, %v792
  %826 = vst.msk [vmem:[%s3 + $0x4] sm:$0xf] %vm824, %v793
  %827 = vst.msk [vmem:[%s3 + $0x8] sm:$0xf] %vm824, %v794
  %828 = vst.msk [vmem:[%s3 + $0xc] sm:$0xf] %vm824, %v795
  %829 = vst.msk [vmem:[%s3 + $0x10] sm:$0xf] %vm824, %v796
  %830 = vst.msk [vmem:[%s3 + $0x14] sm:$0xf] %vm824, %v797
  %831 = vst.msk [vmem:[%s3 + $0x18] sm:$0xf] %vm824, %v798
  %832 = vst.msk [vmem:[%s3 + $0x1c] sm:$0xf] %vm824, %v799
  %833 = vst.msk [vmem:[%s3 + $0x20] sm:$0xf] %vm824, %v800
  %834 = vst.msk [vmem:[%s3 + $0x24] sm:$0xf] %vm824, %v801
  %835 = vst.msk [vmem:[%s3 + $0x28] sm:$0xf] %vm824, %v802
  %836 = vst.msk [vmem:[%s3 + $0x2c] sm:$0xf] %vm824, %v803
  %837 = vst.msk [vmem:[%s3 + $0x30] sm:$0xf] %vm824, %v804
  %838 = vst.msk [vmem:[%s3 + $0x34] sm:$0xf] %vm824, %v805
  %839 = vst.msk [vmem:[%s3 + $0x38] sm:$0xf] %vm824, %v806
  %840 = vst.msk [vmem:[%s3 + $0x3c] sm:$0xf] %vm824, %v807
  // Predicated region
  $region14: #{discriminator_forward.6} parent=0 // pred_check
    _
  $region15: #{discriminator_forward.6} parent=0 // pred_check_branch
    %842 = sbr.rel (0) target = $region17
  $region16: #{discriminator_forward.6} parent=0 // pred_region
    _
  $region17: #{discriminator_forward.6} parent=0 // pred_fallthru
    _
  // Predicated region
  $region18: #{discriminator_forward.6} parent=0 // pred_check
    _
  $region19: #{discriminator_forward.6} parent=0 // pred_check_branch
    %844 = sbr.rel (0) target = $region21
  $region20: #{discriminator_forward.6} parent=0 // pred_region
    _
  $region21: #{discriminator_forward.6} parent=0 // pred_fallthru
    _
  // Predicated region
  $region22: #{discriminator_forward.6} parent=0 // pred_check
    _
  $region23: #{discriminator_forward.6} parent=0 // pred_check_branch
    %846 = sbr.rel (0) target = $region25
  $region24: #{discriminator_forward.6} parent=0 // pred_region
    _
  $region25: #{discriminator_forward.6} parent=0 // pred_fallthru
    _
  // Predicated region
  $region26: #{discriminator_forward.6} parent=0 // pred_check
    _
  $region27: #{discriminator_forward.6} parent=0 // pred_check_branch
    %848 = sbr.rel (0) target = $region29
  $region28: #{discriminator_forward.6} parent=0 // pred_region
    _
  $region29: #{discriminator_forward.6} parent=0 // pred_fallthru
    _

// kernel: discriminator_forward.7
$region0: #{discriminator_forward.7}
  #allocation0 [shape = 'u32[]', space=smem, size = 0x4, offset = 0x4, fixed_abs, tag = 'smem constant byte address 0x4 - core index']
  #allocation1 [shape = 'u32[144,128]{1,0:T(1,128)}', space=vmem, size = 0x12000, scoped, tag = 'internal scratch']
  %s0 = inlined_call_operand.vmem [shape: bf16[32,1024], index: 0, kind: input, shape index: {}]
  %s1 = inlined_call_operand.vmem [shape: bf16[1024,128], index: 1, kind: input, shape index: {}]
  %s2 = inlined_call_operand.vmem [shape: f32[1,128], index: 2, kind: input, shape index: {}]
  %s3 = inlined_call_operand.vmem [shape: bf16[32,128], index: 3, kind: output, shape index: {0}]
  %s4 = inlined_call_operand.vmem [shape: f32[1,2,128], index: 4, kind: output, shape index: {1}]
  %5 = xla_tuple %s3, %s4
  %s6 = sld [smem:[#allocation0]]
  $region30: #{discriminator_forward.7} parent=0
    _
  %s8 = ssub.s32 1, %s6
  %s9 = scalar_select 0, %s8, %s6
  // Predicated region
  $region2: #{discriminator_forward.7} parent=0 // pred_check
    _
  $region3: #{discriminator_forward.7} parent=0 // pred_check_branch
    %11 = sbr.rel (0) target = $region5
  $region4: #{discriminator_forward.7} parent=0 // pred_region
    _
  $region5: #{discriminator_forward.7} parent=0 // pred_fallthru
    _
  // Predicated region
  $region6: #{discriminator_forward.7} parent=0 // pred_check
    _
  $region7: #{discriminator_forward.7} parent=0 // pred_check_branch
    %13 = sbr.rel (0) target = $region9
  $region8: #{discriminator_forward.7} parent=0 // pred_region
    _
  $region9: #{discriminator_forward.7} parent=0 // pred_fallthru
    _
  // Predicated region
  $region10: #{discriminator_forward.7} parent=0 // pred_check
    _
  $region11: #{discriminator_forward.7} parent=0 // pred_check_branch
    %15 = sbr.rel (0) target = $region13
  $region12: #{discriminator_forward.7} parent=0 // pred_region
    _
  $region13: #{discriminator_forward.7} parent=0 // pred_fallthru
    _
  %v17 = vld [vmem:[%s0] sm:$0xff]
  %v18 = vld [vmem:[%s0 + $0x8] sm:$0xff]
  %v19 = vld [vmem:[%s0 + $0x10] sm:$0xff]
  %v20 = vld [vmem:[%s0 + $0x18] sm:$0xff]
  %v21 = vld [vmem:[%s0 + $0x20] sm:$0xff]
  %v22 = vld [vmem:[%s0 + $0x28] sm:$0xff]
  %v23 = vld [vmem:[%s0 + $0x30] sm:$0xff]
  %v24 = vld [vmem:[%s0 + $0x38] sm:$0xff]
  %v25 = vld [vmem:[%s0 + $0x40] sm:$0xff]
  %v26 = vld [vmem:[%s0 + $0x48] sm:$0xff]
  %v27 = vld [vmem:[%s0 + $0x50] sm:$0xff]
  %v28 = vld [vmem:[%s0 + $0x58] sm:$0xff]
  %v29 = vld [vmem:[%s0 + $0x60] sm:$0xff]
  %v30 = vld [vmem:[%s0 + $0x68] sm:$0xff]
  %v31 = vld [vmem:[%s0 + $0x70] sm:$0xff]
  %v32 = vld [vmem:[%s0 + $0x78] sm:$0xff]
  %v33 = vld [vmem:[%s1] sm:$0xf]
  %v34 = vld [vmem:[%s1 + $0x4] sm:$0xf]
  %v35 = vld [vmem:[%s1 + $0x8] sm:$0xf]
  %v36 = vld [vmem:[%s1 + $0xc] sm:$0xf]
  %v37 = vld [vmem:[%s1 + $0x10] sm:$0xf]
  %v38 = vld [vmem:[%s1 + $0x14] sm:$0xf]
  %v39 = vld [vmem:[%s1 + $0x18] sm:$0xf]
  %v40 = vld [vmem:[%s1 + $0x1c] sm:$0xf]
  %v41 = vld [vmem:[%s1 + $0x20] sm:$0xf]
  %v42 = vld [vmem:[%s1 + $0x24] sm:$0xf]
  %v43 = vld [vmem:[%s1 + $0x28] sm:$0xf]
  %v44 = vld [vmem:[%s1 + $0x2c] sm:$0xf]
  %v45 = vld [vmem:[%s1 + $0x30] sm:$0xf]
  %v46 = vld [vmem:[%s1 + $0x34] sm:$0xf]
  %v47 = vld [vmem:[%s1 + $0x38] sm:$0xf]
  %v48 = vld [vmem:[%s1 + $0x3c] sm:$0xf]
  %v49 = vld [vmem:[%s1 + $0x40] sm:$0xf]
  %v50 = vld [vmem:[%s1 + $0x44] sm:$0xf]
  %v51 = vld [vmem:[%s1 + $0x48] sm:$0xf]
  %v52 = vld [vmem:[%s1 + $0x4c] sm:$0xf]
  %v53 = vld [vmem:[%s1 + $0x50] sm:$0xf]
  %v54 = vld [vmem:[%s1 + $0x54] sm:$0xf]
  %v55 = vld [vmem:[%s1 + $0x58] sm:$0xf]
  %v56 = vld [vmem:[%s1 + $0x5c] sm:$0xf]
  %v57 = vld [vmem:[%s1 + $0x60] sm:$0xf]
  %v58 = vld [vmem:[%s1 + $0x64] sm:$0xf]
  %v59 = vld [vmem:[%s1 + $0x68] sm:$0xf]
  %v60 = vld [vmem:[%s1 + $0x6c] sm:$0xf]
  %v61 = vld [vmem:[%s1 + $0x70] sm:$0xf]
  %v62 = vld [vmem:[%s1 + $0x74] sm:$0xf]
  %v63 = vld [vmem:[%s1 + $0x78] sm:$0xf]
  %v64 = vld [vmem:[%s1 + $0x7c] sm:$0xf]
  %v65 = vld [vmem:[%s1 + $0x80] sm:$0xf]
  %v66 = vld [vmem:[%s1 + $0x84] sm:$0xf]
  %v67 = vld [vmem:[%s1 + $0x88] sm:$0xf]
  %v68 = vld [vmem:[%s1 + $0x8c] sm:$0xf]
  %v69 = vld [vmem:[%s1 + $0x90] sm:$0xf]
  %v70 = vld [vmem:[%s1 + $0x94] sm:$0xf]
  %v71 = vld [vmem:[%s1 + $0x98] sm:$0xf]
  %v72 = vld [vmem:[%s1 + $0x9c] sm:$0xf]
  %v73 = vld [vmem:[%s1 + $0xa0] sm:$0xf]
  %v74 = vld [vmem:[%s1 + $0xa4] sm:$0xf]
  %v75 = vld [vmem:[%s1 + $0xa8] sm:$0xf]
  %v76 = vld [vmem:[%s1 + $0xac] sm:$0xf]
  %v77 = vld [vmem:[%s1 + $0xb0] sm:$0xf]
  %v78 = vld [vmem:[%s1 + $0xb4] sm:$0xf]
  %v79 = vld [vmem:[%s1 + $0xb8] sm:$0xf]
  %v80 = vld [vmem:[%s1 + $0xbc] sm:$0xf]
  %v81 = vld [vmem:[%s1 + $0xc0] sm:$0xf]
  %v82 = vld [vmem:[%s1 + $0xc4] sm:$0xf]
  %v83 = vld [vmem:[%s1 + $0xc8] sm:$0xf]
  %v84 = vld [vmem:[%s1 + $0xcc] sm:$0xf]
  %v85 = vld [vmem:[%s1 + $0xd0] sm:$0xf]
  %v86 = vld [vmem:[%s1 + $0xd4] sm:$0xf]
  %v87 = vld [vmem:[%s1 + $0xd8] sm:$0xf]
  %v88 = vld [vmem:[%s1 + $0xdc] sm:$0xf]
  %v89 = vld [vmem:[%s1 + $0xe0] sm:$0xf]
  %v90 = vld [vmem:[%s1 + $0xe4] sm:$0xf]
  %v91 = vld [vmem:[%s1 + $0xe8] sm:$0xf]
  %v92 = vld [vmem:[%s1 + $0xec] sm:$0xf]
  %v93 = vld [vmem:[%s1 + $0xf0] sm:$0xf]
  %v94 = vld [vmem:[%s1 + $0xf4] sm:$0xf]
  %v95 = vld [vmem:[%s1 + $0xf8] sm:$0xf]
  %v96 = vld [vmem:[%s1 + $0xfc] sm:$0xf]
  %v97 = vld [vmem:[%s1 + $0x100] sm:$0xf]
  %v98 = vld [vmem:[%s1 + $0x104] sm:$0xf]
  %v99 = vld [vmem:[%s1 + $0x108] sm:$0xf]
  %v100 = vld [vmem:[%s1 + $0x10c] sm:$0xf]
  %v101 = vld [vmem:[%s1 + $0x110] sm:$0xf]
  %v102 = vld [vmem:[%s1 + $0x114] sm:$0xf]
  %v103 = vld [vmem:[%s1 + $0x118] sm:$0xf]
  %v104 = vld [vmem:[%s1 + $0x11c] sm:$0xf]
  %v105 = vld [vmem:[%s1 + $0x120] sm:$0xf]
  %v106 = vld [vmem:[%s1 + $0x124] sm:$0xf]
  %v107 = vld [vmem:[%s1 + $0x128] sm:$0xf]
  %v108 = vld [vmem:[%s1 + $0x12c] sm:$0xf]
  %v109 = vld [vmem:[%s1 + $0x130] sm:$0xf]
  %v110 = vld [vmem:[%s1 + $0x134] sm:$0xf]
  %v111 = vld [vmem:[%s1 + $0x138] sm:$0xf]
  %v112 = vld [vmem:[%s1 + $0x13c] sm:$0xf]
  %v113 = vld [vmem:[%s1 + $0x140] sm:$0xf]
  %v114 = vld [vmem:[%s1 + $0x144] sm:$0xf]
  %v115 = vld [vmem:[%s1 + $0x148] sm:$0xf]
  %v116 = vld [vmem:[%s1 + $0x14c] sm:$0xf]
  %v117 = vld [vmem:[%s1 + $0x150] sm:$0xf]
  %v118 = vld [vmem:[%s1 + $0x154] sm:$0xf]
  %v119 = vld [vmem:[%s1 + $0x158] sm:$0xf]
  %v120 = vld [vmem:[%s1 + $0x15c] sm:$0xf]
  %v121 = vld [vmem:[%s1 + $0x160] sm:$0xf]
  %v122 = vld [vmem:[%s1 + $0x164] sm:$0xf]
  %v123 = vld [vmem:[%s1 + $0x168] sm:$0xf]
  %v124 = vld [vmem:[%s1 + $0x16c] sm:$0xf]
  %v125 = vld [vmem:[%s1 + $0x170] sm:$0xf]
  %v126 = vld [vmem:[%s1 + $0x174] sm:$0xf]
  %v127 = vld [vmem:[%s1 + $0x178] sm:$0xf]
  %v128 = vld [vmem:[%s1 + $0x17c] sm:$0xf]
  %v129 = vld [vmem:[%s1 + $0x180] sm:$0xf]
  %v130 = vld [vmem:[%s1 + $0x184] sm:$0xf]
  %v131 = vld [vmem:[%s1 + $0x188] sm:$0xf]
  %v132 = vld [vmem:[%s1 + $0x18c] sm:$0xf]
  %v133 = vld [vmem:[%s1 + $0x190] sm:$0xf]
  %v134 = vld [vmem:[%s1 + $0x194] sm:$0xf]
  %v135 = vld [vmem:[%s1 + $0x198] sm:$0xf]
  %v136 = vld [vmem:[%s1 + $0x19c] sm:$0xf]
  %v137 = vld [vmem:[%s1 + $0x1a0] sm:$0xf]
  %v138 = vld [vmem:[%s1 + $0x1a4] sm:$0xf]
  %v139 = vld [vmem:[%s1 + $0x1a8] sm:$0xf]
  %v140 = vld [vmem:[%s1 + $0x1ac] sm:$0xf]
  %v141 = vld [vmem:[%s1 + $0x1b0] sm:$0xf]
  %v142 = vld [vmem:[%s1 + $0x1b4] sm:$0xf]
  %v143 = vld [vmem:[%s1 + $0x1b8] sm:$0xf]
  %v144 = vld [vmem:[%s1 + $0x1bc] sm:$0xf]
  %v145 = vld [vmem:[%s1 + $0x1c0] sm:$0xf]
  %v146 = vld [vmem:[%s1 + $0x1c4] sm:$0xf]
  %v147 = vld [vmem:[%s1 + $0x1c8] sm:$0xf]
  %v148 = vld [vmem:[%s1 + $0x1cc] sm:$0xf]
  %v149 = vld [vmem:[%s1 + $0x1d0] sm:$0xf]
  %v150 = vld [vmem:[%s1 + $0x1d4] sm:$0xf]
  %v151 = vld [vmem:[%s1 + $0x1d8] sm:$0xf]
  %v152 = vld [vmem:[%s1 + $0x1dc] sm:$0xf]
  %v153 = vld [vmem:[%s1 + $0x1e0] sm:$0xf]
  %v154 = vld [vmem:[%s1 + $0x1e4] sm:$0xf]
  %v155 = vld [vmem:[%s1 + $0x1e8] sm:$0xf]
  %v156 = vld [vmem:[%s1 + $0x1ec] sm:$0xf]
  %v157 = vld [vmem:[%s1 + $0x1f0] sm:$0xf]
  %v158 = vld [vmem:[%s1 + $0x1f4] sm:$0xf]
  %v159 = vld [vmem:[%s1 + $0x1f8] sm:$0xf]
  %v160 = vld [vmem:[%s1 + $0x1fc] sm:$0xf]
  %v161 = vld [vmem:[%s2] sm:$0x1]
  %v163 = vlaneseq
  %v164 = vshrl.u32 %v163, 7
  %v165 = vsub.s32 0, %v164
  %v166 = vrot.slane %v161, %v165
  %v184 = vunpack.c.l.b16 %v17
  %v185 = vunpack.c.h.b16 %v17
  %v186 = vunpack.c.l.b16 %v18
  %v187 = vunpack.c.h.b16 %v18
  %v188 = vunpack.c.l.b16 %v19
  %v189 = vunpack.c.h.b16 %v19
  %v190 = vunpack.c.l.b16 %v20
  %v191 = vunpack.c.h.b16 %v20
  %v192 = vunpack.c.l.b16 %v21
  %v193 = vunpack.c.h.b16 %v21
  %v194 = vunpack.c.l.b16 %v22
  %v195 = vunpack.c.h.b16 %v22
  %v196 = vunpack.c.l.b16 %v23
  %v197 = vunpack.c.h.b16 %v23
  %v198 = vunpack.c.l.b16 %v24
  %v199 = vunpack.c.h.b16 %v24
  %v200 = vunpack.c.l.b16 %v25
  %v201 = vunpack.c.h.b16 %v25
  %v202 = vunpack.c.l.b16 %v26
  %v203 = vunpack.c.h.b16 %v26
  %v204 = vunpack.c.l.b16 %v27
  %v205 = vunpack.c.h.b16 %v27
  %v206 = vunpack.c.l.b16 %v28
  %v207 = vunpack.c.h.b16 %v28
  %v208 = vunpack.c.l.b16 %v29
  %v209 = vunpack.c.h.b16 %v29
  %v210 = vunpack.c.l.b16 %v30
  %v211 = vunpack.c.h.b16 %v30
  %v212 = vunpack.c.l.b16 %v31
  %v213 = vunpack.c.h.b16 %v31
  %v214 = vunpack.c.l.b16 %v32
  %v215 = vunpack.c.h.b16 %v32
  %v216 = vpack.c.b16 %v192, %v184
  %v217 = vpack.c.b16 %v193, %v185
  %v218 = vpack.c.b16 %v194, %v186
  %v219 = vpack.c.b16 %v195, %v187
  %v220 = vpack.c.b16 %v196, %v188
  %v221 = vpack.c.b16 %v197, %v189
  %v222 = vpack.c.b16 %v198, %v190
  %v223 = vpack.c.b16 %v199, %v191
  %v224 = vpack.c.b16 %v208, %v200
  %v225 = vpack.c.b16 %v209, %v201
  %v226 = vpack.c.b16 %v210, %v202
  %v227 = vpack.c.b16 %v211, %v203
  %v228 = vpack.c.b16 %v212, %v204
  %v229 = vpack.c.b16 %v213, %v205
  %v230 = vpack.c.b16 %v214, %v206
  %v231 = vpack.c.b16 %v215, %v207
  %v376 = vunpack.c.l.b16 %v33
  %v377 = vunpack.c.l.b16 %v34
  %v378 = vunpack.c.l.b16 %v35
  %v379 = vunpack.c.l.b16 %v36
  %v380 = vunpack.c.l.b16 %v37
  %v381 = vunpack.c.l.b16 %v38
  %v382 = vunpack.c.l.b16 %v39
  %v383 = vunpack.c.l.b16 %v40
  %v384 = vunpack.c.l.b16 %v41
  %v385 = vunpack.c.l.b16 %v42
  %v386 = vunpack.c.l.b16 %v43
  %v387 = vunpack.c.l.b16 %v44
  %v388 = vunpack.c.l.b16 %v45
  %v389 = vunpack.c.l.b16 %v46
  %v390 = vunpack.c.l.b16 %v47
  %v391 = vunpack.c.l.b16 %v48
  %v392 = vunpack.c.l.b16 %v49
  %v393 = vunpack.c.l.b16 %v50
  %v394 = vunpack.c.l.b16 %v51
  %v395 = vunpack.c.l.b16 %v52
  %v396 = vunpack.c.l.b16 %v53
  %v397 = vunpack.c.l.b16 %v54
  %v398 = vunpack.c.l.b16 %v55
  %v399 = vunpack.c.l.b16 %v56
  %v400 = vunpack.c.l.b16 %v57
  %v401 = vunpack.c.l.b16 %v58
  %v402 = vunpack.c.l.b16 %v59
  %v403 = vunpack.c.l.b16 %v60
  %v404 = vunpack.c.l.b16 %v61
  %v405 = vunpack.c.l.b16 %v62
  %v406 = vunpack.c.l.b16 %v63
  %v407 = vunpack.c.l.b16 %v64
  %v408 = vunpack.c.l.b16 %v65
  %v409 = vunpack.c.l.b16 %v66
  %v410 = vunpack.c.l.b16 %v67
  %v411 = vunpack.c.l.b16 %v68
  %v412 = vunpack.c.l.b16 %v69
  %v413 = vunpack.c.l.b16 %v70
  %v414 = vunpack.c.l.b16 %v71
  %v415 = vunpack.c.l.b16 %v72
  %v416 = vunpack.c.l.b16 %v73
  %v417 = vunpack.c.l.b16 %v74
  %v418 = vunpack.c.l.b16 %v75
  %v419 = vunpack.c.l.b16 %v76
  %v420 = vunpack.c.l.b16 %v77
  %v421 = vunpack.c.l.b16 %v78
  %v422 = vunpack.c.l.b16 %v79
  %v423 = vunpack.c.l.b16 %v80
  %v424 = vunpack.c.l.b16 %v81
  %v425 = vunpack.c.l.b16 %v82
  %v426 = vunpack.c.l.b16 %v83
  %v427 = vunpack.c.l.b16 %v84
  %v428 = vunpack.c.l.b16 %v85
  %v429 = vunpack.c.l.b16 %v86
  %v430 = vunpack.c.l.b16 %v87
  %v431 = vunpack.c.l.b16 %v88
  %v432 = vunpack.c.l.b16 %v89
  %v433 = vunpack.c.l.b16 %v90
  %v434 = vunpack.c.l.b16 %v91
  %v435 = vunpack.c.l.b16 %v92
  %v436 = vunpack.c.l.b16 %v93
  %v437 = vunpack.c.l.b16 %v94
  %v438 = vunpack.c.l.b16 %v95
  %v439 = vunpack.c.l.b16 %v96
  %v440 = vunpack.c.l.b16 %v97
  %v441 = vunpack.c.l.b16 %v98
  %v442 = vunpack.c.l.b16 %v99
  %v443 = vunpack.c.l.b16 %v100
  %v444 = vunpack.c.l.b16 %v101
  %v445 = vunpack.c.l.b16 %v102
  %v446 = vunpack.c.l.b16 %v103
  %v447 = vunpack.c.l.b16 %v104
  %v448 = vunpack.c.l.b16 %v105
  %v449 = vunpack.c.l.b16 %v106
  %v450 = vunpack.c.l.b16 %v107
  %v451 = vunpack.c.l.b16 %v108
  %v452 = vunpack.c.l.b16 %v109
  %v453 = vunpack.c.l.b16 %v110
  %v454 = vunpack.c.l.b16 %v111
  %v455 = vunpack.c.l.b16 %v112
  %v456 = vunpack.c.l.b16 %v113
  %v457 = vunpack.c.l.b16 %v114
  %v458 = vunpack.c.l.b16 %v115
  %v459 = vunpack.c.l.b16 %v116
  %v460 = vunpack.c.l.b16 %v117
  %v461 = vunpack.c.l.b16 %v118
  %v462 = vunpack.c.l.b16 %v119
  %v463 = vunpack.c.l.b16 %v120
  %v464 = vunpack.c.l.b16 %v121
  %v465 = vunpack.c.l.b16 %v122
  %v466 = vunpack.c.l.b16 %v123
  %v467 = vunpack.c.l.b16 %v124
  %v468 = vunpack.c.l.b16 %v125
  %v469 = vunpack.c.l.b16 %v126
  %v470 = vunpack.c.l.b16 %v127
  %v471 = vunpack.c.l.b16 %v128
  %v472 = vunpack.c.l.b16 %v129
  %v473 = vunpack.c.l.b16 %v130
  %v474 = vunpack.c.l.b16 %v131
  %v475 = vunpack.c.l.b16 %v132
  %v476 = vunpack.c.l.b16 %v133
  %v477 = vunpack.c.l.b16 %v134
  %v478 = vunpack.c.l.b16 %v135
  %v479 = vunpack.c.l.b16 %v136
  %v480 = vunpack.c.l.b16 %v137
  %v481 = vunpack.c.l.b16 %v138
  %v482 = vunpack.c.l.b16 %v139
  %v483 = vunpack.c.l.b16 %v140
  %v484 = vunpack.c.l.b16 %v141
  %v485 = vunpack.c.l.b16 %v142
  %v486 = vunpack.c.l.b16 %v143
  %v487 = vunpack.c.l.b16 %v144
  %v488 = vunpack.c.l.b16 %v145
  %v489 = vunpack.c.l.b16 %v146
  %v490 = vunpack.c.l.b16 %v147
  %v491 = vunpack.c.l.b16 %v148
  %v492 = vunpack.c.l.b16 %v149
  %v493 = vunpack.c.l.b16 %v150
  %v494 = vunpack.c.l.b16 %v151
  %v495 = vunpack.c.l.b16 %v152
  %v496 = vunpack.c.l.b16 %v153
  %v497 = vunpack.c.l.b16 %v154
  %v498 = vunpack.c.l.b16 %v155
  %v499 = vunpack.c.l.b16 %v156
  %v500 = vunpack.c.l.b16 %v157
  %v501 = vunpack.c.l.b16 %v158
  %v502 = vunpack.c.l.b16 %v159
  %v503 = vunpack.c.l.b16 %v160
  %v504 = vpack.c.b16 %v377, %v376
  %v505 = vpack.c.b16 %v379, %v378
  %v506 = vpack.c.b16 %v381, %v380
  %v507 = vpack.c.b16 %v383, %v382
  %v508 = vpack.c.b16 %v385, %v384
  %v509 = vpack.c.b16 %v387, %v386
  %v510 = vpack.c.b16 %v389, %v388
  %v511 = vpack.c.b16 %v391, %v390
  %v512 = vpack.c.b16 %v393, %v392
  %v513 = vpack.c.b16 %v395, %v394
  %v514 = vpack.c.b16 %v397, %v396
  %v515 = vpack.c.b16 %v399, %v398
  %v516 = vpack.c.b16 %v401, %v400
  %v517 = vpack.c.b16 %v403, %v402
  %v518 = vpack.c.b16 %v405, %v404
  %v519 = vpack.c.b16 %v407, %v406
  %v520 = vpack.c.b16 %v409, %v408
  %v521 = vpack.c.b16 %v411, %v410
  %v522 = vpack.c.b16 %v413, %v412
  %v523 = vpack.c.b16 %v415, %v414
  %v524 = vpack.c.b16 %v417, %v416
  %v525 = vpack.c.b16 %v419, %v418
  %v526 = vpack.c.b16 %v421, %v420
  %v527 = vpack.c.b16 %v423, %v422
  %v528 = vpack.c.b16 %v425, %v424
  %v529 = vpack.c.b16 %v427, %v426
  %v530 = vpack.c.b16 %v429, %v428
  %v531 = vpack.c.b16 %v431, %v430
  %v532 = vpack.c.b16 %v433, %v432
  %v533 = vpack.c.b16 %v435, %v434
  %v534 = vpack.c.b16 %v437, %v436
  %v535 = vpack.c.b16 %v439, %v438
  %v536 = vpack.c.b16 %v441, %v440
  %v537 = vpack.c.b16 %v443, %v442
  %v538 = vpack.c.b16 %v445, %v444
  %v539 = vpack.c.b16 %v447, %v446
  %v540 = vpack.c.b16 %v449, %v448
  %v541 = vpack.c.b16 %v451, %v450
  %v542 = vpack.c.b16 %v453, %v452
  %v543 = vpack.c.b16 %v455, %v454
  %v544 = vpack.c.b16 %v457, %v456
  %v545 = vpack.c.b16 %v459, %v458
  %v546 = vpack.c.b16 %v461, %v460
  %v547 = vpack.c.b16 %v463, %v462
  %v548 = vpack.c.b16 %v465, %v464
  %v549 = vpack.c.b16 %v467, %v466
  %v550 = vpack.c.b16 %v469, %v468
  %v551 = vpack.c.b16 %v471, %v470
  %v552 = vpack.c.b16 %v473, %v472
  %v553 = vpack.c.b16 %v475, %v474
  %v554 = vpack.c.b16 %v477, %v476
  %v555 = vpack.c.b16 %v479, %v478
  %v556 = vpack.c.b16 %v481, %v480
  %v557 = vpack.c.b16 %v483, %v482
  %v558 = vpack.c.b16 %v485, %v484
  %v559 = vpack.c.b16 %v487, %v486
  %v560 = vpack.c.b16 %v489, %v488
  %v561 = vpack.c.b16 %v491, %v490
  %v562 = vpack.c.b16 %v493, %v492
  %v563 = vpack.c.b16 %v495, %v494
  %v564 = vpack.c.b16 %v497, %v496
  %v565 = vpack.c.b16 %v499, %v498
  %v566 = vpack.c.b16 %v501, %v500
  %v567 = vpack.c.b16 %v503, %v502
  %632 = vmatprep.subr.bf16.mxu0 0
  %633 = vmatpush1.bf16.msra.mxu0 %v504
  %634 = vmatprep.subr.bf16.mxu0 0
  %635 = vmatpush1.bf16.msra.mxu0 %v505
  %636 = vmatprep.subr.bf16.mxu0 0
  %637 = vmatpush1.bf16.msra.mxu0 %v506
  %638 = vmatprep.subr.bf16.mxu0 0
  %639 = vmatpush1.bf16.msra.mxu0 %v507
  %640 = vmatprep.subr.bf16.mxu0 0
  %641 = vmatpush1.bf16.msra.mxu0 %v508
  %642 = vmatprep.subr.bf16.mxu0 0
  %643 = vmatpush1.bf16.msra.mxu0 %v509
  %644 = vmatprep.subr.bf16.mxu0 0
  %645 = vmatpush1.bf16.msra.mxu0 %v510
  %646 = vmatprep.subr.bf16.mxu0 0
  %647 = vmatpush1.bf16.msra.mxu0 %v511
  %648 = vmatprep.subr.bf16.mxu0 0
  %649 = vmatpush1.bf16.msra.mxu0 %v512
  %650 = vmatprep.subr.bf16.mxu0 0
  %651 = vmatpush1.bf16.msra.mxu0 %v513
  %652 = vmatprep.subr.bf16.mxu0 0
  %653 = vmatpush1.bf16.msra.mxu0 %v514
  %654 = vmatprep.subr.bf16.mxu0 0
  %655 = vmatpush1.bf16.msra.mxu0 %v515
  %656 = vmatprep.subr.bf16.mxu0 0
  %657 = vmatpush1.bf16.msra.mxu0 %v516
  %658 = vmatprep.subr.bf16.mxu0 0
  %659 = vmatpush1.bf16.msra.mxu0 %v517
  %660 = vmatprep.subr.bf16.mxu0 0
  %661 = vmatpush1.bf16.msra.mxu0 %v518
  %662 = vmatprep.subr.bf16.mxu0 0
  %663 = vmatpush1.bf16.msra.mxu0 %v519
  %664 = vmatprep.mubr.bf16.mxu0 %v217
  %665 = vmatmul.mubr.bf16.gmra.mrb[0].mxu0 %v216
  %v666 = vpop.f32.mrb[0].mxu0
  %v667 = vadd.f32 %v166, %v666
  %v668 = vpop.f32.mrb[0].mxu0
  %v669 = vpop.f32.mrb[0].mxu0
  %v670 = vadd.f32 %v166, %v669
  %v671 = vpop.f32.mrb[0].mxu0
  %672 = vmatprep.mubr.bf16.mxu0 %v225
  %673 = vmatmul.mubr.bf16.gmra.mrb[0].mxu0 %v224
  %v674 = vpop.f32.mrb[0].mxu0
  %v675 = vadd.f32 %v166, %v674
  %v676 = vpop.f32.mrb[0].mxu0
  %v677 = vpop.f32.mrb[0].mxu0
  %v678 = vadd.f32 %v166, %v677
  %v679 = vpop.f32.mrb[0].mxu0
  %680 = vdwg.mxu0
  %681 = vmatprep.subr.bf16.mxu0 0
  %682 = vmatpush1.bf16.msra.mxu0 %v520
  %683 = vmatprep.subr.bf16.mxu0 0
  %684 = vmatpush1.bf16.msra.mxu0 %v521
  %685 = vmatprep.subr.bf16.mxu0 0
  %686 = vmatpush1.bf16.msra.mxu0 %v522
  %687 = vmatprep.subr.bf16.mxu0 0
  %688 = vmatpush1.bf16.msra.mxu0 %v523
  %689 = vmatprep.subr.bf16.mxu0 0
  %690 = vmatpush1.bf16.msra.mxu0 %v524
  %691 = vmatprep.subr.bf16.mxu0 0
  %692 = vmatpush1.bf16.msra.mxu0 %v525
  %693 = vmatprep.subr.bf16.mxu0 0
  %694 = vmatpush1.bf16.msra.mxu0 %v526
  %695 = vmatprep.subr.bf16.mxu0 0
  %696 = vmatpush1.bf16.msra.mxu0 %v527
  %697 = vmatprep.subr.bf16.mxu0 0
  %698 = vmatpush1.bf16.msra.mxu0 %v528
  %699 = vmatprep.subr.bf16.mxu0 0
  %700 = vmatpush1.bf16.msra.mxu0 %v529
  %701 = vmatprep.subr.bf16.mxu0 0
  %702 = vmatpush1.bf16.msra.mxu0 %v530
  %703 = vmatprep.subr.bf16.mxu0 0
  %704 = vmatpush1.bf16.msra.mxu0 %v531
  %705 = vmatprep.subr.bf16.mxu0 0
  %706 = vmatpush1.bf16.msra.mxu0 %v532
  %707 = vmatprep.subr.bf16.mxu0 0
  %708 = vmatpush1.bf16.msra.mxu0 %v533
  %709 = vmatprep.subr.bf16.mxu0 0
  %710 = vmatpush1.bf16.msra.mxu0 %v534
  %711 = vmatprep.subr.bf16.mxu0 0
  %712 = vmatpush1.bf16.msra.mxu0 %v535
  %713 = vmatprep.mubr.bf16.mxu0 %v219
  %714 = vmatmul.mubr.bf16.gmra.mrb[0].mxu0 %v218
  %v715 = vpop.f32.mrb[0].mxu0
  %v716 = vadd.f32 %v667, %v715
  %v717 = vpop.f32.mrb[0].mxu0
  %v718 = vpop.f32.mrb[0].mxu0
  %v719 = vadd.f32 %v670, %v718
  %v720 = vpop.f32.mrb[0].mxu0
  %721 = vmatprep.mubr.bf16.mxu0 %v227
  %722 = vmatmul.mubr.bf16.gmra.mrb[0].mxu0 %v226
  %v723 = vpop.f32.mrb[0].mxu0
  %v724 = vadd.f32 %v675, %v723
  %v725 = vpop.f32.mrb[0].mxu0
  %v726 = vpop.f32.mrb[0].mxu0
  %v727 = vadd.f32 %v678, %v726
  %v728 = vpop.f32.mrb[0].mxu0
  %729 = vdwg.mxu0
  %730 = vmatprep.subr.bf16.mxu0 0
  %731 = vmatpush1.bf16.msra.mxu0 %v536
  %732 = vmatprep.subr.bf16.mxu0 0
  %733 = vmatpush1.bf16.msra.mxu0 %v537
  %734 = vmatprep.subr.bf16.mxu0 0
  %735 = vmatpush1.bf16.msra.mxu0 %v538
  %736 = vmatprep.subr.bf16.mxu0 0
  %737 = vmatpush1.bf16.msra.mxu0 %v539
  %738 = vmatprep.subr.bf16.mxu0 0
  %739 = vmatpush1.bf16.msra.mxu0 %v540
  %740 = vmatprep.subr.bf16.mxu0 0
  %741 = vmatpush1.bf16.msra.mxu0 %v541
  %742 = vmatprep.subr.bf16.mxu0 0
  %743 = vmatpush1.bf16.msra.mxu0 %v542
  %744 = vmatprep.subr.bf16.mxu0 0
  %745 = vmatpush1.bf16.msra.mxu0 %v543
  %746 = vmatprep.subr.bf16.mxu0 0
  %747 = vmatpush1.bf16.msra.mxu0 %v544
  %748 = vmatprep.subr.bf16.mxu0 0
  %749 = vmatpush1.bf16.msra.mxu0 %v545
  %750 = vmatprep.subr.bf16.mxu0 0
  %751 = vmatpush1.bf16.msra.mxu0 %v546
  %752 = vmatprep.subr.bf16.mxu0 0
  %753 = vmatpush1.bf16.msra.mxu0 %v547
  %754 = vmatprep.subr.bf16.mxu0 0
  %755 = vmatpush1.bf16.msra.mxu0 %v548
  %756 = vmatprep.subr.bf16.mxu0 0
  %757 = vmatpush1.bf16.msra.mxu0 %v549
  %758 = vmatprep.subr.bf16.mxu0 0
  %759 = vmatpush1.bf16.msra.mxu0 %v550
  %760 = vmatprep.subr.bf16.mxu0 0
  %761 = vmatpush1.bf16.msra.mxu0 %v551
  %762 = vmatprep.mubr.bf16.mxu0 %v221
  %763 = vmatmul.mubr.bf16.gmra.mrb[0].mxu0 %v220
  %v764 = vpop.f32.mrb[0].mxu0
  %v765 = vadd.f32 %v716, %v764
  %v766 = vpop.f32.mrb[0].mxu0
  %v767 = vpop.f32.mrb[0].mxu0
  %v768 = vadd.f32 %v719, %v767
  %v769 = vpop.f32.mrb[0].mxu0
  %770 = vmatprep.mubr.bf16.mxu0 %v229
  %771 = vmatmul.mubr.bf16.gmra.mrb[0].mxu0 %v228
  %v772 = vpop.f32.mrb[0].mxu0
  %v773 = vadd.f32 %v724, %v772
  %v774 = vpop.f32.mrb[0].mxu0
  %v775 = vpop.f32.mrb[0].mxu0
  %v776 = vadd.f32 %v727, %v775
  %v777 = vpop.f32.mrb[0].mxu0
  %778 = vdwg.mxu0
  %779 = vmatprep.subr.bf16.mxu0 0
  %780 = vmatpush1.bf16.msra.mxu0 %v552
  %781 = vmatprep.subr.bf16.mxu0 0
  %782 = vmatpush1.bf16.msra.mxu0 %v553
  %783 = vmatprep.subr.bf16.mxu0 0
  %784 = vmatpush1.bf16.msra.mxu0 %v554
  %785 = vmatprep.subr.bf16.mxu0 0
  %786 = vmatpush1.bf16.msra.mxu0 %v555
  %787 = vmatprep.subr.bf16.mxu0 0
  %788 = vmatpush1.bf16.msra.mxu0 %v556
  %789 = vmatprep.subr.bf16.mxu0 0
  %790 = vmatpush1.bf16.msra.mxu0 %v557
  %791 = vmatprep.subr.bf16.mxu0 0
  %792 = vmatpush1.bf16.msra.mxu0 %v558
  %793 = vmatprep.subr.bf16.mxu0 0
  %794 = vmatpush1.bf16.msra.mxu0 %v559
  %795 = vmatprep.subr.bf16.mxu0 0
  %796 = vmatpush1.bf16.msra.mxu0 %v560
  %797 = vmatprep.subr.bf16.mxu0 0
  %798 = vmatpush1.bf16.msra.mxu0 %v561
  %799 = vmatprep.subr.bf16.mxu0 0
  %800 = vmatpush1.bf16.msra.mxu0 %v562
  %801 = vmatprep.subr.bf16.mxu0 0
  %802 = vmatpush1.bf16.msra.mxu0 %v563
  %803 = vmatprep.subr.bf16.mxu0 0
  %804 = vmatpush1.bf16.msra.mxu0 %v564
  %805 = vmatprep.subr.bf16.mxu0 0
  %806 = vmatpush1.bf16.msra.mxu0 %v565
  %807 = vmatprep.subr.bf16.mxu0 0
  %808 = vmatpush1.bf16.msra.mxu0 %v566
  %809 = vmatprep.subr.bf16.mxu0 0
  %810 = vmatpush1.bf16.msra.mxu0 %v567
  %811 = vmatprep.mubr.bf16.mxu0 %v223
  %812 = vmatmul.mubr.bf16.gmra.mrb[0].mxu0 %v222
  %v813 = vpop.f32.mrb[0].mxu0
  %v814 = vadd.f32 %v765, %v813
  %v815 = vpop.f32.mrb[0].mxu0
  %v816 = vpop.f32.mrb[0].mxu0
  %v817 = vadd.f32 %v768, %v816
  %v818 = vpop.f32.mrb[0].mxu0
  %819 = vmatprep.mubr.bf16.mxu0 %v231
  %820 = vmatmul.mubr.bf16.gmra.mrb[0].mxu0 %v230
  %v821 = vpop.f32.mrb[0].mxu0
  %v822 = vadd.f32 %v773, %v821
  %v823 = vpop.f32.mrb[0].mxu0
  %v824 = vpop.f32.mrb[0].mxu0
  %v825 = vadd.f32 %v776, %v824
  %v826 = vpop.f32.mrb[0].mxu0
  %827 = vdwg.mxu0
  %v828 = vadd.f32 %v814, %v817
  %v829 = vadd.f32 %v828, %v822
  %v830 = vadd.f32 %v829, %v825
  %v831 = vrot.slane %v830, 4
  %v832 = vadd.f32 %v830, %v831
  %v833 = vrot.slane %v832, 2
  %v834 = vadd.f32 %v832, %v833
  %v835 = vrot.slane %v834, 1
  %v836 = vadd.f32 %v834, %v835
  %837 = vst [vmem:[%s4] sm:$0x1] %v836
  %v838 = vmul.f32 %v814, %v814
  %v839 = vmul.f32 %v817, %v817
  %v840 = vmul.f32 %v822, %v822
  %v841 = vmul.f32 %v825, %v825
  %v842 = vadd.f32 %v838, %v839
  %v843 = vadd.f32 %v842, %v840
  %v844 = vadd.f32 %v843, %v841
  %v845 = vrot.slane %v844, 4
  %v846 = vadd.f32 %v844, %v845
  %v847 = vrot.slane %v846, 2
  %v848 = vadd.f32 %v846, %v847
  %v849 = vrot.slane %v848, 1
  %v850 = vadd.f32 %v848, %v849
  %851 = vst [vmem:[%s4 + $0x1] sm:$0x1] %v850
  %v852 = vpack.c.bf16 %v817, %v814
  %v853 = vpack.c.bf16 %v825, %v822
  %v856 = vunpack.c.l.b16 %v852
  %v857 = vunpack.c.h.b16 %v852
  %v858 = vunpack.c.l.b16 %v853
  %v859 = vunpack.c.h.b16 %v853
  %v860 = vpack.c.b16 %v856, %v856
  %v861 = vpack.c.b16 %v857, %v857
  %v862 = vpack.c.b16 %v858, %v858
  %v863 = vpack.c.b16 %v859, %v859
  %868 = vst [vmem:[%s3] sm:$0xf] %v860
  %869 = vst [vmem:[%s3 + $0x4] sm:$0xf] %v861
  %870 = vst [vmem:[%s3 + $0x8] sm:$0xf] %v862
  %871 = vst [vmem:[%s3 + $0xc] sm:$0xf] %v863
  // Predicated region
  $region14: #{discriminator_forward.7} parent=0 // pred_check
    _
  $region15: #{discriminator_forward.7} parent=0 // pred_check_branch
    %873 = sbr.rel (0) target = $region17
  $region16: #{discriminator_forward.7} parent=0 // pred_region
    _
  $region17: #{discriminator_forward.7} parent=0 // pred_fallthru
    _
  // Predicated region
  $region18: #{discriminator_forward.7} parent=0 // pred_check
    _
  $region19: #{discriminator_forward.7} parent=0 // pred_check_branch
    %875 = sbr.rel (0) target = $region21
  $region20: #{discriminator_forward.7} parent=0 // pred_region
    _
  $region21: #{discriminator_forward.7} parent=0 // pred_fallthru
    _
  // Predicated region
  $region22: #{discriminator_forward.7} parent=0 // pred_check
    _
  $region23: #{discriminator_forward.7} parent=0 // pred_check_branch
    %877 = sbr.rel (0) target = $region25
  $region24: #{discriminator_forward.7} parent=0 // pred_region
    _
  $region25: #{discriminator_forward.7} parent=0 // pred_fallthru
    _
  // Predicated region
  $region26: #{discriminator_forward.7} parent=0 // pred_check
    _
  $region27: #{discriminator_forward.7} parent=0 // pred_check_branch
    %879 = sbr.rel (0) target = $region29
  $region28: #{discriminator_forward.7} parent=0 // pred_region
    _
  $region29: #{discriminator_forward.7} parent=0 // pred_fallthru
    _

</llo_original>
